<compile_context>
chip_gen: v6e
topology: v6e:2x2x1
jax: 0.10.0
libtpu: 0.0.40
codegen_flags: <defaults>
</compile_context>

<pallas_src>
import math

import jax
import jax.numpy as jnp
from jax import lax
from jax.experimental import pallas as pl
from jax.experimental.pallas import tpu as pltpu

FORGET_GATE_BIAS = -1.0
LN_EPS = 1e-5


# ----------------------------------------------------------------------------
# LayerNorm1D (pytorch-meta-optimizer): (x - mean) / (std_unbiased + eps)*g + b
# ----------------------------------------------------------------------------
def _ln_exact(x, gamma, beta):
    n = x.shape[-1]
    mean = jnp.mean(x, axis=-1, keepdims=True)
    var = jnp.sum((x - mean) ** 2, axis=-1, keepdims=True) / (n - 1)
    std = jnp.sqrt(var)
    return (x - mean) / (std + LN_EPS) * gamma + beta


def _ln_kernel(x, gamma, beta):
    # In-kernel LayerNorm1D. sqrt + reciprocal collapsed into a single rsqrt:
    #   1/(sqrt(v)+eps) ~= rsqrt(v) * (1 - eps*rsqrt(v))   (error O(eps^2))
    n = x.shape[-1]
    mean = jnp.mean(x, axis=-1, keepdims=True)
    var = jnp.sum((x - mean) ** 2, axis=-1, keepdims=True) * (1.0 / (n - 1))
    inv0 = lax.rsqrt(var + 1e-30)          # tiny guard against var == 0
    inv = inv0 * (1.0 - LN_EPS * inv0)
    return (x - mean) * inv * gamma + beta


# ----------------------------------------------------------------------------
# Kernel
# ----------------------------------------------------------------------------
def meta_opt_kernel(x_ref, wi2h_ref, slab4_ref, rowsh_ref, slab1_ref, out_ref):
    num_layers = wi2h_ref.shape[0]
    hidden = wi2h_ref.shape[1]

    x = x_ref[...]                                   # (TM, 3)
    rowsh = rowsh_ref[...]                           # (7, H)
    w1t0 = rowsh[0:1, :]
    w1t1 = rowsh[1:2, :]
    w1t2 = rowsh[2:3, :]
    b1 = rowsh[3:4, :]
    g1 = rowsh[4:5, :]
    be1 = rowsh[5:6, :]
    w2 = rowsh[6:7, :]                               # (1, H)

    # linear1 (K=3) as three VPU FMAs -- no MXU push for a depth-3 contraction.
    h = x[:, 0:1] * w1t0 + x[:, 1:2] * w1t1 + x[:, 2:3] * w1t2 + b1
    h = jnp.tanh(_ln_kernel(h, g1, be1))             # (TM, H)

    # stacked LayerNormLSTMCell layers (static unroll over layers)
    for l in range(num_layers):
        bi2h = slab4_ref[l, 0:1, :]                  # (1, 4H)
        gi2h_s = slab4_ref[l, 1:2, :]                # gamma * quarter-scale
        beta_c = slab4_ref[l, 2:3, :]                # (beta + h2h_const) * scale

        gh2o = slab1_ref[l, 0:1, :]                  # (1, H)
        beh2o = slab1_ref[l, 1:2, :]
        cx0 = slab1_ref[l, 2:3, :]

        i2h = jnp.dot(h, wi2h_ref[l],
                      preferred_element_type=jnp.float32) + bi2h   # (TM, 4H)
        # One LN affine pass produces the (pre-scaled) gate pre-activations:
        # quarters [0:3H] carry z/2 (for the sigmoid identity), [3H:4H] carry z.
        g = _ln_kernel(i2h, gi2h_s, beta_c)                        # (TM, 4H)

        t = jnp.tanh(g)                              # ONE full-width EUP pass
        in_gate = 0.5 * t[:, 0 * hidden:1 * hidden] + 0.5
        forget_gate = 0.5 * t[:, 1 * hidden:2 * hidden] + 0.5
        out_gate = 0.5 * t[:, 2 * hidden:3 * hidden] + 0.5
        in_transform = t[:, 3 * hidden:4 * hidden]

        cx = forget_gate * cx0 + in_gate * in_transform
        h = out_gate * jnp.tanh(_ln_kernel(cx, gh2o, beh2o))

    # linear2 on the otherwise-idle MXU, producing a lane-dense (1, TM) row
    # directly (unmasked stores, no cross-lane reduce / relayout).
    out_ref[...] = lax.dot_general(
        w2, h, dimension_numbers=(((1,), (1,)), ((), ())),
        preferred_element_type=jnp.float32)


# ----------------------------------------------------------------------------
# Wrapper: parameter packing (layout plumbing) + pallas_call
# ----------------------------------------------------------------------------
def _prep_inputs(p):
    hidden = p["W1"].shape[0]
    f32 = jnp.float32

    # (7, H): [W1^T rows (3), b1, g1, be1, W2 row]
    rowsh = jnp.concatenate(
        [p["W1"].T.astype(f32), p["b1"], p["g1"], p["be1"],
         p["W2"].reshape(1, hidden)], axis=0)

    # pre-transposed i2h weights: (L, H, 4H)
    wi2h_t = jnp.swapaxes(p["Wi2h"], 1, 2)

    # Hoisted h2h branch: hx is a (1,H) row broadcast over all rows, so the
    # matmul + LayerNorm are identical per row -> compute once per layer here.
    hx0 = p["hx0"][:, 0, :]                                          # (L, H)
    h2h_row = (jnp.einsum("lh,lgh->lg", hx0, p["Wh2h"])
               + p["bh2h"][:, 0, :])                                 # (L, 4H)
    h2h_ln = _ln_exact(h2h_row, p["gh2h"][:, 0, :], p["beh2h"][:, 0, :])
    gate_bias = jnp.zeros((1, 4 * hidden), f32).at[:, hidden:2 * hidden].set(
        FORGET_GATE_BIAS)
    h2h_const = h2h_ln + gate_bias                                   # (L, 4H)

    # Fold h2h_const into the i2h LN beta, and pre-scale quarters [0:3H] by 0.5
    # so a single in-kernel tanh yields all gates: sigmoid(z) = 0.5*tanh(z/2)+0.5.
    # The scale is applied consistently to gamma AND (beta + h2h_const).
    scale = jnp.concatenate([jnp.full((1, 3 * hidden), 0.5, f32),
                             jnp.ones((1, hidden), f32)], axis=1)    # (1, 4H)
    gi2h_s = p["gi2h"][:, 0, :] * scale
    beta_c = (p["bei2h"][:, 0, :] + h2h_const) * scale

    slab4 = jnp.stack([p["bi2h"][:, 0, :], gi2h_s, beta_c], axis=1)  # (L,3,4H)
    slab1 = jnp.stack([p["gh2o"][:, 0, :], p["beh2o"][:, 0, :],
                       p["cx0"][:, 0, :]], axis=1)                   # (L,3,H)
    return rowsh, wi2h_t, slab4, slab1


def meta_optimizer_forward(x, p, tm=None):
    n = x.shape[0]
    num_layers = p["Wi2h"].shape[0]

    if tm is None:
        # >= 2 balanced tiles (keeps both v7x TensorCores busy); cap at 2048 to
        # amortize per-step overhead while staying tiny vs. every VMEM budget.
        tm = min(2048, max(128, 128 * pl.cdiv(pl.cdiv(n, 2), 128)))
    assert tm % 128 == 0, "tm must be a multiple of 128 (lane-dense output)"

    rowsh, wi2h_t, slab4, slab1 = _prep_inputs(p)
    num_tiles = pl.cdiv(n, tm)

    def full(shape):
        nd = len(shape)
        return pl.BlockSpec(shape, lambda i, _nd=nd: (0,) * _nd)

    in_specs = [
        pl.BlockSpec((tm, 3), lambda i: (i, 0)),          # x rows
        full(wi2h_t.shape),                               # Wi2h^T (L, H, 4H)
        full(slab4.shape),                                # bi2h / gamma / beta+const
        full(rowsh.shape),                                # W1^T/b1/g1/be1/W2
        full(slab1.shape),                                # gh2o / beh2o / cx0
    ]
    # lane-dense output: (1, num_tiles*tm) written in (1, tm) blocks
    out_spec = pl.BlockSpec((1, tm), lambda i: (0, i))

    out = pl.pallas_call(
        meta_opt_kernel,
        out_shape=jax.ShapeDtypeStruct((1, num_tiles * tm), jnp.float32),
        grid_spec=pltpu.PrefetchScalarGridSpec(
            num_scalar_prefetch=0,
            grid=(num_tiles,),
            in_specs=in_specs,
            out_specs=out_spec,
        ),
        compiler_params=pltpu.CompilerParams(
            dimension_semantics=("parallel",)),
    )(x, wi2h_t, slab4, rowsh, slab1)
    # bias of linear2 added here (kept out of the kernel); x.squeeze()
    return out[0, :n] + p["b2"][0, 0]


# ----------------------------------------------------------------------------
# Pure-JAX reference (exact arithmetic, mirrors the PyTorch module)
# ----------------------------------------------------------------------------
def reference_forward(x, p):
    h = jnp.tanh(_ln_exact(x @ p["W1"].T + p["b1"], p["g1"], p["be1"]))
    num_layers = p["Wi2h"].shape[0]
    hidden = h.shape[-1]
    for l in range(num_layers):
        hx = jnp.broadcast_to(p["hx0"][l], (h.shape[0], hidden))
        cx = jnp.broadcast_to(p["cx0"][l], (h.shape[0], hidden))
        i2h = h @ p["Wi2h"][l].T + p["bi2h"][l]
        h2h = hx @ p["Wh2h"][l].T + p["bh2h"][l]
        g = (_ln_exact(i2h, p["gi2h"][l], p["bei2h"][l]) +
             _ln_exact(h2h, p["gh2h"][l], p["beh2h"][l]))
        in_gate = jax.nn.sigmoid(g[:, 0 * hidden:1 * hidden])
        forget_gate = jax.nn.sigmoid(g[:, 1 * hidden:2 * hidden] + FORGET_GATE_BIAS)
        out_gate = jax.nn.sigmoid(g[:, 2 * hidden:3 * hidden])
        in_transform = jnp.tanh(g[:, 3 * hidden:4 * hidden])
        cx = forget_gate * cx + in_gate * in_transform
        hx = out_gate * jnp.tanh(_ln_exact(cx, p["gh2o"][l], p["beh2o"][l]))
        h = hx
    return (h @ p["W2"].T + p["b2"])[:, 0]


def init_params(key, hidden, num_layers):
    """Deterministic init mirroring nn.Linear defaults + the module's tweaks."""
    def linear(k, fan_out, fan_in):
        bound = 1.0 / math.sqrt(fan_in)
        kw, kb = jax.random.split(k)
        w = jax.random.uniform(kw, (fan_out, fan_in), jnp.float32, -bound, bound)
        b = jax.random.uniform(kb, (1, fan_out), jnp.float32, -bound, bound)
        return w, b

    keys = jax.random.split(key, 2 + 2 * num_layers)
    w1, b1 = linear(keys[0], hidden, 3)
    w2, b2 = linear(keys[1], 1, hidden)
    w2 = w2 * 0.1                       # linear2.weight.data.mul_(0.1)
    b2 = jnp.zeros_like(b2)             # linear2.bias.data.fill_(0.0)

    wi2h, bi2h, wh2h, bh2h = [], [], [], []
    for l in range(num_layers):
        wa, ba = linear(keys[2 + 2 * l], 4 * hidden, hidden)
        wb, bb = linear(keys[3 + 2 * l], 4 * hidden, hidden)
        wi2h.append(wa); bi2h.append(ba); wh2h.append(wb); bh2h.append(bb)

    ones4 = jnp.ones((num_layers, 1, 4 * hidden), jnp.float32)
    zeros4 = jnp.zeros((num_layers, 1, 4 * hidden), jnp.float32)
    ones1 = jnp.ones((num_layers, 1, hidden), jnp.float32)
    zeros1 = jnp.zeros((num_layers, 1, hidden), jnp.float32)

    return {
        "W1": w1, "b1": b1,
        "g1": jnp.ones((1, hidden), jnp.float32),
        "be1": jnp.zeros((1, hidden), jnp.float32),
        "Wi2h": jnp.stack(wi2h), "bi2h": jnp.stack(bi2h),
        "Wh2h": jnp.stack(wh2h), "bh2h": jnp.stack(bh2h),
        "gi2h": ones4, "bei2h": zeros4,
        "gh2h": ones4, "beh2h": zeros4,
        "gh2o": ones1, "beh2o": zeros1,
        # reset_lstm(keep_states=False): zero hx / cx, broadcast over rows
        "hx0": zeros1, "cx0": zeros1,
        "W2": w2, "b2": b2,
    }


# TODO(synk): meta_update / meta_model parameter plumbing (gradient flattening,
# copy_params_to/from) is host-side bookkeeping, not part of forward().

if __name__ == "__main__":
    HIDDEN = 32
    NUM_LAYERS = 2
    N = 256           # number of flat parameters being meta-updated (rows)

    key = jax.random.PRNGKey(0)
    kx, kp = jax.random.split(key)
    x = jax.random.normal(kx, (N, 3), jnp.float32)
    params = init_params(kp, HIDDEN, NUM_LAYERS)

    out = jax.block_until_ready(meta_optimizer_forward(x, params))  # tm auto -> 2 tiles
    ref = jax.block_until_ready(reference_forward(x, params))

    assert out.shape == (N,)
    # atol covers the rsqrt-based LayerNorm approximation.
    assert jnp.allclose(out, ref, rtol=1e-3, atol=2e-3), (
        float(jnp.max(jnp.abs(out - ref))))

    print("KERNEL_OK")
</pallas_src>

<mosaic_0001>
module attributes {stable_mosaic.version = 11 : i64} {
  func.func @meta_opt_kernel(%arg0: i32, %arg1: memref<128x3xf32, #tpu.memory_space<vmem>>, %arg2: memref<2x32x128xf32, #tpu.memory_space<vmem>>, %arg3: memref<2x3x128xf32, #tpu.memory_space<vmem>>, %arg4: memref<7x32xf32, #tpu.memory_space<vmem>>, %arg5: memref<2x3x32xf32, #tpu.memory_space<vmem>>, %arg6: memref<1x128xf32, #tpu.memory_space<vmem>>) attributes {dimension_semantics = [#tpu.dimension_semantics<parallel>], iteration_bounds = array<i64: 2>, scalar_prefetch = 0 : i64, scratch_operands = 0 : i64, tpu.core_type = #tpu.core_type<tc>, window_params = [{transform_indices = @transform_0, window_bounds = array<i64: 128, 3>}, {pipeline_mode = #tpu.pipeline_mode<synchronous>, transform_indices = @transform_1, window_bounds = array<i64: 2, 32, 128>}, {pipeline_mode = #tpu.pipeline_mode<synchronous>, transform_indices = @transform_2, window_bounds = array<i64: 2, 3, 128>}, {pipeline_mode = #tpu.pipeline_mode<synchronous>, transform_indices = @transform_3, window_bounds = array<i64: 7, 32>}, {pipeline_mode = #tpu.pipeline_mode<synchronous>, transform_indices = @transform_4, window_bounds = array<i64: 2, 3, 32>}, {transform_indices = @transform_5, window_bounds = array<i64: 1, 128>}]} {
    %c0 = arith.constant 0 : index
    %c0_0 = arith.constant 0 : index
    %0 = vector.load %arg1[%c0, %c0_0] : memref<128x3xf32, #tpu.memory_space<vmem>>, vector<128x3xf32>
    %c0_1 = arith.constant 0 : index
    %c0_2 = arith.constant 0 : index
    %1 = vector.load %arg4[%c0_1, %c0_2] : memref<7x32xf32, #tpu.memory_space<vmem>>, vector<7x32xf32>
    %2 = vector.extract_strided_slice %1 {offsets = [0, 0], sizes = [1, 32], strides = [1, 1]} : vector<7x32xf32> to vector<1x32xf32>
    %3 = vector.extract_strided_slice %1 {offsets = [1, 0], sizes = [1, 32], strides = [1, 1]} : vector<7x32xf32> to vector<1x32xf32>
    %4 = vector.extract_strided_slice %1 {offsets = [2, 0], sizes = [1, 32], strides = [1, 1]} : vector<7x32xf32> to vector<1x32xf32>
    %5 = vector.extract_strided_slice %1 {offsets = [3, 0], sizes = [1, 32], strides = [1, 1]} : vector<7x32xf32> to vector<1x32xf32>
    %6 = vector.extract_strided_slice %1 {offsets = [4, 0], sizes = [1, 32], strides = [1, 1]} : vector<7x32xf32> to vector<1x32xf32>
    %7 = vector.extract_strided_slice %1 {offsets = [5, 0], sizes = [1, 32], strides = [1, 1]} : vector<7x32xf32> to vector<1x32xf32>
    %8 = vector.extract_strided_slice %1 {offsets = [6, 0], sizes = [1, 32], strides = [1, 1]} : vector<7x32xf32> to vector<1x32xf32>
    %9 = vector.extract_strided_slice %0 {offsets = [0, 0], sizes = [128, 1], strides = [1, 1]} : vector<128x3xf32> to vector<128x1xf32>
    %10 = vector.broadcast %9 : vector<128x1xf32> to vector<128x32xf32>
    %11 = vector.broadcast %2 : vector<1x32xf32> to vector<128x32xf32>
    %12 = arith.mulf %10, %11 : vector<128x32xf32>
    %13 = vector.extract_strided_slice %0 {offsets = [0, 1], sizes = [128, 1], strides = [1, 1]} : vector<128x3xf32> to vector<128x1xf32>
    %14 = vector.broadcast %13 : vector<128x1xf32> to vector<128x32xf32>
    %15 = vector.broadcast %3 : vector<1x32xf32> to vector<128x32xf32>
    %16 = arith.mulf %14, %15 : vector<128x32xf32>
    %17 = arith.addf %12, %16 : vector<128x32xf32>
    %18 = vector.extract_strided_slice %0 {offsets = [0, 2], sizes = [128, 1], strides = [1, 1]} : vector<128x3xf32> to vector<128x1xf32>
    %19 = vector.broadcast %18 : vector<128x1xf32> to vector<128x32xf32>
    %20 = vector.broadcast %4 : vector<1x32xf32> to vector<128x32xf32>
    %21 = arith.mulf %19, %20 : vector<128x32xf32>
    %22 = arith.addf %17, %21 : vector<128x32xf32>
    %23 = vector.broadcast %5 : vector<1x32xf32> to vector<128x32xf32>
    %24 = arith.addf %22, %23 : vector<128x32xf32>
    %cst = arith.constant dense<0.000000e+00> : vector<128xf32>
    %25 = vector.multi_reduction <add>, %24, %cst [1] : vector<128x32xf32> to vector<128xf32>
    %26 = vector.shape_cast %25 : vector<128xf32> to vector<128x1xf32>
    %cst_3 = arith.constant 3.200000e+01 : f32
    %27 = vector.broadcast %cst_3 : f32 to vector<128x1xf32>
    %28 = arith.divf %26, %27 : vector<128x1xf32>
    %29 = vector.broadcast %28 : vector<128x1xf32> to vector<128x32xf32>
    %30 = arith.subf %24, %29 : vector<128x32xf32>
    %31 = arith.mulf %30, %30 : vector<128x32xf32>
    %cst_4 = arith.constant dense<0.000000e+00> : vector<128xf32>
    %32 = vector.multi_reduction <add>, %31, %cst_4 [1] : vector<128x32xf32> to vector<128xf32>
    %33 = vector.shape_cast %32 : vector<128xf32> to vector<128x1xf32>
    %cst_5 = arith.constant 0.0322580636 : f32
    %34 = vector.broadcast %cst_5 : f32 to vector<128x1xf32>
    %35 = arith.mulf %33, %34 : vector<128x1xf32>
    %cst_6 = arith.constant 1.000000e-30 : f32
    %36 = vector.broadcast %cst_6 : f32 to vector<128x1xf32>
    %37 = arith.addf %35, %36 : vector<128x1xf32>
    %38 = math.rsqrt %37 : vector<128x1xf32>
    %cst_7 = arith.constant 9.99999974E-6 : f32
    %39 = vector.broadcast %cst_7 : f32 to vector<128x1xf32>
    %40 = arith.mulf %39, %38 : vector<128x1xf32>
    %cst_8 = arith.constant 1.000000e+00 : f32
    %41 = vector.broadcast %cst_8 : f32 to vector<128x1xf32>
    %42 = arith.subf %41, %40 : vector<128x1xf32>
    %43 = arith.mulf %38, %42 : vector<128x1xf32>
    %44 = vector.broadcast %28 : vector<128x1xf32> to vector<128x32xf32>
    %45 = arith.subf %24, %44 : vector<128x32xf32>
    %46 = vector.broadcast %43 : vector<128x1xf32> to vector<128x32xf32>
    %47 = arith.mulf %45, %46 : vector<128x32xf32>
    %48 = vector.broadcast %6 : vector<1x32xf32> to vector<128x32xf32>
    %49 = arith.mulf %47, %48 : vector<128x32xf32>
    %50 = vector.broadcast %7 : vector<1x32xf32> to vector<128x32xf32>
    %51 = arith.addf %49, %50 : vector<128x32xf32>
    %52 = math.tanh %51 : vector<128x32xf32>
    %c0_9 = arith.constant 0 : index
    %c0_10 = arith.constant 0 : index
    %c0_11 = arith.constant 0 : index
    %53 = vector.load %arg3[%c0_9, %c0_10, %c0_11] : memref<2x3x128xf32, #tpu.memory_space<vmem>>, vector<1x1x128xf32>
    %54 = vector.shape_cast %53 : vector<1x1x128xf32> to vector<1x128xf32>
    %c0_12 = arith.constant 0 : index
    %c1 = arith.constant 1 : index
    %c0_13 = arith.constant 0 : index
    %55 = vector.load %arg3[%c0_12, %c1, %c0_13] : memref<2x3x128xf32, #tpu.memory_space<vmem>>, vector<1x1x128xf32>
    %56 = vector.shape_cast %55 : vector<1x1x128xf32> to vector<1x128xf32>
    %c0_14 = arith.constant 0 : index
    %c2 = arith.constant 2 : index
    %c0_15 = arith.constant 0 : index
    %57 = vector.load %arg3[%c0_14, %c2, %c0_15] : memref<2x3x128xf32, #tpu.memory_space<vmem>>, vector<1x1x128xf32>
    %58 = vector.shape_cast %57 : vector<1x1x128xf32> to vector<1x128xf32>
    %c0_16 = arith.constant 0 : index
    %c0_17 = arith.constant 0 : index
    %c0_18 = arith.constant 0 : index
    %59 = vector.load %arg5[%c0_16, %c0_17, %c0_18] : memref<2x3x32xf32, #tpu.memory_space<vmem>>, vector<1x1x32xf32>
    %60 = vector.shape_cast %59 : vector<1x1x32xf32> to vector<1x32xf32>
    %c0_19 = arith.constant 0 : index
    %c1_20 = arith.constant 1 : index
    %c0_21 = arith.constant 0 : index
    %61 = vector.load %arg5[%c0_19, %c1_20, %c0_21] : memref<2x3x32xf32, #tpu.memory_space<vmem>>, vector<1x1x32xf32>
    %62 = vector.shape_cast %61 : vector<1x1x32xf32> to vector<1x32xf32>
    %c0_22 = arith.constant 0 : index
    %c2_23 = arith.constant 2 : index
    %c0_24 = arith.constant 0 : index
    %63 = vector.load %arg5[%c0_22, %c2_23, %c0_24] : memref<2x3x32xf32, #tpu.memory_space<vmem>>, vector<1x1x32xf32>
    %64 = vector.shape_cast %63 : vector<1x1x32xf32> to vector<1x32xf32>
    %c0_25 = arith.constant 0 : index
    %c0_26 = arith.constant 0 : index
    %c0_27 = arith.constant 0 : index
    %65 = vector.load %arg2[%c0_25, %c0_26, %c0_27] : memref<2x32x128xf32, #tpu.memory_space<vmem>>, vector<1x32x128xf32>
    %66 = vector.shape_cast %65 : vector<1x32x128xf32> to vector<32x128xf32>
    %cst_28 = arith.constant dense<0.000000e+00> : vector<128x128xf32>
    %67 = tpu.matmul %52, %66, %cst_28 {dimension_numbers = #tpu.dot_dimension_numbers<[1], [0], [0], [1], [0, 0, 1, 1], [], []>} : vector<128x32xf32>, vector<32x128xf32>, vector<128x128xf32> -> vector<128x128xf32>
    %68 = vector.broadcast %54 : vector<1x128xf32> to vector<128x128xf32>
    %69 = arith.addf %67, %68 : vector<128x128xf32>
    %cst_29 = arith.constant dense<0.000000e+00> : vector<128xf32>
    %70 = vector.multi_reduction <add>, %69, %cst_29 [1] : vector<128x128xf32> to vector<128xf32>
    %71 = vector.shape_cast %70 : vector<128xf32> to vector<128x1xf32>
    %cst_30 = arith.constant 1.280000e+02 : f32
    %72 = vector.broadcast %cst_30 : f32 to vector<128x1xf32>
    %73 = arith.divf %71, %72 : vector<128x1xf32>
    %74 = vector.broadcast %73 : vector<128x1xf32> to vector<128x128xf32>
    %75 = arith.subf %69, %74 : vector<128x128xf32>
    %76 = arith.mulf %75, %75 : vector<128x128xf32>
    %cst_31 = arith.constant dense<0.000000e+00> : vector<128xf32>
    %77 = vector.multi_reduction <add>, %76, %cst_31 [1] : vector<128x128xf32> to vector<128xf32>
    %78 = vector.shape_cast %77 : vector<128xf32> to vector<128x1xf32>
    %cst_32 = arith.constant 0.00787401571 : f32
    %79 = vector.broadcast %cst_32 : f32 to vector<128x1xf32>
    %80 = arith.mulf %78, %79 : vector<128x1xf32>
    %cst_33 = arith.constant 1.000000e-30 : f32
    %81 = vector.broadcast %cst_33 : f32 to vector<128x1xf32>
    %82 = arith.addf %80, %81 : vector<128x1xf32>
    %83 = math.rsqrt %82 : vector<128x1xf32>
    %cst_34 = arith.constant 9.99999974E-6 : f32
    %84 = vector.broadcast %cst_34 : f32 to vector<128x1xf32>
    %85 = arith.mulf %84, %83 : vector<128x1xf32>
    %cst_35 = arith.constant 1.000000e+00 : f32
    %86 = vector.broadcast %cst_35 : f32 to vector<128x1xf32>
    %87 = arith.subf %86, %85 : vector<128x1xf32>
    %88 = arith.mulf %83, %87 : vector<128x1xf32>
    %89 = vector.broadcast %73 : vector<128x1xf32> to vector<128x128xf32>
    %90 = arith.subf %69, %89 : vector<128x128xf32>
    %91 = vector.broadcast %88 : vector<128x1xf32> to vector<128x128xf32>
    %92 = arith.mulf %90, %91 : vector<128x128xf32>
    %93 = vector.broadcast %56 : vector<1x128xf32> to vector<128x128xf32>
    %94 = arith.mulf %92, %93 : vector<128x128xf32>
    %95 = vector.broadcast %58 : vector<1x128xf32> to vector<128x128xf32>
    %96 = arith.addf %94, %95 : vector<128x128xf32>
    %97 = math.tanh %96 : vector<128x128xf32>
    %98 = vector.extract_strided_slice %97 {offsets = [0, 0], sizes = [128, 32], strides = [1, 1]} : vector<128x128xf32> to vector<128x32xf32>
    %cst_36 = arith.constant 5.000000e-01 : f32
    %99 = vector.broadcast %cst_36 : f32 to vector<128x32xf32>
    %100 = arith.mulf %99, %98 : vector<128x32xf32>
    %cst_37 = arith.constant 5.000000e-01 : f32
    %101 = vector.broadcast %cst_37 : f32 to vector<128x32xf32>
    %102 = arith.addf %100, %101 : vector<128x32xf32>
    %103 = vector.extract_strided_slice %97 {offsets = [0, 32], sizes = [128, 32], strides = [1, 1]} : vector<128x128xf32> to vector<128x32xf32>
    %cst_38 = arith.constant 5.000000e-01 : f32
    %104 = vector.broadcast %cst_38 : f32 to vector<128x32xf32>
    %105 = arith.mulf %104, %103 : vector<128x32xf32>
    %cst_39 = arith.constant 5.000000e-01 : f32
    %106 = vector.broadcast %cst_39 : f32 to vector<128x32xf32>
    %107 = arith.addf %105, %106 : vector<128x32xf32>
    %108 = vector.extract_strided_slice %97 {offsets = [0, 64], sizes = [128, 32], strides = [1, 1]} : vector<128x128xf32> to vector<128x32xf32>
    %cst_40 = arith.constant 5.000000e-01 : f32
    %109 = vector.broadcast %cst_40 : f32 to vector<128x32xf32>
    %110 = arith.mulf %109, %108 : vector<128x32xf32>
    %cst_41 = arith.constant 5.000000e-01 : f32
    %111 = vector.broadcast %cst_41 : f32 to vector<128x32xf32>
    %112 = arith.addf %110, %111 : vector<128x32xf32>
    %113 = vector.extract_strided_slice %97 {offsets = [0, 96], sizes = [128, 32], strides = [1, 1]} : vector<128x128xf32> to vector<128x32xf32>
    %114 = vector.broadcast %64 : vector<1x32xf32> to vector<128x32xf32>
    %115 = arith.mulf %107, %114 : vector<128x32xf32>
    %116 = arith.mulf %102, %113 : vector<128x32xf32>
    %117 = arith.addf %115, %116 : vector<128x32xf32>
    %cst_42 = arith.constant dense<0.000000e+00> : vector<128xf32>
    %118 = vector.multi_reduction <add>, %117, %cst_42 [1] : vector<128x32xf32> to vector<128xf32>
    %119 = vector.shape_cast %118 : vector<128xf32> to vector<128x1xf32>
    %cst_43 = arith.constant 3.200000e+01 : f32
    %120 = vector.broadcast %cst_43 : f32 to vector<128x1xf32>
    %121 = arith.divf %119, %120 : vector<128x1xf32>
    %122 = vector.broadcast %121 : vector<128x1xf32> to vector<128x32xf32>
    %123 = arith.subf %117, %122 : vector<128x32xf32>
    %124 = arith.mulf %123, %123 : vector<128x32xf32>
    %cst_44 = arith.constant dense<0.000000e+00> : vector<128xf32>
    %125 = vector.multi_reduction <add>, %124, %cst_44 [1] : vector<128x32xf32> to vector<128xf32>
    %126 = vector.shape_cast %125 : vector<128xf32> to vector<128x1xf32>
    %cst_45 = arith.constant 0.0322580636 : f32
    %127 = vector.broadcast %cst_45 : f32 to vector<128x1xf32>
    %128 = arith.mulf %126, %127 : vector<128x1xf32>
    %cst_46 = arith.constant 1.000000e-30 : f32
    %129 = vector.broadcast %cst_46 : f32 to vector<128x1xf32>
    %130 = arith.addf %128, %129 : vector<128x1xf32>
    %131 = math.rsqrt %130 : vector<128x1xf32>
    %cst_47 = arith.constant 9.99999974E-6 : f32
    %132 = vector.broadcast %cst_47 : f32 to vector<128x1xf32>
    %133 = arith.mulf %132, %131 : vector<128x1xf32>
    %cst_48 = arith.constant 1.000000e+00 : f32
    %134 = vector.broadcast %cst_48 : f32 to vector<128x1xf32>
    %135 = arith.subf %134, %133 : vector<128x1xf32>
    %136 = arith.mulf %131, %135 : vector<128x1xf32>
    %137 = vector.broadcast %121 : vector<128x1xf32> to vector<128x32xf32>
    %138 = arith.subf %117, %137 : vector<128x32xf32>
    %139 = vector.broadcast %136 : vector<128x1xf32> to vector<128x32xf32>
    %140 = arith.mulf %138, %139 : vector<128x32xf32>
    %141 = vector.broadcast %60 : vector<1x32xf32> to vector<128x32xf32>
    %142 = arith.mulf %140, %141 : vector<128x32xf32>
    %143 = vector.broadcast %62 : vector<1x32xf32> to vector<128x32xf32>
    %144 = arith.addf %142, %143 : vector<128x32xf32>
    %145 = math.tanh %144 : vector<128x32xf32>
    %146 = arith.mulf %112, %145 : vector<128x32xf32>
    %c1_49 = arith.constant 1 : index
    %c0_50 = arith.constant 0 : index
    %c0_51 = arith.constant 0 : index
    %147 = vector.load %arg3[%c1_49, %c0_50, %c0_51] : memref<2x3x128xf32, #tpu.memory_space<vmem>>, vector<1x1x128xf32>
    %148 = vector.shape_cast %147 : vector<1x1x128xf32> to vector<1x128xf32>
    %c1_52 = arith.constant 1 : index
    %c1_53 = arith.constant 1 : index
    %c0_54 = arith.constant 0 : index
    %149 = vector.load %arg3[%c1_52, %c1_53, %c0_54] : memref<2x3x128xf32, #tpu.memory_space<vmem>>, vector<1x1x128xf32>
    %150 = vector.shape_cast %149 : vector<1x1x128xf32> to vector<1x128xf32>
    %c1_55 = arith.constant 1 : index
    %c2_56 = arith.constant 2 : index
    %c0_57 = arith.constant 0 : index
    %151 = vector.load %arg3[%c1_55, %c2_56, %c0_57] : memref<2x3x128xf32, #tpu.memory_space<vmem>>, vector<1x1x128xf32>
    %152 = vector.shape_cast %151 : vector<1x1x128xf32> to vector<1x128xf32>
    %c1_58 = arith.constant 1 : index
    %c0_59 = arith.constant 0 : index
    %c0_60 = arith.constant 0 : index
    %153 = vector.load %arg5[%c1_58, %c0_59, %c0_60] : memref<2x3x32xf32, #tpu.memory_space<vmem>>, vector<1x1x32xf32>
    %154 = vector.shape_cast %153 : vector<1x1x32xf32> to vector<1x32xf32>
    %c1_61 = arith.constant 1 : index
    %c1_62 = arith.constant 1 : index
    %c0_63 = arith.constant 0 : index
    %155 = vector.load %arg5[%c1_61, %c1_62, %c0_63] : memref<2x3x32xf32, #tpu.memory_space<vmem>>, vector<1x1x32xf32>
    %156 = vector.shape_cast %155 : vector<1x1x32xf32> to vector<1x32xf32>
    %c1_64 = arith.constant 1 : index
    %c2_65 = arith.constant 2 : index
    %c0_66 = arith.constant 0 : index
    %157 = vector.load %arg5[%c1_64, %c2_65, %c0_66] : memref<2x3x32xf32, #tpu.memory_space<vmem>>, vector<1x1x32xf32>
    %158 = vector.shape_cast %157 : vector<1x1x32xf32> to vector<1x32xf32>
    %c1_67 = arith.constant 1 : index
    %c0_68 = arith.constant 0 : index
    %c0_69 = arith.constant 0 : index
    %159 = vector.load %arg2[%c1_67, %c0_68, %c0_69] : memref<2x32x128xf32, #tpu.memory_space<vmem>>, vector<1x32x128xf32>
    %160 = vector.shape_cast %159 : vector<1x32x128xf32> to vector<32x128xf32>
    %cst_70 = arith.constant dense<0.000000e+00> : vector<128x128xf32>
    %161 = tpu.matmul %146, %160, %cst_70 {dimension_numbers = #tpu.dot_dimension_numbers<[1], [0], [0], [1], [0, 0, 1, 1], [], []>} : vector<128x32xf32>, vector<32x128xf32>, vector<128x128xf32> -> vector<128x128xf32>
    %162 = vector.broadcast %148 : vector<1x128xf32> to vector<128x128xf32>
    %163 = arith.addf %161, %162 : vector<128x128xf32>
    %cst_71 = arith.constant dense<0.000000e+00> : vector<128xf32>
    %164 = vector.multi_reduction <add>, %163, %cst_71 [1] : vector<128x128xf32> to vector<128xf32>
    %165 = vector.shape_cast %164 : vector<128xf32> to vector<128x1xf32>
    %cst_72 = arith.constant 1.280000e+02 : f32
    %166 = vector.broadcast %cst_72 : f32 to vector<128x1xf32>
    %167 = arith.divf %165, %166 : vector<128x1xf32>
    %168 = vector.broadcast %167 : vector<128x1xf32> to vector<128x128xf32>
    %169 = arith.subf %163, %168 : vector<128x128xf32>
    %170 = arith.mulf %169, %169 : vector<128x128xf32>
    %cst_73 = arith.constant dense<0.000000e+00> : vector<128xf32>
    %171 = vector.multi_reduction <add>, %170, %cst_73 [1] : vector<128x128xf32> to vector<128xf32>
    %172 = vector.shape_cast %171 : vector<128xf32> to vector<128x1xf32>
    %cst_74 = arith.constant 0.00787401571 : f32
    %173 = vector.broadcast %cst_74 : f32 to vector<128x1xf32>
    %174 = arith.mulf %172, %173 : vector<128x1xf32>
    %cst_75 = arith.constant 1.000000e-30 : f32
    %175 = vector.broadcast %cst_75 : f32 to vector<128x1xf32>
    %176 = arith.addf %174, %175 : vector<128x1xf32>
    %177 = math.rsqrt %176 : vector<128x1xf32>
    %cst_76 = arith.constant 9.99999974E-6 : f32
    %178 = vector.broadcast %cst_76 : f32 to vector<128x1xf32>
    %179 = arith.mulf %178, %177 : vector<128x1xf32>
    %cst_77 = arith.constant 1.000000e+00 : f32
    %180 = vector.broadcast %cst_77 : f32 to vector<128x1xf32>
    %181 = arith.subf %180, %179 : vector<128x1xf32>
    %182 = arith.mulf %177, %181 : vector<128x1xf32>
    %183 = vector.broadcast %167 : vector<128x1xf32> to vector<128x128xf32>
    %184 = arith.subf %163, %183 : vector<128x128xf32>
    %185 = vector.broadcast %182 : vector<128x1xf32> to vector<128x128xf32>
    %186 = arith.mulf %184, %185 : vector<128x128xf32>
    %187 = vector.broadcast %150 : vector<1x128xf32> to vector<128x128xf32>
    %188 = arith.mulf %186, %187 : vector<128x128xf32>
    %189 = vector.broadcast %152 : vector<1x128xf32> to vector<128x128xf32>
    %190 = arith.addf %188, %189 : vector<128x128xf32>
    %191 = math.tanh %190 : vector<128x128xf32>
    %192 = vector.extract_strided_slice %191 {offsets = [0, 0], sizes = [128, 32], strides = [1, 1]} : vector<128x128xf32> to vector<128x32xf32>
    %cst_78 = arith.constant 5.000000e-01 : f32
    %193 = vector.broadcast %cst_78 : f32 to vector<128x32xf32>
    %194 = arith.mulf %193, %192 : vector<128x32xf32>
    %cst_79 = arith.constant 5.000000e-01 : f32
    %195 = vector.broadcast %cst_79 : f32 to vector<128x32xf32>
    %196 = arith.addf %194, %195 : vector<128x32xf32>
    %197 = vector.extract_strided_slice %191 {offsets = [0, 32], sizes = [128, 32], strides = [1, 1]} : vector<128x128xf32> to vector<128x32xf32>
    %cst_80 = arith.constant 5.000000e-01 : f32
    %198 = vector.broadcast %cst_80 : f32 to vector<128x32xf32>
    %199 = arith.mulf %198, %197 : vector<128x32xf32>
    %cst_81 = arith.constant 5.000000e-01 : f32
    %200 = vector.broadcast %cst_81 : f32 to vector<128x32xf32>
    %201 = arith.addf %199, %200 : vector<128x32xf32>
    %202 = vector.extract_strided_slice %191 {offsets = [0, 64], sizes = [128, 32], strides = [1, 1]} : vector<128x128xf32> to vector<128x32xf32>
    %cst_82 = arith.constant 5.000000e-01 : f32
    %203 = vector.broadcast %cst_82 : f32 to vector<128x32xf32>
    %204 = arith.mulf %203, %202 : vector<128x32xf32>
    %cst_83 = arith.constant 5.000000e-01 : f32
    %205 = vector.broadcast %cst_83 : f32 to vector<128x32xf32>
    %206 = arith.addf %204, %205 : vector<128x32xf32>
    %207 = vector.extract_strided_slice %191 {offsets = [0, 96], sizes = [128, 32], strides = [1, 1]} : vector<128x128xf32> to vector<128x32xf32>
    %208 = vector.broadcast %158 : vector<1x32xf32> to vector<128x32xf32>
    %209 = arith.mulf %201, %208 : vector<128x32xf32>
    %210 = arith.mulf %196, %207 : vector<128x32xf32>
    %211 = arith.addf %209, %210 : vector<128x32xf32>
    %cst_84 = arith.constant dense<0.000000e+00> : vector<128xf32>
    %212 = vector.multi_reduction <add>, %211, %cst_84 [1] : vector<128x32xf32> to vector<128xf32>
    %213 = vector.shape_cast %212 : vector<128xf32> to vector<128x1xf32>
    %cst_85 = arith.constant 3.200000e+01 : f32
    %214 = vector.broadcast %cst_85 : f32 to vector<128x1xf32>
    %215 = arith.divf %213, %214 : vector<128x1xf32>
    %216 = vector.broadcast %215 : vector<128x1xf32> to vector<128x32xf32>
    %217 = arith.subf %211, %216 : vector<128x32xf32>
    %218 = arith.mulf %217, %217 : vector<128x32xf32>
    %cst_86 = arith.constant dense<0.000000e+00> : vector<128xf32>
    %219 = vector.multi_reduction <add>, %218, %cst_86 [1] : vector<128x32xf32> to vector<128xf32>
    %220 = vector.shape_cast %219 : vector<128xf32> to vector<128x1xf32>
    %cst_87 = arith.constant 0.0322580636 : f32
    %221 = vector.broadcast %cst_87 : f32 to vector<128x1xf32>
    %222 = arith.mulf %220, %221 : vector<128x1xf32>
    %cst_88 = arith.constant 1.000000e-30 : f32
    %223 = vector.broadcast %cst_88 : f32 to vector<128x1xf32>
    %224 = arith.addf %222, %223 : vector<128x1xf32>
    %225 = math.rsqrt %224 : vector<128x1xf32>
    %cst_89 = arith.constant 9.99999974E-6 : f32
    %226 = vector.broadcast %cst_89 : f32 to vector<128x1xf32>
    %227 = arith.mulf %226, %225 : vector<128x1xf32>
    %cst_90 = arith.constant 1.000000e+00 : f32
    %228 = vector.broadcast %cst_90 : f32 to vector<128x1xf32>
    %229 = arith.subf %228, %227 : vector<128x1xf32>
    %230 = arith.mulf %225, %229 : vector<128x1xf32>
    %231 = vector.broadcast %215 : vector<128x1xf32> to vector<128x32xf32>
    %232 = arith.subf %211, %231 : vector<128x32xf32>
    %233 = vector.broadcast %230 : vector<128x1xf32> to vector<128x32xf32>
    %234 = arith.mulf %232, %233 : vector<128x32xf32>
    %235 = vector.broadcast %154 : vector<1x32xf32> to vector<128x32xf32>
    %236 = arith.mulf %234, %235 : vector<128x32xf32>
    %237 = vector.broadcast %156 : vector<1x32xf32> to vector<128x32xf32>
    %238 = arith.addf %236, %237 : vector<128x32xf32>
    %239 = math.tanh %238 : vector<128x32xf32>
    %240 = arith.mulf %206, %239 : vector<128x32xf32>
    %cst_91 = arith.constant dense<0.000000e+00> : vector<1x128xf32>
    %241 = tpu.matmul %8, %240, %cst_91 {dimension_numbers = #tpu.dot_dimension_numbers<[1], [1], [0], [0], [0, 0, 1, 0], [], []>} : vector<1x32xf32>, vector<128x32xf32>, vector<1x128xf32> -> vector<1x128xf32>
    %c0_92 = arith.constant 0 : index
    %c0_93 = arith.constant 0 : index
    %242 = vector.load %arg6[%c0_92, %c0_93] : memref<1x128xf32, #tpu.memory_space<vmem>>, vector<1x128xf32>
    tpu.vector_store %arg6[%c0_92, %c0_93], %241 {strides = array<i32>} : memref<1x128xf32, #tpu.memory_space<vmem>>, vector<1x128xf32>,
    return
  }
  func.func @transform_0(%arg0: i32) -> (i32, i32) {
    %c0_i32 = arith.constant 0 : i32
    %c0_i32_0 = arith.constant 0 : i32
    return %arg0, %c0_i32 : i32, i32
  }
  func.func @transform_1(%arg0: i32) -> (i32, i32, i32) {
    %c0_i32 = arith.constant 0 : i32
    %c0_i32_0 = arith.constant 0 : i32
    %c0_i32_1 = arith.constant 0 : i32
    %c0_i32_2 = arith.constant 0 : i32
    return %c0_i32, %c0_i32_0, %c0_i32_1 : i32, i32, i32
  }
  func.func @transform_2(%arg0: i32) -> (i32, i32, i32) {
    %c0_i32 = arith.constant 0 : i32
    %c0_i32_0 = arith.constant 0 : i32
    %c0_i32_1 = arith.constant 0 : i32
    %c0_i32_2 = arith.constant 0 : i32
    return %c0_i32, %c0_i32_0, %c0_i32_1 : i32, i32, i32
  }
  func.func @transform_3(%arg0: i32) -> (i32, i32) {
    %c0_i32 = arith.constant 0 : i32
    %c0_i32_0 = arith.constant 0 : i32
    %c0_i32_1 = arith.constant 0 : i32
    return %c0_i32, %c0_i32_0 : i32, i32
  }
  func.func @transform_4(%arg0: i32) -> (i32, i32, i32) {
    %c0_i32 = arith.constant 0 : i32
    %c0_i32_0 = arith.constant 0 : i32
    %c0_i32_1 = arith.constant 0 : i32
    %c0_i32_2 = arith.constant 0 : i32
    return %c0_i32, %c0_i32_0, %c0_i32_1 : i32, i32, i32
  }
  func.func @transform_5(%arg0: i32) -> (i32, i32) {
    %c0_i32 = arith.constant 0 : i32
    %c0_i32_0 = arith.constant 0 : i32
    return %c0_i32, %arg0 : i32, i32
  }
}

</mosaic_0001>

<llo_original>
// kernel: tpu_custom_call.1
$region0: #{tpu_custom_call.1}
  #allocation0 [shape = 'u32[]', space=smem, size = 0x4, offset = 0x4, fixed_abs, tag = 'smem constant byte address 0x4 - core index']
  #allocation1 [shape = 'u32[144,128]{1,0:T(1,128)}', space=vmem, size = 0x12000, scoped, tag = 'internal scratch']
  %s0 = inlined_call_operand.vmem [shape: f32[256,3], index: 0, kind: input, shape index: {}]
  %s1 = inlined_call_operand.vmem [shape: f32[2,32,128], index: 1, kind: input, shape index: {}]
  %s2 = inlined_call_operand.vmem [shape: f32[2,3,128], index: 2, kind: input, shape index: {}]
  %s3 = inlined_call_operand.vmem [shape: f32[7,32], index: 3, kind: input, shape index: {}]
  %s4 = inlined_call_operand.vmem [shape: f32[2,3,32], index: 4, kind: input, shape index: {}]
  %s5 = inlined_call_operand.hbm [shape: f32[1,256], index: 5, kind: output, shape index: {}]
  %s6 = sld [smem:[#allocation0]]
  $region53: #{tpu_custom_call.1} parent=0
    _
  %s8 = ssub.s32 1, %s6
  %s9 = scalar_select 0, %s8, %s6
  $region1: #{tpu_custom_call.1} parent=0
    #allocation2 [shape = 'u8[1024]{0}', space=vmem, size = 0x400, scoped, tag = 'output window, operand 0']
    #allocation3 [shape = 's32[2]{0}', space=sflag, size = 0x8, scoped, tag = 'scoped memory for tpu_custom_call.1']
    %10 = vsyncpa [#allocation3], 0
    %s11 = scalar_lea.sflag [#allocation3], 1
    %12 = vsyncpa %s11, 0
    loop: start=0, step=1, limit=4
    $region2: #{tpu_custom_call.1} parent=1 // loop_pre_header
      _
    $region3: #{tpu_custom_call.1} parent=1 // loop_header
      %s14 = sphi 0, %s18
      %p15 = scmp.ge.s32.totalorder %s14, 4
      %s24 = sphi 0, %s26
      %s27 = sphi 0, %s24
      %s28 = sphi 0, %s27
      %s44 = sphi 0, %s28
      %s48 = sphi 0, %s48
      %s50 = sphi 0, %s48
      %s51 = sphi 0, %s50
      %s65 = sphi 0, %s51
      %s69 = sphi 0, %s69
      %s71 = sphi 0, %s69
      %s72 = sphi 0, %s71
      %s86 = sphi 0, %s72
      %s90 = sphi 0, %s90
      %s92 = sphi 0, %s90
      %s93 = sphi 0, %s92
      %s107 = sphi 0, %s93
      %s111 = sphi 0, %s111
      %s113 = sphi 0, %s111
      %s114 = sphi 0, %s113
      %s128 = sphi 0, %s114
      %s134 = sphi 0, %s136
      %s137 = sphi 0, %s134
      %s138 = sphi 0, %s137
      %s154 = sphi 0, %s138
    $region4: #{tpu_custom_call.1} parent=1 // loop_header_branch
      %17 = sbr.rel (%p15) target = $region8
    $region5: #{tpu_custom_call.1} parent=1 // loop_body
      %s19 = ssub.s32 %s14, 1
      %s20 = ssub.s32 %s14, 2
      %s21 = sadd.s32 %s14, 1
      %s22 = ssub.s32 %s14, %s21
      %p23 = scmp.eq.s32.totalorder %s22, 0
      %s25 = sadd.s32 %s24, 1
      %s26 = scalar_select %p23, %s24, %s25
      %p29 = pneg %p23
      %p30 = scmp.eq.s32.totalorder %s14, 1
      %p31 = por %p29, %p30
      %p32 = scmp.ne.s32.totalorder %s24, %s27
      %p33 = scmp.eq.s32.totalorder %s14, 0
      %p34 = por %p32, %p33
      %p35 = scmp.ne.s32.totalorder %s24, %s27
      %p36 = scmp.eq.s32.totalorder %s19, 1
      %p37 = por %p35, %p36
      %p38 = scmp.ne.s32.totalorder %s27, %s28
      %p39 = scmp.eq.s32.totalorder %s19, 0
      %p40 = por %p38, %p39
      %p41 = scmp.ne.s32.totalorder %s27, %s28
      %p42 = scmp.eq.s32.totalorder %s20, 1
      %p43 = por %p41, %p42
      %p45 = scmp.ne.s32.totalorder %s28, %s44
      %p46 = scmp.eq.s32.totalorder %s20, 0
      %p47 = por %p45, %p46
      %s49 = sadd.s32 %s48, 1
      %p52 = scmp.eq.s32.totalorder %s14, 1
      %p53 = scmp.ne.s32.totalorder %s48, %s50
      %p54 = scmp.eq.s32.totalorder %s14, 0
      %p55 = por %p53, %p54
      %p56 = scmp.ne.s32.totalorder %s48, %s50
      %p57 = scmp.eq.s32.totalorder %s19, 1
      %p58 = por %p56, %p57
      %p59 = scmp.ne.s32.totalorder %s50, %s51
      %p60 = scmp.eq.s32.totalorder %s19, 0
      %p61 = por %p59, %p60
      %p62 = scmp.ne.s32.totalorder %s50, %s51
      %p63 = scmp.eq.s32.totalorder %s20, 1
      %p64 = por %p62, %p63
      %p66 = scmp.ne.s32.totalorder %s51, %s65
      %p67 = scmp.eq.s32.totalorder %s20, 0
      %p68 = por %p66, %p67
      %s70 = sadd.s32 %s69, 1
      %p73 = scmp.eq.s32.totalorder %s14, 1
      %p74 = scmp.ne.s32.totalorder %s69, %s71
      %p75 = scmp.eq.s32.totalorder %s14, 0
      %p76 = por %p74, %p75
      %p77 = scmp.ne.s32.totalorder %s69, %s71
      %p78 = scmp.eq.s32.totalorder %s19, 1
      %p79 = por %p77, %p78
      %p80 = scmp.ne.s32.totalorder %s71, %s72
      %p81 = scmp.eq.s32.totalorder %s19, 0
      %p82 = por %p80, %p81
      %p83 = scmp.ne.s32.totalorder %s71, %s72
      %p84 = scmp.eq.s32.totalorder %s20, 1
      %p85 = por %p83, %p84
      %p87 = scmp.ne.s32.totalorder %s72, %s86
      %p88 = scmp.eq.s32.totalorder %s20, 0
      %p89 = por %p87, %p88
      %s91 = sadd.s32 %s90, 1
      %p94 = scmp.eq.s32.totalorder %s14, 1
      %p95 = scmp.ne.s32.totalorder %s90, %s92
      %p96 = scmp.eq.s32.totalorder %s14, 0
      %p97 = por %p95, %p96
      %p98 = scmp.ne.s32.totalorder %s90, %s92
      %p99 = scmp.eq.s32.totalorder %s19, 1
      %p100 = por %p98, %p99
      %p101 = scmp.ne.s32.totalorder %s92, %s93
      %p102 = scmp.eq.s32.totalorder %s19, 0
      %p103 = por %p101, %p102
      %p104 = scmp.ne.s32.totalorder %s92, %s93
      %p105 = scmp.eq.s32.totalorder %s20, 1
      %p106 = por %p104, %p105
      %p108 = scmp.ne.s32.totalorder %s93, %s107
      %p109 = scmp.eq.s32.totalorder %s20, 0
      %p110 = por %p108, %p109
      %s112 = sadd.s32 %s111, 1
      %p115 = scmp.eq.s32.totalorder %s14, 1
      %p116 = scmp.ne.s32.totalorder %s111, %s113
      %p117 = scmp.eq.s32.totalorder %s14, 0
      %p118 = por %p116, %p117
      %p119 = scmp.ne.s32.totalorder %s111, %s113
      %p120 = scmp.eq.s32.totalorder %s19, 1
      %p121 = por %p119, %p120
      %p122 = scmp.ne.s32.totalorder %s113, %s114
      %p123 = scmp.eq.s32.totalorder %s19, 0
      %p124 = por %p122, %p123
      %p125 = scmp.ne.s32.totalorder %s113, %s114
      %p126 = scmp.eq.s32.totalorder %s20, 1
      %p127 = por %p125, %p126
      %p129 = scmp.ne.s32.totalorder %s114, %s128
      %p130 = scmp.eq.s32.totalorder %s20, 0
      %p131 = por %p129, %p130
      %s132 = ssub.s32 %s14, %s21
      %p133 = scmp.eq.s32.totalorder %s132, 0
      %s135 = sadd.s32 %s134, 1
      %s136 = scalar_select %p133, %s134, %s135
      %p139 = pneg %p133
      %p140 = scmp.eq.s32.totalorder %s14, 1
      %p141 = por %p139, %p140
      %p142 = scmp.ne.s32.totalorder %s134, %s137
      %p143 = scmp.eq.s32.totalorder %s14, 0
      %p144 = por %p142, %p143
      %p145 = scmp.ne.s32.totalorder %s134, %s137
      %p146 = scmp.eq.s32.totalorder %s19, 1
      %p147 = por %p145, %p146
      %p148 = scmp.ne.s32.totalorder %s137, %s138
      %p149 = scmp.eq.s32.totalorder %s19, 0
      %p150 = por %p148, %p149
      %p151 = scmp.ne.s32.totalorder %s137, %s138
      %p152 = scmp.eq.s32.totalorder %s20, 1
      %p153 = por %p151, %p152
      %p155 = scmp.ne.s32.totalorder %s138, %s154
      %p156 = scmp.eq.s32.totalorder %s20, 0
      %p157 = por %p155, %p156
      %p158 = scmp.le.s32.totalorder 1, %s14
      %p159 = scmp.lt.s32.totalorder %s14, 3
      %p160 = pnand %p158, %p159
      %p161 = pneg %p160
      // Predicated region
      $region9: #{tpu_custom_call.1} parent=5 // pred_check
        _
      $region10: #{tpu_custom_call.1} parent=5 // pred_check_branch
        %163 = sbr.rel (%p160) target = $region12
      $region11: #{tpu_custom_call.1} parent=5 // pred_region
        %s164 = ssub.s32 %s14, 1
        // Predicated region
        $region13: #{tpu_custom_call.1} parent=11 // pred_check
          %p165 = pneg %p61
        $region14: #{tpu_custom_call.1} parent=11 // pred_check_branch
          %167 = sbr.rel (%p165) target = $region16
        $region15: #{tpu_custom_call.1} parent=11 // pred_region
          _
        $region16: #{tpu_custom_call.1} parent=11 // pred_fallthru
          _
        // Predicated region
        $region17: #{tpu_custom_call.1} parent=11 // pred_check
          %p168 = pneg %p82
        $region18: #{tpu_custom_call.1} parent=11 // pred_check_branch
          %170 = sbr.rel (%p168) target = $region20
        $region19: #{tpu_custom_call.1} parent=11 // pred_region
          _
        $region20: #{tpu_custom_call.1} parent=11 // pred_fallthru
          _
        // Predicated region
        $region21: #{tpu_custom_call.1} parent=11 // pred_check
          %p171 = pneg %p103
        $region22: #{tpu_custom_call.1} parent=11 // pred_check_branch
          %173 = sbr.rel (%p171) target = $region24
        $region23: #{tpu_custom_call.1} parent=11 // pred_region
          _
        $region24: #{tpu_custom_call.1} parent=11 // pred_fallthru
          _
        // Predicated region
        $region25: #{tpu_custom_call.1} parent=11 // pred_check
          %p174 = pneg %p124
        $region26: #{tpu_custom_call.1} parent=11 // pred_check_branch
          %176 = sbr.rel (%p174) target = $region28
        $region27: #{tpu_custom_call.1} parent=11 // pred_region
          _
        $region28: #{tpu_custom_call.1} parent=11 // pred_fallthru
          _
      $region12: #{tpu_custom_call.1} parent=5 // pred_fallthru
        _
      %p177 = scmp.lt.s32.totalorder %s14, 2
      // Predicated region
      $region29: #{tpu_custom_call.1} parent=5 // pred_check
        %p178 = pneg %p177
      $region30: #{tpu_custom_call.1} parent=5 // pred_check_branch
        %180 = sbr.rel (%p178) target = $region32
      $region31: #{tpu_custom_call.1} parent=5 // pred_region
        // Predicated region
        $region33: #{tpu_custom_call.1} parent=31 // pred_check
          %p181 = pneg %p34
        $region34: #{tpu_custom_call.1} parent=31 // pred_check_branch
          %183 = sbr.rel (%p181) target = $region36
        $region35: #{tpu_custom_call.1} parent=31 // pred_region
          %s184 = smul.u32 16, %s14
          %p185 = scmp.lt.s32.totalorder %s184, 31
          %s186 = scalar_select %p185, %s184, 31
          %s187 = smul.addr %s186, 8
          %s188 = scalar_lea.vmem %s0, %s187
          %s189 = smul.u32 16, %s14
        $region36: #{tpu_custom_call.1} parent=31 // pred_fallthru
          _
      $region32: #{tpu_custom_call.1} parent=5 // pred_fallthru
        _
      %p190 = scmp.le.s32.totalorder 1, %s14
      %p191 = scmp.lt.s32.totalorder %s14, 3
      %p192 = pnand %p190, %p191
      %p193 = pneg %p192
      // Predicated region
      $region37: #{tpu_custom_call.1} parent=5 // pred_check
        _
      $region38: #{tpu_custom_call.1} parent=5 // pred_check_branch
        %195 = sbr.rel (%p192) target = $region40
      $region39: #{tpu_custom_call.1} parent=5 // pred_region
        %s196 = ssub.s32 %s14, 1
        %s197 = smul.u32 16, %s19
        %p198 = scmp.lt.s32.totalorder %s197, 31
        %s199 = scalar_select %p198, %s197, 31
        %s200 = smul.addr %s199, 8
        %s201 = scalar_lea.vmem %s0, %s200
        %p202 = pneg %p40
        %p203 = pneg %p37
        %p204 = pneg %p61
        %p205 = pneg %p58
        %p206 = pneg %p82
        %p207 = pneg %p79
        %p208 = pneg %p103
        %p209 = pneg %p100
        %p210 = pneg %p124
        %p211 = pneg %p121
        %p212 = pneg %p150
        %p213 = pneg %p147
        %s214 = sand.u32 %s137, 1
        %s215 = scalar_lea.sflag [#allocation3], %s214
        %s216 = sand.u32 %s137, 1
        %s217 = scalar_lea.vmem [#allocation2], %s216
        %s218 = smul.u32 16, %s19
        %p219 = scmp.lt.s32.totalorder %s218, 31
        %s220 = scalar_select %p219, %s218, 31
        %s221 = smul.addr %s220, 8
        %s222 = scalar_lea.vmem %s0, %s221
        %s223 = smul.u32 16, %s19
        %v224 = vld [vmem:[%s222] sm:$0xff]
        %v225 = vld [vmem:[%s222 + $0x8] sm:$0xff]
        %v226 = vld [vmem:[%s222 + $0x10] sm:$0xff]
        %v227 = vld [vmem:[%s222 + $0x18] sm:$0xff]
        %v228 = vld [vmem:[%s222 + $0x20] sm:$0xff]
        %v229 = vld [vmem:[%s222 + $0x28] sm:$0xff]
        %v230 = vld [vmem:[%s222 + $0x30] sm:$0xff]
        %v231 = vld [vmem:[%s222 + $0x38] sm:$0xff]
        %v232 = vld [vmem:[%s222 + $0x40] sm:$0xff]
        %v233 = vld [vmem:[%s222 + $0x48] sm:$0xff]
        %v234 = vld [vmem:[%s222 + $0x50] sm:$0xff]
        %v235 = vld [vmem:[%s222 + $0x58] sm:$0xff]
        %v236 = vld [vmem:[%s222 + $0x60] sm:$0xff]
        %v237 = vld [vmem:[%s222 + $0x68] sm:$0xff]
        %v238 = vld [vmem:[%s222 + $0x70] sm:$0xff]
        %v239 = vld [vmem:[%s222 + $0x78] sm:$0xff]
        %v240 = vld [vmem:[%s3] sm:$0x7f]
        %242 = vset.pattern.permute.xlu0 0
        %243 = vperm.xlu0 %242, %v224
        %v244 = vpop.permute.xlu0 %243
        %247 = vset.pattern.permute.xlu0 0
        %248 = vperm.xlu0 %247, %v225
        %v249 = vpop.permute.xlu0 %248
        %252 = vset.pattern.permute.xlu0 0
        %253 = vperm.xlu0 %252, %v226
        %v254 = vpop.permute.xlu0 %253
        %257 = vset.pattern.permute.xlu0 0
        %258 = vperm.xlu0 %257, %v227
        %v259 = vpop.permute.xlu0 %258
        %262 = vset.pattern.permute.xlu0 0
        %263 = vperm.xlu0 %262, %v228
        %v264 = vpop.permute.xlu0 %263
        %267 = vset.pattern.permute.xlu0 0
        %268 = vperm.xlu0 %267, %v229
        %v269 = vpop.permute.xlu0 %268
        %272 = vset.pattern.permute.xlu0 0
        %273 = vperm.xlu0 %272, %v230
        %v274 = vpop.permute.xlu0 %273
        %277 = vset.pattern.permute.xlu0 0
        %278 = vperm.xlu0 %277, %v231
        %v279 = vpop.permute.xlu0 %278
        %282 = vset.pattern.permute.xlu0 0
        %283 = vperm.xlu0 %282, %v232
        %v284 = vpop.permute.xlu0 %283
        %287 = vset.pattern.permute.xlu0 0
        %288 = vperm.xlu0 %287, %v233
        %v289 = vpop.permute.xlu0 %288
        %292 = vset.pattern.permute.xlu0 0
        %293 = vperm.xlu0 %292, %v234
        %v294 = vpop.permute.xlu0 %293
        %297 = vset.pattern.permute.xlu0 0
        %298 = vperm.xlu0 %297, %v235
        %v299 = vpop.permute.xlu0 %298
        %302 = vset.pattern.permute.xlu0 0
        %303 = vperm.xlu0 %302, %v236
        %v304 = vpop.permute.xlu0 %303
        %307 = vset.pattern.permute.xlu0 0
        %308 = vperm.xlu0 %307, %v237
        %v309 = vpop.permute.xlu0 %308
        %312 = vset.pattern.permute.xlu0 0
        %313 = vperm.xlu0 %312, %v238
        %v314 = vpop.permute.xlu0 %313
        %317 = vset.pattern.permute.xlu0 0
        %318 = vperm.xlu0 %317, %v239
        %v319 = vpop.permute.xlu0 %318
        %v321 = vlaneseq
        %v322 = vshrl.u32 %v321, 7
        %v323 = vsub.s32 0, %v322
        %v324 = vrot.slane %v240, %v323
        %v325 = vmul.f32 %v244, %v324
        %v326 = vmul.f32 %v249, %v324
        %v327 = vmul.f32 %v254, %v324
        %v328 = vmul.f32 %v259, %v324
        %v329 = vmul.f32 %v264, %v324
        %v330 = vmul.f32 %v269, %v324
        %v331 = vmul.f32 %v274, %v324
        %v332 = vmul.f32 %v279, %v324
        %v333 = vmul.f32 %v284, %v324
        %v334 = vmul.f32 %v289, %v324
        %v335 = vmul.f32 %v294, %v324
        %v336 = vmul.f32 %v299, %v324
        %v337 = vmul.f32 %v304, %v324
        %v338 = vmul.f32 %v309, %v324
        %v339 = vmul.f32 %v314, %v324
        %v340 = vmul.f32 %v319, %v324
        %341 = vset.pattern.permute.xlu0 1
        %342 = vperm.xlu0 %341, %v224
        %v343 = vpop.permute.xlu0 %342
        %345 = vset.pattern.permute.xlu0 1
        %346 = vperm.xlu0 %345, %v225
        %v347 = vpop.permute.xlu0 %346
        %349 = vset.pattern.permute.xlu0 1
        %350 = vperm.xlu0 %349, %v226
        %v351 = vpop.permute.xlu0 %350
        %353 = vset.pattern.permute.xlu0 1
        %354 = vperm.xlu0 %353, %v227
        %v355 = vpop.permute.xlu0 %354
        %357 = vset.pattern.permute.xlu0 1
        %358 = vperm.xlu0 %357, %v228
        %v359 = vpop.permute.xlu0 %358
        %361 = vset.pattern.permute.xlu0 1
        %362 = vperm.xlu0 %361, %v229
        %v363 = vpop.permute.xlu0 %362
        %365 = vset.pattern.permute.xlu0 1
        %366 = vperm.xlu0 %365, %v230
        %v367 = vpop.permute.xlu0 %366
        %369 = vset.pattern.permute.xlu0 1
        %370 = vperm.xlu0 %369, %v231
        %v371 = vpop.permute.xlu0 %370
        %373 = vset.pattern.permute.xlu0 1
        %374 = vperm.xlu0 %373, %v232
        %v375 = vpop.permute.xlu0 %374
        %377 = vset.pattern.permute.xlu0 1
        %378 = vperm.xlu0 %377, %v233
        %v379 = vpop.permute.xlu0 %378
        %381 = vset.pattern.permute.xlu0 1
        %382 = vperm.xlu0 %381, %v234
        %v383 = vpop.permute.xlu0 %382
        %385 = vset.pattern.permute.xlu0 1
        %386 = vperm.xlu0 %385, %v235
        %v387 = vpop.permute.xlu0 %386
        %389 = vset.pattern.permute.xlu0 1
        %390 = vperm.xlu0 %389, %v236
        %v391 = vpop.permute.xlu0 %390
        %393 = vset.pattern.permute.xlu0 1
        %394 = vperm.xlu0 %393, %v237
        %v395 = vpop.permute.xlu0 %394
        %397 = vset.pattern.permute.xlu0 1
        %398 = vperm.xlu0 %397, %v238
        %v399 = vpop.permute.xlu0 %398
        %401 = vset.pattern.permute.xlu0 1
        %402 = vperm.xlu0 %401, %v239
        %v403 = vpop.permute.xlu0 %402
        %v405 = vlaneseq
        %v406 = vshrl.u32 %v405, 7
        %v407 = vsub.s32 1, %v406
        %v408 = vrot.slane %v240, %v407
        %v409 = vmul.f32 %v343, %v408
        %v410 = vmul.f32 %v347, %v408
        %v411 = vmul.f32 %v351, %v408
        %v412 = vmul.f32 %v355, %v408
        %v413 = vmul.f32 %v359, %v408
        %v414 = vmul.f32 %v363, %v408
        %v415 = vmul.f32 %v367, %v408
        %v416 = vmul.f32 %v371, %v408
        %v417 = vmul.f32 %v375, %v408
        %v418 = vmul.f32 %v379, %v408
        %v419 = vmul.f32 %v383, %v408
        %v420 = vmul.f32 %v387, %v408
        %v421 = vmul.f32 %v391, %v408
        %v422 = vmul.f32 %v395, %v408
        %v423 = vmul.f32 %v399, %v408
        %v424 = vmul.f32 %v403, %v408
        %v425 = vadd.f32 %v325, %v409
        %v426 = vadd.f32 %v326, %v410
        %v427 = vadd.f32 %v327, %v411
        %v428 = vadd.f32 %v328, %v412
        %v429 = vadd.f32 %v329, %v413
        %v430 = vadd.f32 %v330, %v414
        %v431 = vadd.f32 %v331, %v415
        %v432 = vadd.f32 %v332, %v416
        %v433 = vadd.f32 %v333, %v417
        %v434 = vadd.f32 %v334, %v418
        %v435 = vadd.f32 %v335, %v419
        %v436 = vadd.f32 %v336, %v420
        %v437 = vadd.f32 %v337, %v421
        %v438 = vadd.f32 %v338, %v422
        %v439 = vadd.f32 %v339, %v423
        %v440 = vadd.f32 %v340, %v424
        %441 = vset.pattern.permute.xlu0 2
        %442 = vperm.xlu0 %441, %v224
        %v443 = vpop.permute.xlu0 %442
        %445 = vset.pattern.permute.xlu0 2
        %446 = vperm.xlu0 %445, %v225
        %v447 = vpop.permute.xlu0 %446
        %449 = vset.pattern.permute.xlu0 2
        %450 = vperm.xlu0 %449, %v226
        %v451 = vpop.permute.xlu0 %450
        %453 = vset.pattern.permute.xlu0 2
        %454 = vperm.xlu0 %453, %v227
        %v455 = vpop.permute.xlu0 %454
        %457 = vset.pattern.permute.xlu0 2
        %458 = vperm.xlu0 %457, %v228
        %v459 = vpop.permute.xlu0 %458
        %461 = vset.pattern.permute.xlu0 2
        %462 = vperm.xlu0 %461, %v229
        %v463 = vpop.permute.xlu0 %462
        %465 = vset.pattern.permute.xlu0 2
        %466 = vperm.xlu0 %465, %v230
        %v467 = vpop.permute.xlu0 %466
        %469 = vset.pattern.permute.xlu0 2
        %470 = vperm.xlu0 %469, %v231
        %v471 = vpop.permute.xlu0 %470
        %473 = vset.pattern.permute.xlu0 2
        %474 = vperm.xlu0 %473, %v232
        %v475 = vpop.permute.xlu0 %474
        %477 = vset.pattern.permute.xlu0 2
        %478 = vperm.xlu0 %477, %v233
        %v479 = vpop.permute.xlu0 %478
        %481 = vset.pattern.permute.xlu0 2
        %482 = vperm.xlu0 %481, %v234
        %v483 = vpop.permute.xlu0 %482
        %485 = vset.pattern.permute.xlu0 2
        %486 = vperm.xlu0 %485, %v235
        %v487 = vpop.permute.xlu0 %486
        %489 = vset.pattern.permute.xlu0 2
        %490 = vperm.xlu0 %489, %v236
        %v491 = vpop.permute.xlu0 %490
        %493 = vset.pattern.permute.xlu0 2
        %494 = vperm.xlu0 %493, %v237
        %v495 = vpop.permute.xlu0 %494
        %497 = vset.pattern.permute.xlu0 2
        %498 = vperm.xlu0 %497, %v238
        %v499 = vpop.permute.xlu0 %498
        %501 = vset.pattern.permute.xlu0 2
        %502 = vperm.xlu0 %501, %v239
        %v503 = vpop.permute.xlu0 %502
        %v505 = vlaneseq
        %v506 = vshrl.u32 %v505, 7
        %v507 = vsub.s32 2, %v506
        %v508 = vrot.slane %v240, %v507
        %v509 = vmul.f32 %v443, %v508
        %v510 = vmul.f32 %v447, %v508
        %v511 = vmul.f32 %v451, %v508
        %v512 = vmul.f32 %v455, %v508
        %v513 = vmul.f32 %v459, %v508
        %v514 = vmul.f32 %v463, %v508
        %v515 = vmul.f32 %v467, %v508
        %v516 = vmul.f32 %v471, %v508
        %v517 = vmul.f32 %v475, %v508
        %v518 = vmul.f32 %v479, %v508
        %v519 = vmul.f32 %v483, %v508
        %v520 = vmul.f32 %v487, %v508
        %v521 = vmul.f32 %v491, %v508
        %v522 = vmul.f32 %v495, %v508
        %v523 = vmul.f32 %v499, %v508
        %v524 = vmul.f32 %v503, %v508
        %v525 = vadd.f32 %v425, %v509
        %v526 = vadd.f32 %v426, %v510
        %v527 = vadd.f32 %v427, %v511
        %v528 = vadd.f32 %v428, %v512
        %v529 = vadd.f32 %v429, %v513
        %v530 = vadd.f32 %v430, %v514
        %v531 = vadd.f32 %v431, %v515
        %v532 = vadd.f32 %v432, %v516
        %v533 = vadd.f32 %v433, %v517
        %v534 = vadd.f32 %v434, %v518
        %v535 = vadd.f32 %v435, %v519
        %v536 = vadd.f32 %v436, %v520
        %v537 = vadd.f32 %v437, %v521
        %v538 = vadd.f32 %v438, %v522
        %v539 = vadd.f32 %v439, %v523
        %v540 = vadd.f32 %v440, %v524
        %v541 = vlaneseq
        %v542 = vshrl.u32 %v541, 7
        %v543 = vsub.s32 3, %v542
        %v544 = vrot.slane %v240, %v543
        %v545 = vadd.f32 %v525, %v544
        %v546 = vadd.f32 %v526, %v544
        %v547 = vadd.f32 %v527, %v544
        %v548 = vadd.f32 %v528, %v544
        %v549 = vadd.f32 %v529, %v544
        %v550 = vadd.f32 %v530, %v544
        %v551 = vadd.f32 %v531, %v544
        %v552 = vadd.f32 %v532, %v544
        %v553 = vadd.f32 %v533, %v544
        %v554 = vadd.f32 %v534, %v544
        %v555 = vadd.f32 %v535, %v544
        %v556 = vadd.f32 %v536, %v544
        %v557 = vadd.f32 %v537, %v544
        %v558 = vadd.f32 %v538, %v544
        %v559 = vadd.f32 %v539, %v544
        %v560 = vadd.f32 %v540, %v544
        %vm561 = vcmask 261120
        %v562 = vsel %vm561, %v545, 0.0
        %563 = vadd.xlane.f32.xlu0 %v562
        %v564 = vpop.xlane.xlu0 %563
        %v565 = vsel %vm561, %v546, 0.0
        %566 = vadd.xlane.f32.xlu0 %v565
        %v567 = vpop.xlane.xlu0 %566
        %v568 = vsel %vm561, %v547, 0.0
        %569 = vadd.xlane.f32.xlu0 %v568
        %v570 = vpop.xlane.xlu0 %569
        %v571 = vsel %vm561, %v548, 0.0
        %572 = vadd.xlane.f32.xlu0 %v571
        %v573 = vpop.xlane.xlu0 %572
        %v574 = vsel %vm561, %v549, 0.0
        %575 = vadd.xlane.f32.xlu0 %v574
        %v576 = vpop.xlane.xlu0 %575
        %v577 = vsel %vm561, %v550, 0.0
        %578 = vadd.xlane.f32.xlu0 %v577
        %v579 = vpop.xlane.xlu0 %578
        %v580 = vsel %vm561, %v551, 0.0
        %581 = vadd.xlane.f32.xlu0 %v580
        %v582 = vpop.xlane.xlu0 %581
        %v583 = vsel %vm561, %v552, 0.0
        %584 = vadd.xlane.f32.xlu0 %v583
        %v585 = vpop.xlane.xlu0 %584
        %v586 = vsel %vm561, %v553, 0.0
        %587 = vadd.xlane.f32.xlu0 %v586
        %v588 = vpop.xlane.xlu0 %587
        %v589 = vsel %vm561, %v554, 0.0
        %590 = vadd.xlane.f32.xlu0 %v589
        %v591 = vpop.xlane.xlu0 %590
        %v592 = vsel %vm561, %v555, 0.0
        %593 = vadd.xlane.f32.xlu0 %v592
        %v594 = vpop.xlane.xlu0 %593
        %v595 = vsel %vm561, %v556, 0.0
        %596 = vadd.xlane.f32.xlu0 %v595
        %v597 = vpop.xlane.xlu0 %596
        %v598 = vsel %vm561, %v557, 0.0
        %599 = vadd.xlane.f32.xlu0 %v598
        %v600 = vpop.xlane.xlu0 %599
        %v601 = vsel %vm561, %v558, 0.0
        %602 = vadd.xlane.f32.xlu0 %v601
        %v603 = vpop.xlane.xlu0 %602
        %v604 = vsel %vm561, %v559, 0.0
        %605 = vadd.xlane.f32.xlu0 %v604
        %v606 = vpop.xlane.xlu0 %605
        %v607 = vsel %vm561, %v560, 0.0
        %608 = vadd.xlane.f32.xlu0 %v607
        %v609 = vpop.xlane.xlu0 %608
        %v610 = vrcp.pop 32.0
        %v611 = vmul.f32 %v564, %v610
        %v612 = vmul.f32 %v567, %v610
        %v613 = vmul.f32 %v570, %v610
        %v614 = vmul.f32 %v573, %v610
        %v615 = vmul.f32 %v576, %v610
        %v616 = vmul.f32 %v579, %v610
        %v617 = vmul.f32 %v582, %v610
        %v618 = vmul.f32 %v585, %v610
        %v619 = vmul.f32 %v588, %v610
        %v620 = vmul.f32 %v591, %v610
        %v621 = vmul.f32 %v594, %v610
        %v622 = vmul.f32 %v597, %v610
        %v623 = vmul.f32 %v600, %v610
        %v624 = vmul.f32 %v603, %v610
        %v625 = vmul.f32 %v606, %v610
        %v626 = vmul.f32 %v609, %v610
        %v627 = vsub.f32 %v545, %v611
        %v628 = vsub.f32 %v546, %v612
        %v629 = vsub.f32 %v547, %v613
        %v630 = vsub.f32 %v548, %v614
        %v631 = vsub.f32 %v549, %v615
        %v632 = vsub.f32 %v550, %v616
        %v633 = vsub.f32 %v551, %v617
        %v634 = vsub.f32 %v552, %v618
        %v635 = vsub.f32 %v553, %v619
        %v636 = vsub.f32 %v554, %v620
        %v637 = vsub.f32 %v555, %v621
        %v638 = vsub.f32 %v556, %v622
        %v639 = vsub.f32 %v557, %v623
        %v640 = vsub.f32 %v558, %v624
        %v641 = vsub.f32 %v559, %v625
        %v642 = vsub.f32 %v560, %v626
        %v643 = vmul.f32 %v627, %v627
        %v644 = vmul.f32 %v628, %v628
        %v645 = vmul.f32 %v629, %v629
        %v646 = vmul.f32 %v630, %v630
        %v647 = vmul.f32 %v631, %v631
        %v648 = vmul.f32 %v632, %v632
        %v649 = vmul.f32 %v633, %v633
        %v650 = vmul.f32 %v634, %v634
        %v651 = vmul.f32 %v635, %v635
        %v652 = vmul.f32 %v636, %v636
        %v653 = vmul.f32 %v637, %v637
        %v654 = vmul.f32 %v638, %v638
        %v655 = vmul.f32 %v639, %v639
        %v656 = vmul.f32 %v640, %v640
        %v657 = vmul.f32 %v641, %v641
        %v658 = vmul.f32 %v642, %v642
        %v659 = vsel %vm561, %v643, 0.0
        %660 = vadd.xlane.f32.xlu0 %v659
        %v661 = vpop.xlane.xlu0 %660
        %v662 = vsel %vm561, %v644, 0.0
        %663 = vadd.xlane.f32.xlu0 %v662
        %v664 = vpop.xlane.xlu0 %663
        %v665 = vsel %vm561, %v645, 0.0
        %666 = vadd.xlane.f32.xlu0 %v665
        %v667 = vpop.xlane.xlu0 %666
        %v668 = vsel %vm561, %v646, 0.0
        %669 = vadd.xlane.f32.xlu0 %v668
        %v670 = vpop.xlane.xlu0 %669
        %v671 = vsel %vm561, %v647, 0.0
        %672 = vadd.xlane.f32.xlu0 %v671
        %v673 = vpop.xlane.xlu0 %672
        %v674 = vsel %vm561, %v648, 0.0
        %675 = vadd.xlane.f32.xlu0 %v674
        %v676 = vpop.xlane.xlu0 %675
        %v677 = vsel %vm561, %v649, 0.0
        %678 = vadd.xlane.f32.xlu0 %v677
        %v679 = vpop.xlane.xlu0 %678
        %v680 = vsel %vm561, %v650, 0.0
        %681 = vadd.xlane.f32.xlu0 %v680
        %v682 = vpop.xlane.xlu0 %681
        %v683 = vsel %vm561, %v651, 0.0
        %684 = vadd.xlane.f32.xlu0 %v683
        %v685 = vpop.xlane.xlu0 %684
        %v686 = vsel %vm561, %v652, 0.0
        %687 = vadd.xlane.f32.xlu0 %v686
        %v688 = vpop.xlane.xlu0 %687
        %v689 = vsel %vm561, %v653, 0.0
        %690 = vadd.xlane.f32.xlu0 %v689
        %v691 = vpop.xlane.xlu0 %690
        %v692 = vsel %vm561, %v654, 0.0
        %693 = vadd.xlane.f32.xlu0 %v692
        %v694 = vpop.xlane.xlu0 %693
        %v695 = vsel %vm561, %v655, 0.0
        %696 = vadd.xlane.f32.xlu0 %v695
        %v697 = vpop.xlane.xlu0 %696
        %v698 = vsel %vm561, %v656, 0.0
        %699 = vadd.xlane.f32.xlu0 %v698
        %v700 = vpop.xlane.xlu0 %699
        %v701 = vsel %vm561, %v657, 0.0
        %702 = vadd.xlane.f32.xlu0 %v701
        %v703 = vpop.xlane.xlu0 %702
        %v704 = vsel %vm561, %v658, 0.0
        %705 = vadd.xlane.f32.xlu0 %v704
        %v706 = vpop.xlane.xlu0 %705
        %v707 = vmul.f32 %v661, 0.032258064
        %v708 = vmul.f32 %v664, 0.032258064
        %v709 = vmul.f32 %v667, 0.032258064
        %v710 = vmul.f32 %v670, 0.032258064
        %v711 = vmul.f32 %v673, 0.032258064
        %v712 = vmul.f32 %v676, 0.032258064
        %v713 = vmul.f32 %v679, 0.032258064
        %v714 = vmul.f32 %v682, 0.032258064
        %v715 = vmul.f32 %v685, 0.032258064
        %v716 = vmul.f32 %v688, 0.032258064
        %v717 = vmul.f32 %v691, 0.032258064
        %v718 = vmul.f32 %v694, 0.032258064
        %v719 = vmul.f32 %v697, 0.032258064
        %v720 = vmul.f32 %v700, 0.032258064
        %v721 = vmul.f32 %v703, 0.032258064
        %v722 = vmul.f32 %v706, 0.032258064
        %v723 = vadd.f32 %v707, 1e-30
        %v724 = vadd.f32 %v708, 1e-30
        %v725 = vadd.f32 %v709, 1e-30
        %v726 = vadd.f32 %v710, 1e-30
        %v727 = vadd.f32 %v711, 1e-30
        %v728 = vadd.f32 %v712, 1e-30
        %v729 = vadd.f32 %v713, 1e-30
        %v730 = vadd.f32 %v714, 1e-30
        %v731 = vadd.f32 %v715, 1e-30
        %v732 = vadd.f32 %v716, 1e-30
        %v733 = vadd.f32 %v717, 1e-30
        %v734 = vadd.f32 %v718, 1e-30
        %v735 = vadd.f32 %v719, 1e-30
        %v736 = vadd.f32 %v720, 1e-30
        %v737 = vadd.f32 %v721, 1e-30
        %v738 = vadd.f32 %v722, 1e-30
        %v739 = vrsqrt.pop %v723
        %v740 = vrsqrt.pop %v724
        %v741 = vrsqrt.pop %v725
        %v742 = vrsqrt.pop %v726
        %v743 = vrsqrt.pop %v727
        %v744 = vrsqrt.pop %v728
        %v745 = vrsqrt.pop %v729
        %v746 = vrsqrt.pop %v730
        %v747 = vrsqrt.pop %v731
        %v748 = vrsqrt.pop %v732
        %v749 = vrsqrt.pop %v733
        %v750 = vrsqrt.pop %v734
        %v751 = vrsqrt.pop %v735
        %v752 = vrsqrt.pop %v736
        %v753 = vrsqrt.pop %v737
        %v754 = vrsqrt.pop %v738
        %v755 = vmul.f32 %v739, 1e-05
        %v756 = vmul.f32 %v740, 1e-05
        %v757 = vmul.f32 %v741, 1e-05
        %v758 = vmul.f32 %v742, 1e-05
        %v759 = vmul.f32 %v743, 1e-05
        %v760 = vmul.f32 %v744, 1e-05
        %v761 = vmul.f32 %v745, 1e-05
        %v762 = vmul.f32 %v746, 1e-05
        %v763 = vmul.f32 %v747, 1e-05
        %v764 = vmul.f32 %v748, 1e-05
        %v765 = vmul.f32 %v749, 1e-05
        %v766 = vmul.f32 %v750, 1e-05
        %v767 = vmul.f32 %v751, 1e-05
        %v768 = vmul.f32 %v752, 1e-05
        %v769 = vmul.f32 %v753, 1e-05
        %v770 = vmul.f32 %v754, 1e-05
        %v771 = vsub.f32 1.0, %v755
        %v772 = vsub.f32 1.0, %v756
        %v773 = vsub.f32 1.0, %v757
        %v774 = vsub.f32 1.0, %v758
        %v775 = vsub.f32 1.0, %v759
        %v776 = vsub.f32 1.0, %v760
        %v777 = vsub.f32 1.0, %v761
        %v778 = vsub.f32 1.0, %v762
        %v779 = vsub.f32 1.0, %v763
        %v780 = vsub.f32 1.0, %v764
        %v781 = vsub.f32 1.0, %v765
        %v782 = vsub.f32 1.0, %v766
        %v783 = vsub.f32 1.0, %v767
        %v784 = vsub.f32 1.0, %v768
        %v785 = vsub.f32 1.0, %v769
        %v786 = vsub.f32 1.0, %v770
        %v787 = vmul.f32 %v739, %v771
        %v788 = vmul.f32 %v740, %v772
        %v789 = vmul.f32 %v741, %v773
        %v790 = vmul.f32 %v742, %v774
        %v791 = vmul.f32 %v743, %v775
        %v792 = vmul.f32 %v744, %v776
        %v793 = vmul.f32 %v745, %v777
        %v794 = vmul.f32 %v746, %v778
        %v795 = vmul.f32 %v747, %v779
        %v796 = vmul.f32 %v748, %v780
        %v797 = vmul.f32 %v749, %v781
        %v798 = vmul.f32 %v750, %v782
        %v799 = vmul.f32 %v751, %v783
        %v800 = vmul.f32 %v752, %v784
        %v801 = vmul.f32 %v753, %v785
        %v802 = vmul.f32 %v754, %v786
        %v803 = vmul.f32 %v627, %v787
        %v804 = vmul.f32 %v628, %v788
        %v805 = vmul.f32 %v629, %v789
        %v806 = vmul.f32 %v630, %v790
        %v807 = vmul.f32 %v631, %v791
        %v808 = vmul.f32 %v632, %v792
        %v809 = vmul.f32 %v633, %v793
        %v810 = vmul.f32 %v634, %v794
        %v811 = vmul.f32 %v635, %v795
        %v812 = vmul.f32 %v636, %v796
        %v813 = vmul.f32 %v637, %v797
        %v814 = vmul.f32 %v638, %v798
        %v815 = vmul.f32 %v639, %v799
        %v816 = vmul.f32 %v640, %v800
        %v817 = vmul.f32 %v641, %v801
        %v818 = vmul.f32 %v642, %v802
        %v819 = vlaneseq
        %v820 = vshrl.u32 %v819, 7
        %v821 = vsub.s32 4, %v820
        %v822 = vrot.slane %v240, %v821
        %v823 = vmul.f32 %v803, %v822
        %v824 = vmul.f32 %v804, %v822
        %v825 = vmul.f32 %v805, %v822
        %v826 = vmul.f32 %v806, %v822
        %v827 = vmul.f32 %v807, %v822
        %v828 = vmul.f32 %v808, %v822
        %v829 = vmul.f32 %v809, %v822
        %v830 = vmul.f32 %v810, %v822
        %v831 = vmul.f32 %v811, %v822
        %v832 = vmul.f32 %v812, %v822
        %v833 = vmul.f32 %v813, %v822
        %v834 = vmul.f32 %v814, %v822
        %v835 = vmul.f32 %v815, %v822
        %v836 = vmul.f32 %v816, %v822
        %v837 = vmul.f32 %v817, %v822
        %v838 = vmul.f32 %v818, %v822
        %v839 = vlaneseq
        %v840 = vshrl.u32 %v839, 7
        %v841 = vsub.s32 5, %v840
        %v842 = vrot.slane %v240, %v841
        %v843 = vadd.f32 %v823, %v842
        %v844 = vadd.f32 %v824, %v842
        %v845 = vadd.f32 %v825, %v842
        %v846 = vadd.f32 %v826, %v842
        %v847 = vadd.f32 %v827, %v842
        %v848 = vadd.f32 %v828, %v842
        %v849 = vadd.f32 %v829, %v842
        %v850 = vadd.f32 %v830, %v842
        %v851 = vadd.f32 %v831, %v842
        %v852 = vadd.f32 %v832, %v842
        %v853 = vadd.f32 %v833, %v842
        %v854 = vadd.f32 %v834, %v842
        %v855 = vadd.f32 %v835, %v842
        %v856 = vadd.f32 %v836, %v842
        %v857 = vadd.f32 %v837, %v842
        %v858 = vadd.f32 %v838, %v842
        %v859 = vtanh.pop %v843
        %v860 = vtanh.pop %v844
        %v861 = vtanh.pop %v845
        %v862 = vtanh.pop %v846
        %v863 = vtanh.pop %v847
        %v864 = vtanh.pop %v848
        %v865 = vtanh.pop %v849
        %v866 = vtanh.pop %v850
        %v867 = vtanh.pop %v851
        %v868 = vtanh.pop %v852
        %v869 = vtanh.pop %v853
        %v870 = vtanh.pop %v854
        %v871 = vtanh.pop %v855
        %v872 = vtanh.pop %v856
        %v873 = vtanh.pop %v857
        %v874 = vtanh.pop %v858
        %v875 = vld [vmem:[%s2] sm:$0x1]
        %v876 = vld [vmem:[%s2 + $0x1] sm:$0x1]
        %v877 = vld [vmem:[%s2 + $0x2] sm:$0x1]
        %v878 = vld [vmem:[%s4] sm:$0x1]
        %v879 = vld [vmem:[%s4 + $0x1] sm:$0x1]
        %v880 = vld [vmem:[%s4 + $0x2] sm:$0x1]
        %v881 = vld [vmem:[%s1] sm:$0xff]
        %v882 = vld [vmem:[%s1 + $0x8] sm:$0xff]
        %v883 = vld [vmem:[%s1 + $0x10] sm:$0xff]
        %v884 = vld [vmem:[%s1 + $0x18] sm:$0xff]
        %v885 = vlaneseq
        %v886 = vshrl.u32 %v885, 7
        %v887 = vsub.s32 0, %v886
        %v888 = vrot.slane %v875, %v887
        %v890 = vsel %vm561, %v859, 0
        %v893 = vsel %vm561, %v860, 0
        %v896 = vsel %vm561, %v861, 0
        %v899 = vsel %vm561, %v862, 0
        %v902 = vsel %vm561, %v863, 0
        %v905 = vsel %vm561, %v864, 0
        %v908 = vsel %vm561, %v865, 0
        %v911 = vsel %vm561, %v866, 0
        %v914 = vsel %vm561, %v867, 0
        %v917 = vsel %vm561, %v868, 0
        %v920 = vsel %vm561, %v869, 0
        %v923 = vsel %vm561, %v870, 0
        %v926 = vsel %vm561, %v871, 0
        %v929 = vsel %vm561, %v872, 0
        %v932 = vsel %vm561, %v873, 0
        %v935 = vsel %vm561, %v874, 0
        %937 = vmatprep.subr.mxu0 0.0
        %938 = vmatpush1.msra.mxu0 0.0
        %939 = vmatprep.subr.mxu0 0.0
        %940 = vmatpush1.msra.mxu0 0.0
        %941 = vmatprep.subr.mxu0 0.0
        %942 = vmatpush1.msra.mxu0 0.0
        %943 = vmatprep.subr.mxu0 0.0
        %944 = vmatpush1.msra.mxu0 0.0
        %945 = vmatprep.subr.mxu0 0.0
        %946 = vmatpush1.msra.mxu0 0.0
        %947 = vmatprep.subr.mxu0 0.0
        %948 = vmatpush1.msra.mxu0 0.0
        %949 = vmatprep.subr.mxu0 0.0
        %950 = vmatpush1.msra.mxu0 0.0
        %951 = vmatprep.subr.mxu0 0.0
        %952 = vmatpush1.msra.mxu0 0.0
        %953 = vmatprep.subr.mxu0 0.0
        %954 = vmatpush1.msra.mxu0 0.0
        %955 = vmatprep.subr.mxu0 0.0
        %956 = vmatpush1.msra.mxu0 0.0
        %957 = vmatprep.subr.mxu0 0.0
        %958 = vmatpush1.msra.mxu0 0.0
        %959 = vmatprep.subr.mxu0 0.0
        %960 = vmatpush1.msra.mxu0 0.0
        %961 = vmatprep.subr.mxu0 0.0
        %962 = vmatpush1.msra.mxu0 %v884
        %963 = vmatprep.subr.mxu0 0.0
        %964 = vmatpush1.msra.mxu0 %v883
        %965 = vmatprep.subr.mxu0 0.0
        %966 = vmatpush1.msra.mxu0 %v882
        %967 = vmatprep.subr.mxu0 0.0
        %968 = vmatpush1.msra.mxu0 %v881
        %969 = vmatprep.subr.mxu0 0.0
        %970 = vmatpush2.msra.mxu0 0.0
        %971 = vmatprep.subr.mxu0 0.0
        %972 = vmatpush2.msra.mxu0 0.0
        %973 = vmatprep.subr.mxu0 0.0
        %974 = vmatpush2.msra.mxu0 0.0
        %975 = vmatprep.subr.mxu0 0.0
        %976 = vmatpush2.msra.mxu0 0.0
        %977 = vmatprep.subr.mxu0 0.0
        %978 = vmatpush2.msra.mxu0 0.0
        %979 = vmatprep.subr.mxu0 0.0
        %980 = vmatpush2.msra.mxu0 0.0
        %981 = vmatprep.subr.mxu0 0.0
        %982 = vmatpush2.msra.mxu0 0.0
        %983 = vmatprep.subr.mxu0 0.0
        %984 = vmatpush2.msra.mxu0 0.0
        %985 = vmatprep.subr.mxu0 0.0
        %986 = vmatpush2.msra.mxu0 0.0
        %987 = vmatprep.subr.mxu0 0.0
        %988 = vmatpush2.msra.mxu0 0.0
        %989 = vmatprep.subr.mxu0 0.0
        %990 = vmatpush2.msra.mxu0 0.0
        %991 = vmatprep.subr.mxu0 0.0
        %992 = vmatpush2.msra.mxu0 0.0
        %993 = vmatprep.subr.mxu0 0.0
        %994 = vmatpush2.msra.mxu0 0.0
        %995 = vmatprep.subr.mxu0 0.0
        %996 = vmatpush2.msra.mxu0 0.0
        %997 = vmatprep.subr.mxu0 0.0
        %998 = vmatpush2.msra.mxu0 0.0
        %999 = vmatprep.subr.mxu0 0.0
        %1000 = vmatpush2.msra.mxu0 0.0
        %1001 = vmatprep.mubr.f32.mxu0 0.0
        %1002 = vmatmul.mubr.f32.gmra.mxu0 %v890
        %v1003 = vpop.f32.mrf.mxu0
        %v1004 = vadd.f32 %v888, %v1003
        %v1005 = vpop.f32.mrf.mxu0
        %1006 = vmatprep.mubr.f32.mxu0 0.0
        %1007 = vmatmul.mubr.f32.gmra.mxu0 %v893
        %v1008 = vpop.f32.mrf.mxu0
        %v1009 = vadd.f32 %v888, %v1008
        %v1010 = vpop.f32.mrf.mxu0
        %1011 = vmatprep.mubr.f32.mxu0 0.0
        %1012 = vmatmul.mubr.f32.gmra.mxu0 %v896
        %v1013 = vpop.f32.mrf.mxu0
        %v1014 = vadd.f32 %v888, %v1013
        %v1015 = vpop.f32.mrf.mxu0
        %1016 = vmatprep.mubr.f32.mxu0 0.0
        %1017 = vmatmul.mubr.f32.gmra.mxu0 %v899
        %v1018 = vpop.f32.mrf.mxu0
        %v1019 = vadd.f32 %v888, %v1018
        %v1020 = vpop.f32.mrf.mxu0
        %1021 = vmatprep.mubr.f32.mxu0 0.0
        %1022 = vmatmul.mubr.f32.gmra.mxu0 %v902
        %v1023 = vpop.f32.mrf.mxu0
        %v1024 = vadd.f32 %v888, %v1023
        %v1025 = vpop.f32.mrf.mxu0
        %1026 = vmatprep.mubr.f32.mxu0 0.0
        %1027 = vmatmul.mubr.f32.gmra.mxu0 %v905
        %v1028 = vpop.f32.mrf.mxu0
        %v1029 = vadd.f32 %v888, %v1028
        %v1030 = vpop.f32.mrf.mxu0
        %1031 = vmatprep.mubr.f32.mxu0 0.0
        %1032 = vmatmul.mubr.f32.gmra.mxu0 %v908
        %v1033 = vpop.f32.mrf.mxu0
        %v1034 = vadd.f32 %v888, %v1033
        %v1035 = vpop.f32.mrf.mxu0
        %1036 = vmatprep.mubr.f32.mxu0 0.0
        %1037 = vmatmul.mubr.f32.gmra.mxu0 %v911
        %v1038 = vpop.f32.mrf.mxu0
        %v1039 = vadd.f32 %v888, %v1038
        %v1040 = vpop.f32.mrf.mxu0
        %1041 = vmatprep.mubr.f32.mxu0 0.0
        %1042 = vmatmul.mubr.f32.gmra.mxu0 %v914
        %v1043 = vpop.f32.mrf.mxu0
        %v1044 = vadd.f32 %v888, %v1043
        %v1045 = vpop.f32.mrf.mxu0
        %1046 = vmatprep.mubr.f32.mxu0 0.0
        %1047 = vmatmul.mubr.f32.gmra.mxu0 %v917
        %v1048 = vpop.f32.mrf.mxu0
        %v1049 = vadd.f32 %v888, %v1048
        %v1050 = vpop.f32.mrf.mxu0
        %1051 = vmatprep.mubr.f32.mxu0 0.0
        %1052 = vmatmul.mubr.f32.gmra.mxu0 %v920
        %v1053 = vpop.f32.mrf.mxu0
        %v1054 = vadd.f32 %v888, %v1053
        %v1055 = vpop.f32.mrf.mxu0
        %1056 = vmatprep.mubr.f32.mxu0 0.0
        %1057 = vmatmul.mubr.f32.gmra.mxu0 %v923
        %v1058 = vpop.f32.mrf.mxu0
        %v1059 = vadd.f32 %v888, %v1058
        %v1060 = vpop.f32.mrf.mxu0
        %1061 = vmatprep.mubr.f32.mxu0 0.0
        %1062 = vmatmul.mubr.f32.gmra.mxu0 %v926
        %v1063 = vpop.f32.mrf.mxu0
        %v1064 = vadd.f32 %v888, %v1063
        %v1065 = vpop.f32.mrf.mxu0
        %1066 = vmatprep.mubr.f32.mxu0 0.0
        %1067 = vmatmul.mubr.f32.gmra.mxu0 %v929
        %v1068 = vpop.f32.mrf.mxu0
        %v1069 = vadd.f32 %v888, %v1068
        %v1070 = vpop.f32.mrf.mxu0
        %1071 = vmatprep.mubr.f32.mxu0 0.0
        %1072 = vmatmul.mubr.f32.gmra.mxu0 %v932
        %v1073 = vpop.f32.mrf.mxu0
        %v1074 = vadd.f32 %v888, %v1073
        %v1075 = vpop.f32.mrf.mxu0
        %1076 = vmatprep.mubr.f32.mxu0 0.0
        %1077 = vmatmul.mubr.f32.gmra.mxu0 %v935
        %v1078 = vpop.f32.mrf.mxu0
        %v1079 = vadd.f32 %v888, %v1078
        %v1080 = vpop.f32.mrf.mxu0
        %1081 = vdwg.mxu0
        %1082 = vadd.xlane.f32.xlu0 %v1004
        %v1083 = vpop.xlane.xlu0 %1082
        %1084 = vadd.xlane.f32.xlu0 %v1009
        %v1085 = vpop.xlane.xlu0 %1084
        %1086 = vadd.xlane.f32.xlu0 %v1014
        %v1087 = vpop.xlane.xlu0 %1086
        %1088 = vadd.xlane.f32.xlu0 %v1019
        %v1089 = vpop.xlane.xlu0 %1088
        %1090 = vadd.xlane.f32.xlu0 %v1024
        %v1091 = vpop.xlane.xlu0 %1090
        %1092 = vadd.xlane.f32.xlu0 %v1029
        %v1093 = vpop.xlane.xlu0 %1092
        %1094 = vadd.xlane.f32.xlu0 %v1034
        %v1095 = vpop.xlane.xlu0 %1094
        %1096 = vadd.xlane.f32.xlu0 %v1039
        %v1097 = vpop.xlane.xlu0 %1096
        %1098 = vadd.xlane.f32.xlu0 %v1044
        %v1099 = vpop.xlane.xlu0 %1098
        %1100 = vadd.xlane.f32.xlu0 %v1049
        %v1101 = vpop.xlane.xlu0 %1100
        %1102 = vadd.xlane.f32.xlu0 %v1054
        %v1103 = vpop.xlane.xlu0 %1102
        %1104 = vadd.xlane.f32.xlu0 %v1059
        %v1105 = vpop.xlane.xlu0 %1104
        %1106 = vadd.xlane.f32.xlu0 %v1064
        %v1107 = vpop.xlane.xlu0 %1106
        %1108 = vadd.xlane.f32.xlu0 %v1069
        %v1109 = vpop.xlane.xlu0 %1108
        %1110 = vadd.xlane.f32.xlu0 %v1074
        %v1111 = vpop.xlane.xlu0 %1110
        %1112 = vadd.xlane.f32.xlu0 %v1079
        %v1113 = vpop.xlane.xlu0 %1112
        %v1114 = vrcp.pop 128.0
        %v1115 = vmul.f32 %v1083, %v1114
        %v1116 = vmul.f32 %v1085, %v1114
        %v1117 = vmul.f32 %v1087, %v1114
        %v1118 = vmul.f32 %v1089, %v1114
        %v1119 = vmul.f32 %v1091, %v1114
        %v1120 = vmul.f32 %v1093, %v1114
        %v1121 = vmul.f32 %v1095, %v1114
        %v1122 = vmul.f32 %v1097, %v1114
        %v1123 = vmul.f32 %v1099, %v1114
        %v1124 = vmul.f32 %v1101, %v1114
        %v1125 = vmul.f32 %v1103, %v1114
        %v1126 = vmul.f32 %v1105, %v1114
        %v1127 = vmul.f32 %v1107, %v1114
        %v1128 = vmul.f32 %v1109, %v1114
        %v1129 = vmul.f32 %v1111, %v1114
        %v1130 = vmul.f32 %v1113, %v1114
        %v1131 = vsub.f32 %v1004, %v1115
        %v1132 = vsub.f32 %v1009, %v1116
        %v1133 = vsub.f32 %v1014, %v1117
        %v1134 = vsub.f32 %v1019, %v1118
        %v1135 = vsub.f32 %v1024, %v1119
        %v1136 = vsub.f32 %v1029, %v1120
        %v1137 = vsub.f32 %v1034, %v1121
        %v1138 = vsub.f32 %v1039, %v1122
        %v1139 = vsub.f32 %v1044, %v1123
        %v1140 = vsub.f32 %v1049, %v1124
        %v1141 = vsub.f32 %v1054, %v1125
        %v1142 = vsub.f32 %v1059, %v1126
        %v1143 = vsub.f32 %v1064, %v1127
        %v1144 = vsub.f32 %v1069, %v1128
        %v1145 = vsub.f32 %v1074, %v1129
        %v1146 = vsub.f32 %v1079, %v1130
        %v1147 = vmul.f32 %v1131, %v1131
        %v1148 = vmul.f32 %v1132, %v1132
        %v1149 = vmul.f32 %v1133, %v1133
        %v1150 = vmul.f32 %v1134, %v1134
        %v1151 = vmul.f32 %v1135, %v1135
        %v1152 = vmul.f32 %v1136, %v1136
        %v1153 = vmul.f32 %v1137, %v1137
        %v1154 = vmul.f32 %v1138, %v1138
        %v1155 = vmul.f32 %v1139, %v1139
        %v1156 = vmul.f32 %v1140, %v1140
        %v1157 = vmul.f32 %v1141, %v1141
        %v1158 = vmul.f32 %v1142, %v1142
        %v1159 = vmul.f32 %v1143, %v1143
        %v1160 = vmul.f32 %v1144, %v1144
        %v1161 = vmul.f32 %v1145, %v1145
        %v1162 = vmul.f32 %v1146, %v1146
        %1163 = vadd.xlane.f32.xlu0 %v1147
        %v1164 = vpop.xlane.xlu0 %1163
        %1165 = vadd.xlane.f32.xlu0 %v1148
        %v1166 = vpop.xlane.xlu0 %1165
        %1167 = vadd.xlane.f32.xlu0 %v1149
        %v1168 = vpop.xlane.xlu0 %1167
        %1169 = vadd.xlane.f32.xlu0 %v1150
        %v1170 = vpop.xlane.xlu0 %1169
        %1171 = vadd.xlane.f32.xlu0 %v1151
        %v1172 = vpop.xlane.xlu0 %1171
        %1173 = vadd.xlane.f32.xlu0 %v1152
        %v1174 = vpop.xlane.xlu0 %1173
        %1175 = vadd.xlane.f32.xlu0 %v1153
        %v1176 = vpop.xlane.xlu0 %1175
        %1177 = vadd.xlane.f32.xlu0 %v1154
        %v1178 = vpop.xlane.xlu0 %1177
        %1179 = vadd.xlane.f32.xlu0 %v1155
        %v1180 = vpop.xlane.xlu0 %1179
        %1181 = vadd.xlane.f32.xlu0 %v1156
        %v1182 = vpop.xlane.xlu0 %1181
        %1183 = vadd.xlane.f32.xlu0 %v1157
        %v1184 = vpop.xlane.xlu0 %1183
        %1185 = vadd.xlane.f32.xlu0 %v1158
        %v1186 = vpop.xlane.xlu0 %1185
        %1187 = vadd.xlane.f32.xlu0 %v1159
        %v1188 = vpop.xlane.xlu0 %1187
        %1189 = vadd.xlane.f32.xlu0 %v1160
        %v1190 = vpop.xlane.xlu0 %1189
        %1191 = vadd.xlane.f32.xlu0 %v1161
        %v1192 = vpop.xlane.xlu0 %1191
        %1193 = vadd.xlane.f32.xlu0 %v1162
        %v1194 = vpop.xlane.xlu0 %1193
        %v1195 = vmul.f32 %v1164, 0.007874016
        %v1196 = vmul.f32 %v1166, 0.007874016
        %v1197 = vmul.f32 %v1168, 0.007874016
        %v1198 = vmul.f32 %v1170, 0.007874016
        %v1199 = vmul.f32 %v1172, 0.007874016
        %v1200 = vmul.f32 %v1174, 0.007874016
        %v1201 = vmul.f32 %v1176, 0.007874016
        %v1202 = vmul.f32 %v1178, 0.007874016
        %v1203 = vmul.f32 %v1180, 0.007874016
        %v1204 = vmul.f32 %v1182, 0.007874016
        %v1205 = vmul.f32 %v1184, 0.007874016
        %v1206 = vmul.f32 %v1186, 0.007874016
        %v1207 = vmul.f32 %v1188, 0.007874016
        %v1208 = vmul.f32 %v1190, 0.007874016
        %v1209 = vmul.f32 %v1192, 0.007874016
        %v1210 = vmul.f32 %v1194, 0.007874016
        %v1211 = vadd.f32 %v1195, 1e-30
        %v1212 = vadd.f32 %v1196, 1e-30
        %v1213 = vadd.f32 %v1197, 1e-30
        %v1214 = vadd.f32 %v1198, 1e-30
        %v1215 = vadd.f32 %v1199, 1e-30
        %v1216 = vadd.f32 %v1200, 1e-30
        %v1217 = vadd.f32 %v1201, 1e-30
        %v1218 = vadd.f32 %v1202, 1e-30
        %v1219 = vadd.f32 %v1203, 1e-30
        %v1220 = vadd.f32 %v1204, 1e-30
        %v1221 = vadd.f32 %v1205, 1e-30
        %v1222 = vadd.f32 %v1206, 1e-30
        %v1223 = vadd.f32 %v1207, 1e-30
        %v1224 = vadd.f32 %v1208, 1e-30
        %v1225 = vadd.f32 %v1209, 1e-30
        %v1226 = vadd.f32 %v1210, 1e-30
        %v1227 = vrsqrt.pop %v1211
        %v1228 = vrsqrt.pop %v1212
        %v1229 = vrsqrt.pop %v1213
        %v1230 = vrsqrt.pop %v1214
        %v1231 = vrsqrt.pop %v1215
        %v1232 = vrsqrt.pop %v1216
        %v1233 = vrsqrt.pop %v1217
        %v1234 = vrsqrt.pop %v1218
        %v1235 = vrsqrt.pop %v1219
        %v1236 = vrsqrt.pop %v1220
        %v1237 = vrsqrt.pop %v1221
        %v1238 = vrsqrt.pop %v1222
        %v1239 = vrsqrt.pop %v1223
        %v1240 = vrsqrt.pop %v1224
        %v1241 = vrsqrt.pop %v1225
        %v1242 = vrsqrt.pop %v1226
        %v1243 = vmul.f32 %v1227, 1e-05
        %v1244 = vmul.f32 %v1228, 1e-05
        %v1245 = vmul.f32 %v1229, 1e-05
        %v1246 = vmul.f32 %v1230, 1e-05
        %v1247 = vmul.f32 %v1231, 1e-05
        %v1248 = vmul.f32 %v1232, 1e-05
        %v1249 = vmul.f32 %v1233, 1e-05
        %v1250 = vmul.f32 %v1234, 1e-05
        %v1251 = vmul.f32 %v1235, 1e-05
        %v1252 = vmul.f32 %v1236, 1e-05
        %v1253 = vmul.f32 %v1237, 1e-05
        %v1254 = vmul.f32 %v1238, 1e-05
        %v1255 = vmul.f32 %v1239, 1e-05
        %v1256 = vmul.f32 %v1240, 1e-05
        %v1257 = vmul.f32 %v1241, 1e-05
        %v1258 = vmul.f32 %v1242, 1e-05
        %v1259 = vsub.f32 1.0, %v1243
        %v1260 = vsub.f32 1.0, %v1244
        %v1261 = vsub.f32 1.0, %v1245
        %v1262 = vsub.f32 1.0, %v1246
        %v1263 = vsub.f32 1.0, %v1247
        %v1264 = vsub.f32 1.0, %v1248
        %v1265 = vsub.f32 1.0, %v1249
        %v1266 = vsub.f32 1.0, %v1250
        %v1267 = vsub.f32 1.0, %v1251
        %v1268 = vsub.f32 1.0, %v1252
        %v1269 = vsub.f32 1.0, %v1253
        %v1270 = vsub.f32 1.0, %v1254
        %v1271 = vsub.f32 1.0, %v1255
        %v1272 = vsub.f32 1.0, %v1256
        %v1273 = vsub.f32 1.0, %v1257
        %v1274 = vsub.f32 1.0, %v1258
        %v1275 = vmul.f32 %v1227, %v1259
        %v1276 = vmul.f32 %v1228, %v1260
        %v1277 = vmul.f32 %v1229, %v1261
        %v1278 = vmul.f32 %v1230, %v1262
        %v1279 = vmul.f32 %v1231, %v1263
        %v1280 = vmul.f32 %v1232, %v1264
        %v1281 = vmul.f32 %v1233, %v1265
        %v1282 = vmul.f32 %v1234, %v1266
        %v1283 = vmul.f32 %v1235, %v1267
        %v1284 = vmul.f32 %v1236, %v1268
        %v1285 = vmul.f32 %v1237, %v1269
        %v1286 = vmul.f32 %v1238, %v1270
        %v1287 = vmul.f32 %v1239, %v1271
        %v1288 = vmul.f32 %v1240, %v1272
        %v1289 = vmul.f32 %v1241, %v1273
        %v1290 = vmul.f32 %v1242, %v1274
        %v1291 = vmul.f32 %v1131, %v1275
        %v1292 = vmul.f32 %v1132, %v1276
        %v1293 = vmul.f32 %v1133, %v1277
        %v1294 = vmul.f32 %v1134, %v1278
        %v1295 = vmul.f32 %v1135, %v1279
        %v1296 = vmul.f32 %v1136, %v1280
        %v1297 = vmul.f32 %v1137, %v1281
        %v1298 = vmul.f32 %v1138, %v1282
        %v1299 = vmul.f32 %v1139, %v1283
        %v1300 = vmul.f32 %v1140, %v1284
        %v1301 = vmul.f32 %v1141, %v1285
        %v1302 = vmul.f32 %v1142, %v1286
        %v1303 = vmul.f32 %v1143, %v1287
        %v1304 = vmul.f32 %v1144, %v1288
        %v1305 = vmul.f32 %v1145, %v1289
        %v1306 = vmul.f32 %v1146, %v1290
        %v1307 = vlaneseq
        %v1308 = vshrl.u32 %v1307, 7
        %v1309 = vsub.s32 0, %v1308
        %v1310 = vrot.slane %v876, %v1309
        %v1311 = vmul.f32 %v1291, %v1310
        %v1312 = vmul.f32 %v1292, %v1310
        %v1313 = vmul.f32 %v1293, %v1310
        %v1314 = vmul.f32 %v1294, %v1310
        %v1315 = vmul.f32 %v1295, %v1310
        %v1316 = vmul.f32 %v1296, %v1310
        %v1317 = vmul.f32 %v1297, %v1310
        %v1318 = vmul.f32 %v1298, %v1310
        %v1319 = vmul.f32 %v1299, %v1310
        %v1320 = vmul.f32 %v1300, %v1310
        %v1321 = vmul.f32 %v1301, %v1310
        %v1322 = vmul.f32 %v1302, %v1310
        %v1323 = vmul.f32 %v1303, %v1310
        %v1324 = vmul.f32 %v1304, %v1310
        %v1325 = vmul.f32 %v1305, %v1310
        %v1326 = vmul.f32 %v1306, %v1310
        %v1327 = vlaneseq
        %v1328 = vshrl.u32 %v1327, 7
        %v1329 = vsub.s32 0, %v1328
        %v1330 = vrot.slane %v877, %v1329
        %v1331 = vadd.f32 %v1311, %v1330
        %v1332 = vadd.f32 %v1312, %v1330
        %v1333 = vadd.f32 %v1313, %v1330
        %v1334 = vadd.f32 %v1314, %v1330
        %v1335 = vadd.f32 %v1315, %v1330
        %v1336 = vadd.f32 %v1316, %v1330
        %v1337 = vadd.f32 %v1317, %v1330
        %v1338 = vadd.f32 %v1318, %v1330
        %v1339 = vadd.f32 %v1319, %v1330
        %v1340 = vadd.f32 %v1320, %v1330
        %v1341 = vadd.f32 %v1321, %v1330
        %v1342 = vadd.f32 %v1322, %v1330
        %v1343 = vadd.f32 %v1323, %v1330
        %v1344 = vadd.f32 %v1324, %v1330
        %v1345 = vadd.f32 %v1325, %v1330
        %v1346 = vadd.f32 %v1326, %v1330
        %v1347 = vtanh.pop %v1331
        %v1348 = vtanh.pop %v1332
        %v1349 = vtanh.pop %v1333
        %v1350 = vtanh.pop %v1334
        %v1351 = vtanh.pop %v1335
        %v1352 = vtanh.pop %v1336
        %v1353 = vtanh.pop %v1337
        %v1354 = vtanh.pop %v1338
        %v1355 = vtanh.pop %v1339
        %v1356 = vtanh.pop %v1340
        %v1357 = vtanh.pop %v1341
        %v1358 = vtanh.pop %v1342
        %v1359 = vtanh.pop %v1343
        %v1360 = vtanh.pop %v1344
        %v1361 = vtanh.pop %v1345
        %v1362 = vtanh.pop %v1346
        %v1363 = vmul.f32 %v1347, 0.5
        %v1364 = vmul.f32 %v1348, 0.5
        %v1365 = vmul.f32 %v1349, 0.5
        %v1366 = vmul.f32 %v1350, 0.5
        %v1367 = vmul.f32 %v1351, 0.5
        %v1368 = vmul.f32 %v1352, 0.5
        %v1369 = vmul.f32 %v1353, 0.5
        %v1370 = vmul.f32 %v1354, 0.5
        %v1371 = vmul.f32 %v1355, 0.5
        %v1372 = vmul.f32 %v1356, 0.5
        %v1373 = vmul.f32 %v1357, 0.5
        %v1374 = vmul.f32 %v1358, 0.5
        %v1375 = vmul.f32 %v1359, 0.5
        %v1376 = vmul.f32 %v1360, 0.5
        %v1377 = vmul.f32 %v1361, 0.5
        %v1378 = vmul.f32 %v1362, 0.5
        %v1379 = vadd.f32 %v1363, 0.5
        %v1380 = vadd.f32 %v1364, 0.5
        %v1381 = vadd.f32 %v1365, 0.5
        %v1382 = vadd.f32 %v1366, 0.5
        %v1383 = vadd.f32 %v1367, 0.5
        %v1384 = vadd.f32 %v1368, 0.5
        %v1385 = vadd.f32 %v1369, 0.5
        %v1386 = vadd.f32 %v1370, 0.5
        %v1387 = vadd.f32 %v1371, 0.5
        %v1388 = vadd.f32 %v1372, 0.5
        %v1389 = vadd.f32 %v1373, 0.5
        %v1390 = vadd.f32 %v1374, 0.5
        %v1391 = vadd.f32 %v1375, 0.5
        %v1392 = vadd.f32 %v1376, 0.5
        %v1393 = vadd.f32 %v1377, 0.5
        %v1394 = vadd.f32 %v1378, 0.5
        %v1395 = vlaneseq
        %v1396 = vshrl.u32 %v1395, 7
        %v1397 = vsub.s32 0, %v1396
        %v1398 = vrot.slane %v880, %v1397
        %1400 = vrot.lane.b32.xlu0 %v1398, 32
        %v1401 = vpop.permute.xlu0 %1400
        %v1403 = vmul.f32 %v1379, %v1401
        %v1404 = vmul.f32 %v1380, %v1401
        %v1405 = vmul.f32 %v1381, %v1401
        %v1406 = vmul.f32 %v1382, %v1401
        %v1407 = vmul.f32 %v1383, %v1401
        %v1408 = vmul.f32 %v1384, %v1401
        %v1409 = vmul.f32 %v1385, %v1401
        %v1410 = vmul.f32 %v1386, %v1401
        %v1411 = vmul.f32 %v1387, %v1401
        %v1412 = vmul.f32 %v1388, %v1401
        %v1413 = vmul.f32 %v1389, %v1401
        %v1414 = vmul.f32 %v1390, %v1401
        %v1415 = vmul.f32 %v1391, %v1401
        %v1416 = vmul.f32 %v1392, %v1401
        %v1417 = vmul.f32 %v1393, %v1401
        %v1418 = vmul.f32 %v1394, %v1401
        %1435 = vrot.lane.b32.xlu0 %v1347, 32
        %v1436 = vpop.permute.xlu0 %1435
        %1437 = vrot.lane.b32.xlu0 %v1348, 32
        %v1438 = vpop.permute.xlu0 %1437
        %1439 = vrot.lane.b32.xlu0 %v1349, 32
        %v1440 = vpop.permute.xlu0 %1439
        %1441 = vrot.lane.b32.xlu0 %v1350, 32
        %v1442 = vpop.permute.xlu0 %1441
        %1443 = vrot.lane.b32.xlu0 %v1351, 32
        %v1444 = vpop.permute.xlu0 %1443
        %1445 = vrot.lane.b32.xlu0 %v1352, 32
        %v1446 = vpop.permute.xlu0 %1445
        %1447 = vrot.lane.b32.xlu0 %v1353, 32
        %v1448 = vpop.permute.xlu0 %1447
        %1449 = vrot.lane.b32.xlu0 %v1354, 32
        %v1450 = vpop.permute.xlu0 %1449
        %1451 = vrot.lane.b32.xlu0 %v1355, 32
        %v1452 = vpop.permute.xlu0 %1451
        %1453 = vrot.lane.b32.xlu0 %v1356, 32
        %v1454 = vpop.permute.xlu0 %1453
        %1455 = vrot.lane.b32.xlu0 %v1357, 32
        %v1456 = vpop.permute.xlu0 %1455
        %1457 = vrot.lane.b32.xlu0 %v1358, 32
        %v1458 = vpop.permute.xlu0 %1457
        %1459 = vrot.lane.b32.xlu0 %v1359, 32
        %v1460 = vpop.permute.xlu0 %1459
        %1461 = vrot.lane.b32.xlu0 %v1360, 32
        %v1462 = vpop.permute.xlu0 %1461
        %1463 = vrot.lane.b32.xlu0 %v1361, 32
        %v1464 = vpop.permute.xlu0 %1463
        %1465 = vrot.lane.b32.xlu0 %v1362, 32
        %v1466 = vpop.permute.xlu0 %1465
        %v1483 = vmul.f32 %v1379, %v1436
        %v1484 = vmul.f32 %v1380, %v1438
        %v1485 = vmul.f32 %v1381, %v1440
        %v1486 = vmul.f32 %v1382, %v1442
        %v1487 = vmul.f32 %v1383, %v1444
        %v1488 = vmul.f32 %v1384, %v1446
        %v1489 = vmul.f32 %v1385, %v1448
        %v1490 = vmul.f32 %v1386, %v1450
        %v1491 = vmul.f32 %v1387, %v1452
        %v1492 = vmul.f32 %v1388, %v1454
        %v1493 = vmul.f32 %v1389, %v1456
        %v1494 = vmul.f32 %v1390, %v1458
        %v1495 = vmul.f32 %v1391, %v1460
        %v1496 = vmul.f32 %v1392, %v1462
        %v1497 = vmul.f32 %v1393, %v1464
        %v1498 = vmul.f32 %v1394, %v1466
        %1515 = vrot.lane.b32.xlu0 %v1483, 32
        %v1516 = vpop.permute.xlu0 %1515
        %1517 = vrot.lane.b32.xlu0 %v1484, 32
        %v1518 = vpop.permute.xlu0 %1517
        %1519 = vrot.lane.b32.xlu0 %v1485, 32
        %v1520 = vpop.permute.xlu0 %1519
        %1521 = vrot.lane.b32.xlu0 %v1486, 32
        %v1522 = vpop.permute.xlu0 %1521
        %1523 = vrot.lane.b32.xlu0 %v1487, 32
        %v1524 = vpop.permute.xlu0 %1523
        %1525 = vrot.lane.b32.xlu0 %v1488, 32
        %v1526 = vpop.permute.xlu0 %1525
        %1527 = vrot.lane.b32.xlu0 %v1489, 32
        %v1528 = vpop.permute.xlu0 %1527
        %1529 = vrot.lane.b32.xlu0 %v1490, 32
        %v1530 = vpop.permute.xlu0 %1529
        %1531 = vrot.lane.b32.xlu0 %v1491, 32
        %v1532 = vpop.permute.xlu0 %1531
        %1533 = vrot.lane.b32.xlu0 %v1492, 32
        %v1534 = vpop.permute.xlu0 %1533
        %1535 = vrot.lane.b32.xlu0 %v1493, 32
        %v1536 = vpop.permute.xlu0 %1535
        %1537 = vrot.lane.b32.xlu0 %v1494, 32
        %v1538 = vpop.permute.xlu0 %1537
        %1539 = vrot.lane.b32.xlu0 %v1495, 32
        %v1540 = vpop.permute.xlu0 %1539
        %1541 = vrot.lane.b32.xlu0 %v1496, 32
        %v1542 = vpop.permute.xlu0 %1541
        %1543 = vrot.lane.b32.xlu0 %v1497, 32
        %v1544 = vpop.permute.xlu0 %1543
        %1545 = vrot.lane.b32.xlu0 %v1498, 32
        %v1546 = vpop.permute.xlu0 %1545
        %v1563 = vadd.f32 %v1403, %v1516
        %v1564 = vadd.f32 %v1404, %v1518
        %v1565 = vadd.f32 %v1405, %v1520
        %v1566 = vadd.f32 %v1406, %v1522
        %v1567 = vadd.f32 %v1407, %v1524
        %v1568 = vadd.f32 %v1408, %v1526
        %v1569 = vadd.f32 %v1409, %v1528
        %v1570 = vadd.f32 %v1410, %v1530
        %v1571 = vadd.f32 %v1411, %v1532
        %v1572 = vadd.f32 %v1412, %v1534
        %v1573 = vadd.f32 %v1413, %v1536
        %v1574 = vadd.f32 %v1414, %v1538
        %v1575 = vadd.f32 %v1415, %v1540
        %v1576 = vadd.f32 %v1416, %v1542
        %v1577 = vadd.f32 %v1417, %v1544
        %v1578 = vadd.f32 %v1418, %v1546
        %1595 = vrot.lane.b32.xlu0 %v1563, 96
        %v1596 = vpop.permute.xlu0 %1595
        %1597 = vrot.lane.b32.xlu0 %v1564, 96
        %v1598 = vpop.permute.xlu0 %1597
        %1599 = vrot.lane.b32.xlu0 %v1565, 96
        %v1600 = vpop.permute.xlu0 %1599
        %1601 = vrot.lane.b32.xlu0 %v1566, 96
        %v1602 = vpop.permute.xlu0 %1601
        %1603 = vrot.lane.b32.xlu0 %v1567, 96
        %v1604 = vpop.permute.xlu0 %1603
        %1605 = vrot.lane.b32.xlu0 %v1568, 96
        %v1606 = vpop.permute.xlu0 %1605
        %1607 = vrot.lane.b32.xlu0 %v1569, 96
        %v1608 = vpop.permute.xlu0 %1607
        %1609 = vrot.lane.b32.xlu0 %v1570, 96
        %v1610 = vpop.permute.xlu0 %1609
        %1611 = vrot.lane.b32.xlu0 %v1571, 96
        %v1612 = vpop.permute.xlu0 %1611
        %1613 = vrot.lane.b32.xlu0 %v1572, 96
        %v1614 = vpop.permute.xlu0 %1613
        %1615 = vrot.lane.b32.xlu0 %v1573, 96
        %v1616 = vpop.permute.xlu0 %1615
        %1617 = vrot.lane.b32.xlu0 %v1574, 96
        %v1618 = vpop.permute.xlu0 %1617
        %1619 = vrot.lane.b32.xlu0 %v1575, 96
        %v1620 = vpop.permute.xlu0 %1619
        %1621 = vrot.lane.b32.xlu0 %v1576, 96
        %v1622 = vpop.permute.xlu0 %1621
        %1623 = vrot.lane.b32.xlu0 %v1577, 96
        %v1624 = vpop.permute.xlu0 %1623
        %1625 = vrot.lane.b32.xlu0 %v1578, 96
        %v1626 = vpop.permute.xlu0 %1625
        %v1643 = vsel %vm561, %v1596, 0.0
        %1644 = vadd.xlane.f32.xlu0 %v1643
        %v1645 = vpop.xlane.xlu0 %1644
        %v1646 = vsel %vm561, %v1598, 0.0
        %1647 = vadd.xlane.f32.xlu0 %v1646
        %v1648 = vpop.xlane.xlu0 %1647
        %v1649 = vsel %vm561, %v1600, 0.0
        %1650 = vadd.xlane.f32.xlu0 %v1649
        %v1651 = vpop.xlane.xlu0 %1650
        %v1652 = vsel %vm561, %v1602, 0.0
        %1653 = vadd.xlane.f32.xlu0 %v1652
        %v1654 = vpop.xlane.xlu0 %1653
        %v1655 = vsel %vm561, %v1604, 0.0
        %1656 = vadd.xlane.f32.xlu0 %v1655
        %v1657 = vpop.xlane.xlu0 %1656
        %v1658 = vsel %vm561, %v1606, 0.0
        %1659 = vadd.xlane.f32.xlu0 %v1658
        %v1660 = vpop.xlane.xlu0 %1659
        %v1661 = vsel %vm561, %v1608, 0.0
        %1662 = vadd.xlane.f32.xlu0 %v1661
        %v1663 = vpop.xlane.xlu0 %1662
        %v1664 = vsel %vm561, %v1610, 0.0
        %1665 = vadd.xlane.f32.xlu0 %v1664
        %v1666 = vpop.xlane.xlu0 %1665
        %v1667 = vsel %vm561, %v1612, 0.0
        %1668 = vadd.xlane.f32.xlu0 %v1667
        %v1669 = vpop.xlane.xlu0 %1668
        %v1670 = vsel %vm561, %v1614, 0.0
        %1671 = vadd.xlane.f32.xlu0 %v1670
        %v1672 = vpop.xlane.xlu0 %1671
        %v1673 = vsel %vm561, %v1616, 0.0
        %1674 = vadd.xlane.f32.xlu0 %v1673
        %v1675 = vpop.xlane.xlu0 %1674
        %v1676 = vsel %vm561, %v1618, 0.0
        %1677 = vadd.xlane.f32.xlu0 %v1676
        %v1678 = vpop.xlane.xlu0 %1677
        %v1679 = vsel %vm561, %v1620, 0.0
        %1680 = vadd.xlane.f32.xlu0 %v1679
        %v1681 = vpop.xlane.xlu0 %1680
        %v1682 = vsel %vm561, %v1622, 0.0
        %1683 = vadd.xlane.f32.xlu0 %v1682
        %v1684 = vpop.xlane.xlu0 %1683
        %v1685 = vsel %vm561, %v1624, 0.0
        %1686 = vadd.xlane.f32.xlu0 %v1685
        %v1687 = vpop.xlane.xlu0 %1686
        %v1688 = vsel %vm561, %v1626, 0.0
        %1689 = vadd.xlane.f32.xlu0 %v1688
        %v1690 = vpop.xlane.xlu0 %1689
        %v1691 = vmul.f32 %v1645, %v610
        %v1692 = vmul.f32 %v1648, %v610
        %v1693 = vmul.f32 %v1651, %v610
        %v1694 = vmul.f32 %v1654, %v610
        %v1695 = vmul.f32 %v1657, %v610
        %v1696 = vmul.f32 %v1660, %v610
        %v1697 = vmul.f32 %v1663, %v610
        %v1698 = vmul.f32 %v1666, %v610
        %v1699 = vmul.f32 %v1669, %v610
        %v1700 = vmul.f32 %v1672, %v610
        %v1701 = vmul.f32 %v1675, %v610
        %v1702 = vmul.f32 %v1678, %v610
        %v1703 = vmul.f32 %v1681, %v610
        %v1704 = vmul.f32 %v1684, %v610
        %v1705 = vmul.f32 %v1687, %v610
        %v1706 = vmul.f32 %v1690, %v610
        %v1707 = vsub.f32 %v1563, %v1691
        %v1708 = vsub.f32 %v1564, %v1692
        %v1709 = vsub.f32 %v1565, %v1693
        %v1710 = vsub.f32 %v1566, %v1694
        %v1711 = vsub.f32 %v1567, %v1695
        %v1712 = vsub.f32 %v1568, %v1696
        %v1713 = vsub.f32 %v1569, %v1697
        %v1714 = vsub.f32 %v1570, %v1698
        %v1715 = vsub.f32 %v1571, %v1699
        %v1716 = vsub.f32 %v1572, %v1700
        %v1717 = vsub.f32 %v1573, %v1701
        %v1718 = vsub.f32 %v1574, %v1702
        %v1719 = vsub.f32 %v1575, %v1703
        %v1720 = vsub.f32 %v1576, %v1704
        %v1721 = vsub.f32 %v1577, %v1705
        %v1722 = vsub.f32 %v1578, %v1706
        %v1723 = vmul.f32 %v1707, %v1707
        %v1724 = vmul.f32 %v1708, %v1708
        %v1725 = vmul.f32 %v1709, %v1709
        %v1726 = vmul.f32 %v1710, %v1710
        %v1727 = vmul.f32 %v1711, %v1711
        %v1728 = vmul.f32 %v1712, %v1712
        %v1729 = vmul.f32 %v1713, %v1713
        %v1730 = vmul.f32 %v1714, %v1714
        %v1731 = vmul.f32 %v1715, %v1715
        %v1732 = vmul.f32 %v1716, %v1716
        %v1733 = vmul.f32 %v1717, %v1717
        %v1734 = vmul.f32 %v1718, %v1718
        %v1735 = vmul.f32 %v1719, %v1719
        %v1736 = vmul.f32 %v1720, %v1720
        %v1737 = vmul.f32 %v1721, %v1721
        %v1738 = vmul.f32 %v1722, %v1722
        %1755 = vrot.lane.b32.xlu0 %v1723, 96
        %v1756 = vpop.permute.xlu0 %1755
        %1757 = vrot.lane.b32.xlu0 %v1724, 96
        %v1758 = vpop.permute.xlu0 %1757
        %1759 = vrot.lane.b32.xlu0 %v1725, 96
        %v1760 = vpop.permute.xlu0 %1759
        %1761 = vrot.lane.b32.xlu0 %v1726, 96
        %v1762 = vpop.permute.xlu0 %1761
        %1763 = vrot.lane.b32.xlu0 %v1727, 96
        %v1764 = vpop.permute.xlu0 %1763
        %1765 = vrot.lane.b32.xlu0 %v1728, 96
        %v1766 = vpop.permute.xlu0 %1765
        %1767 = vrot.lane.b32.xlu0 %v1729, 96
        %v1768 = vpop.permute.xlu0 %1767
        %1769 = vrot.lane.b32.xlu0 %v1730, 96
        %v1770 = vpop.permute.xlu0 %1769
        %1771 = vrot.lane.b32.xlu0 %v1731, 96
        %v1772 = vpop.permute.xlu0 %1771
        %1773 = vrot.lane.b32.xlu0 %v1732, 96
        %v1774 = vpop.permute.xlu0 %1773
        %1775 = vrot.lane.b32.xlu0 %v1733, 96
        %v1776 = vpop.permute.xlu0 %1775
        %1777 = vrot.lane.b32.xlu0 %v1734, 96
        %v1778 = vpop.permute.xlu0 %1777
        %1779 = vrot.lane.b32.xlu0 %v1735, 96
        %v1780 = vpop.permute.xlu0 %1779
        %1781 = vrot.lane.b32.xlu0 %v1736, 96
        %v1782 = vpop.permute.xlu0 %1781
        %1783 = vrot.lane.b32.xlu0 %v1737, 96
        %v1784 = vpop.permute.xlu0 %1783
        %1785 = vrot.lane.b32.xlu0 %v1738, 96
        %v1786 = vpop.permute.xlu0 %1785
        %v1803 = vsel %vm561, %v1756, 0.0
        %1804 = vadd.xlane.f32.xlu0 %v1803
        %v1805 = vpop.xlane.xlu0 %1804
        %v1806 = vsel %vm561, %v1758, 0.0
        %1807 = vadd.xlane.f32.xlu0 %v1806
        %v1808 = vpop.xlane.xlu0 %1807
        %v1809 = vsel %vm561, %v1760, 0.0
        %1810 = vadd.xlane.f32.xlu0 %v1809
        %v1811 = vpop.xlane.xlu0 %1810
        %v1812 = vsel %vm561, %v1762, 0.0
        %1813 = vadd.xlane.f32.xlu0 %v1812
        %v1814 = vpop.xlane.xlu0 %1813
        %v1815 = vsel %vm561, %v1764, 0.0
        %1816 = vadd.xlane.f32.xlu0 %v1815
        %v1817 = vpop.xlane.xlu0 %1816
        %v1818 = vsel %vm561, %v1766, 0.0
        %1819 = vadd.xlane.f32.xlu0 %v1818
        %v1820 = vpop.xlane.xlu0 %1819
        %v1821 = vsel %vm561, %v1768, 0.0
        %1822 = vadd.xlane.f32.xlu0 %v1821
        %v1823 = vpop.xlane.xlu0 %1822
        %v1824 = vsel %vm561, %v1770, 0.0
        %1825 = vadd.xlane.f32.xlu0 %v1824
        %v1826 = vpop.xlane.xlu0 %1825
        %v1827 = vsel %vm561, %v1772, 0.0
        %1828 = vadd.xlane.f32.xlu0 %v1827
        %v1829 = vpop.xlane.xlu0 %1828
        %v1830 = vsel %vm561, %v1774, 0.0
        %1831 = vadd.xlane.f32.xlu0 %v1830
        %v1832 = vpop.xlane.xlu0 %1831
        %v1833 = vsel %vm561, %v1776, 0.0
        %1834 = vadd.xlane.f32.xlu0 %v1833
        %v1835 = vpop.xlane.xlu0 %1834
        %v1836 = vsel %vm561, %v1778, 0.0
        %1837 = vadd.xlane.f32.xlu0 %v1836
        %v1838 = vpop.xlane.xlu0 %1837
        %v1839 = vsel %vm561, %v1780, 0.0
        %1840 = vadd.xlane.f32.xlu0 %v1839
        %v1841 = vpop.xlane.xlu0 %1840
        %v1842 = vsel %vm561, %v1782, 0.0
        %1843 = vadd.xlane.f32.xlu0 %v1842
        %v1844 = vpop.xlane.xlu0 %1843
        %v1845 = vsel %vm561, %v1784, 0.0
        %1846 = vadd.xlane.f32.xlu0 %v1845
        %v1847 = vpop.xlane.xlu0 %1846
        %v1848 = vsel %vm561, %v1786, 0.0
        %1849 = vadd.xlane.f32.xlu0 %v1848
        %v1850 = vpop.xlane.xlu0 %1849
        %v1851 = vmul.f32 %v1805, 0.032258064
        %v1852 = vmul.f32 %v1808, 0.032258064
        %v1853 = vmul.f32 %v1811, 0.032258064
        %v1854 = vmul.f32 %v1814, 0.032258064
        %v1855 = vmul.f32 %v1817, 0.032258064
        %v1856 = vmul.f32 %v1820, 0.032258064
        %v1857 = vmul.f32 %v1823, 0.032258064
        %v1858 = vmul.f32 %v1826, 0.032258064
        %v1859 = vmul.f32 %v1829, 0.032258064
        %v1860 = vmul.f32 %v1832, 0.032258064
        %v1861 = vmul.f32 %v1835, 0.032258064
        %v1862 = vmul.f32 %v1838, 0.032258064
        %v1863 = vmul.f32 %v1841, 0.032258064
        %v1864 = vmul.f32 %v1844, 0.032258064
        %v1865 = vmul.f32 %v1847, 0.032258064
        %v1866 = vmul.f32 %v1850, 0.032258064
        %v1867 = vadd.f32 %v1851, 1e-30
        %v1868 = vadd.f32 %v1852, 1e-30
        %v1869 = vadd.f32 %v1853, 1e-30
        %v1870 = vadd.f32 %v1854, 1e-30
        %v1871 = vadd.f32 %v1855, 1e-30
        %v1872 = vadd.f32 %v1856, 1e-30
        %v1873 = vadd.f32 %v1857, 1e-30
        %v1874 = vadd.f32 %v1858, 1e-30
        %v1875 = vadd.f32 %v1859, 1e-30
        %v1876 = vadd.f32 %v1860, 1e-30
        %v1877 = vadd.f32 %v1861, 1e-30
        %v1878 = vadd.f32 %v1862, 1e-30
        %v1879 = vadd.f32 %v1863, 1e-30
        %v1880 = vadd.f32 %v1864, 1e-30
        %v1881 = vadd.f32 %v1865, 1e-30
        %v1882 = vadd.f32 %v1866, 1e-30
        %v1883 = vrsqrt.pop %v1867
        %v1884 = vrsqrt.pop %v1868
        %v1885 = vrsqrt.pop %v1869
        %v1886 = vrsqrt.pop %v1870
        %v1887 = vrsqrt.pop %v1871
        %v1888 = vrsqrt.pop %v1872
        %v1889 = vrsqrt.pop %v1873
        %v1890 = vrsqrt.pop %v1874
        %v1891 = vrsqrt.pop %v1875
        %v1892 = vrsqrt.pop %v1876
        %v1893 = vrsqrt.pop %v1877
        %v1894 = vrsqrt.pop %v1878
        %v1895 = vrsqrt.pop %v1879
        %v1896 = vrsqrt.pop %v1880
        %v1897 = vrsqrt.pop %v1881
        %v1898 = vrsqrt.pop %v1882
        %v1899 = vmul.f32 %v1883, 1e-05
        %v1900 = vmul.f32 %v1884, 1e-05
        %v1901 = vmul.f32 %v1885, 1e-05
        %v1902 = vmul.f32 %v1886, 1e-05
        %v1903 = vmul.f32 %v1887, 1e-05
        %v1904 = vmul.f32 %v1888, 1e-05
        %v1905 = vmul.f32 %v1889, 1e-05
        %v1906 = vmul.f32 %v1890, 1e-05
        %v1907 = vmul.f32 %v1891, 1e-05
        %v1908 = vmul.f32 %v1892, 1e-05
        %v1909 = vmul.f32 %v1893, 1e-05
        %v1910 = vmul.f32 %v1894, 1e-05
        %v1911 = vmul.f32 %v1895, 1e-05
        %v1912 = vmul.f32 %v1896, 1e-05
        %v1913 = vmul.f32 %v1897, 1e-05
        %v1914 = vmul.f32 %v1898, 1e-05
        %v1915 = vsub.f32 1.0, %v1899
        %v1916 = vsub.f32 1.0, %v1900
        %v1917 = vsub.f32 1.0, %v1901
        %v1918 = vsub.f32 1.0, %v1902
        %v1919 = vsub.f32 1.0, %v1903
        %v1920 = vsub.f32 1.0, %v1904
        %v1921 = vsub.f32 1.0, %v1905
        %v1922 = vsub.f32 1.0, %v1906
        %v1923 = vsub.f32 1.0, %v1907
        %v1924 = vsub.f32 1.0, %v1908
        %v1925 = vsub.f32 1.0, %v1909
        %v1926 = vsub.f32 1.0, %v1910
        %v1927 = vsub.f32 1.0, %v1911
        %v1928 = vsub.f32 1.0, %v1912
        %v1929 = vsub.f32 1.0, %v1913
        %v1930 = vsub.f32 1.0, %v1914
        %v1931 = vmul.f32 %v1883, %v1915
        %v1932 = vmul.f32 %v1884, %v1916
        %v1933 = vmul.f32 %v1885, %v1917
        %v1934 = vmul.f32 %v1886, %v1918
        %v1935 = vmul.f32 %v1887, %v1919
        %v1936 = vmul.f32 %v1888, %v1920
        %v1937 = vmul.f32 %v1889, %v1921
        %v1938 = vmul.f32 %v1890, %v1922
        %v1939 = vmul.f32 %v1891, %v1923
        %v1940 = vmul.f32 %v1892, %v1924
        %v1941 = vmul.f32 %v1893, %v1925
        %v1942 = vmul.f32 %v1894, %v1926
        %v1943 = vmul.f32 %v1895, %v1927
        %v1944 = vmul.f32 %v1896, %v1928
        %v1945 = vmul.f32 %v1897, %v1929
        %v1946 = vmul.f32 %v1898, %v1930
        %v1947 = vmul.f32 %v1707, %v1931
        %v1948 = vmul.f32 %v1708, %v1932
        %v1949 = vmul.f32 %v1709, %v1933
        %v1950 = vmul.f32 %v1710, %v1934
        %v1951 = vmul.f32 %v1711, %v1935
        %v1952 = vmul.f32 %v1712, %v1936
        %v1953 = vmul.f32 %v1713, %v1937
        %v1954 = vmul.f32 %v1714, %v1938
        %v1955 = vmul.f32 %v1715, %v1939
        %v1956 = vmul.f32 %v1716, %v1940
        %v1957 = vmul.f32 %v1717, %v1941
        %v1958 = vmul.f32 %v1718, %v1942
        %v1959 = vmul.f32 %v1719, %v1943
        %v1960 = vmul.f32 %v1720, %v1944
        %v1961 = vmul.f32 %v1721, %v1945
        %v1962 = vmul.f32 %v1722, %v1946
        %v1963 = vlaneseq
        %v1964 = vshrl.u32 %v1963, 7
        %v1965 = vsub.s32 0, %v1964
        %v1966 = vrot.slane %v878, %v1965
        %1968 = vrot.lane.b32.xlu0 %v1966, 32
        %v1969 = vpop.permute.xlu0 %1968
        %v1971 = vmul.f32 %v1947, %v1969
        %v1972 = vmul.f32 %v1948, %v1969
        %v1973 = vmul.f32 %v1949, %v1969
        %v1974 = vmul.f32 %v1950, %v1969
        %v1975 = vmul.f32 %v1951, %v1969
        %v1976 = vmul.f32 %v1952, %v1969
        %v1977 = vmul.f32 %v1953, %v1969
        %v1978 = vmul.f32 %v1954, %v1969
        %v1979 = vmul.f32 %v1955, %v1969
        %v1980 = vmul.f32 %v1956, %v1969
        %v1981 = vmul.f32 %v1957, %v1969
        %v1982 = vmul.f32 %v1958, %v1969
        %v1983 = vmul.f32 %v1959, %v1969
        %v1984 = vmul.f32 %v1960, %v1969
        %v1985 = vmul.f32 %v1961, %v1969
        %v1986 = vmul.f32 %v1962, %v1969
        %v1987 = vlaneseq
        %v1988 = vshrl.u32 %v1987, 7
        %v1989 = vsub.s32 0, %v1988
        %v1990 = vrot.slane %v879, %v1989
        %1992 = vrot.lane.b32.xlu0 %v1990, 32
        %v1993 = vpop.permute.xlu0 %1992
        %v1995 = vadd.f32 %v1971, %v1993
        %v1996 = vadd.f32 %v1972, %v1993
        %v1997 = vadd.f32 %v1973, %v1993
        %v1998 = vadd.f32 %v1974, %v1993
        %v1999 = vadd.f32 %v1975, %v1993
        %v2000 = vadd.f32 %v1976, %v1993
        %v2001 = vadd.f32 %v1977, %v1993
        %v2002 = vadd.f32 %v1978, %v1993
        %v2003 = vadd.f32 %v1979, %v1993
        %v2004 = vadd.f32 %v1980, %v1993
        %v2005 = vadd.f32 %v1981, %v1993
        %v2006 = vadd.f32 %v1982, %v1993
        %v2007 = vadd.f32 %v1983, %v1993
        %v2008 = vadd.f32 %v1984, %v1993
        %v2009 = vadd.f32 %v1985, %v1993
        %v2010 = vadd.f32 %v1986, %v1993
        %v2011 = vtanh.pop %v1995
        %v2012 = vtanh.pop %v1996
        %v2013 = vtanh.pop %v1997
        %v2014 = vtanh.pop %v1998
        %v2015 = vtanh.pop %v1999
        %v2016 = vtanh.pop %v2000
        %v2017 = vtanh.pop %v2001
        %v2018 = vtanh.pop %v2002
        %v2019 = vtanh.pop %v2003
        %v2020 = vtanh.pop %v2004
        %v2021 = vtanh.pop %v2005
        %v2022 = vtanh.pop %v2006
        %v2023 = vtanh.pop %v2007
        %v2024 = vtanh.pop %v2008
        %v2025 = vtanh.pop %v2009
        %v2026 = vtanh.pop %v2010
        %2043 = vrot.lane.b32.xlu0 %v2011, 32
        %v2044 = vpop.permute.xlu0 %2043
        %2045 = vrot.lane.b32.xlu0 %v2012, 32
        %v2046 = vpop.permute.xlu0 %2045
        %2047 = vrot.lane.b32.xlu0 %v2013, 32
        %v2048 = vpop.permute.xlu0 %2047
        %2049 = vrot.lane.b32.xlu0 %v2014, 32
        %v2050 = vpop.permute.xlu0 %2049
        %2051 = vrot.lane.b32.xlu0 %v2015, 32
        %v2052 = vpop.permute.xlu0 %2051
        %2053 = vrot.lane.b32.xlu0 %v2016, 32
        %v2054 = vpop.permute.xlu0 %2053
        %2055 = vrot.lane.b32.xlu0 %v2017, 32
        %v2056 = vpop.permute.xlu0 %2055
        %2057 = vrot.lane.b32.xlu0 %v2018, 32
        %v2058 = vpop.permute.xlu0 %2057
        %2059 = vrot.lane.b32.xlu0 %v2019, 32
        %v2060 = vpop.permute.xlu0 %2059
        %2061 = vrot.lane.b32.xlu0 %v2020, 32
        %v2062 = vpop.permute.xlu0 %2061
        %2063 = vrot.lane.b32.xlu0 %v2021, 32
        %v2064 = vpop.permute.xlu0 %2063
        %2065 = vrot.lane.b32.xlu0 %v2022, 32
        %v2066 = vpop.permute.xlu0 %2065
        %2067 = vrot.lane.b32.xlu0 %v2023, 32
        %v2068 = vpop.permute.xlu0 %2067
        %2069 = vrot.lane.b32.xlu0 %v2024, 32
        %v2070 = vpop.permute.xlu0 %2069
        %2071 = vrot.lane.b32.xlu0 %v2025, 32
        %v2072 = vpop.permute.xlu0 %2071
        %2073 = vrot.lane.b32.xlu0 %v2026, 32
        %v2074 = vpop.permute.xlu0 %2073
        %v2091 = vmul.f32 %v1379, %v2044
        %v2092 = vmul.f32 %v1380, %v2046
        %v2093 = vmul.f32 %v1381, %v2048
        %v2094 = vmul.f32 %v1382, %v2050
        %v2095 = vmul.f32 %v1383, %v2052
        %v2096 = vmul.f32 %v1384, %v2054
        %v2097 = vmul.f32 %v1385, %v2056
        %v2098 = vmul.f32 %v1386, %v2058
        %v2099 = vmul.f32 %v1387, %v2060
        %v2100 = vmul.f32 %v1388, %v2062
        %v2101 = vmul.f32 %v1389, %v2064
        %v2102 = vmul.f32 %v1390, %v2066
        %v2103 = vmul.f32 %v1391, %v2068
        %v2104 = vmul.f32 %v1392, %v2070
        %v2105 = vmul.f32 %v1393, %v2072
        %v2106 = vmul.f32 %v1394, %v2074
        %s2107 = scalar_lea.vmem %s2, 4
        %v2108 = vld [vmem:[%s2107] sm:$0x1]
        %v2109 = vld [vmem:[%s2107 + $0x1] sm:$0x1]
        %v2110 = vld [vmem:[%s2107 + $0x2] sm:$0x1]
        %s2111 = scalar_lea.vmem %s4, 4
        %v2112 = vld [vmem:[%s2111] sm:$0x1]
        %v2113 = vld [vmem:[%s2111 + $0x1] sm:$0x1]
        %v2114 = vld [vmem:[%s2111 + $0x2] sm:$0x1]
        %s2115 = scalar_lea.vmem %s1, 32
        %v2116 = vld [vmem:[%s2115] sm:$0xff]
        %v2117 = vld [vmem:[%s2115 + $0x8] sm:$0xff]
        %v2118 = vld [vmem:[%s2115 + $0x10] sm:$0xff]
        %v2119 = vld [vmem:[%s2115 + $0x18] sm:$0xff]
        %v2120 = vlaneseq
        %v2121 = vshrl.u32 %v2120, 7
        %v2122 = vsub.s32 0, %v2121
        %v2123 = vrot.slane %v2108, %v2122
        %2140 = vrot.lane.b32.xlu0 %v2091, 64
        %v2141 = vpop.permute.xlu0 %2140
        %2142 = vrot.lane.b32.xlu0 %v2092, 64
        %v2143 = vpop.permute.xlu0 %2142
        %2144 = vrot.lane.b32.xlu0 %v2093, 64
        %v2145 = vpop.permute.xlu0 %2144
        %2146 = vrot.lane.b32.xlu0 %v2094, 64
        %v2147 = vpop.permute.xlu0 %2146
        %2148 = vrot.lane.b32.xlu0 %v2095, 64
        %v2149 = vpop.permute.xlu0 %2148
        %2150 = vrot.lane.b32.xlu0 %v2096, 64
        %v2151 = vpop.permute.xlu0 %2150
        %2152 = vrot.lane.b32.xlu0 %v2097, 64
        %v2153 = vpop.permute.xlu0 %2152
        %2154 = vrot.lane.b32.xlu0 %v2098, 64
        %v2155 = vpop.permute.xlu0 %2154
        %2156 = vrot.lane.b32.xlu0 %v2099, 64
        %v2157 = vpop.permute.xlu0 %2156
        %2158 = vrot.lane.b32.xlu0 %v2100, 64
        %v2159 = vpop.permute.xlu0 %2158
        %2160 = vrot.lane.b32.xlu0 %v2101, 64
        %v2161 = vpop.permute.xlu0 %2160
        %2162 = vrot.lane.b32.xlu0 %v2102, 64
        %v2163 = vpop.permute.xlu0 %2162
        %2164 = vrot.lane.b32.xlu0 %v2103, 64
        %v2165 = vpop.permute.xlu0 %2164
        %2166 = vrot.lane.b32.xlu0 %v2104, 64
        %v2167 = vpop.permute.xlu0 %2166
        %2168 = vrot.lane.b32.xlu0 %v2105, 64
        %v2169 = vpop.permute.xlu0 %2168
        %2170 = vrot.lane.b32.xlu0 %v2106, 64
        %v2171 = vpop.permute.xlu0 %2170
        %v2172 = vsel %vm561, %v2141, 0
        %v2174 = vsel %vm561, %v2143, 0
        %v2176 = vsel %vm561, %v2145, 0
        %v2178 = vsel %vm561, %v2147, 0
        %v2180 = vsel %vm561, %v2149, 0
        %v2182 = vsel %vm561, %v2151, 0
        %v2184 = vsel %vm561, %v2153, 0
        %v2186 = vsel %vm561, %v2155, 0
        %v2188 = vsel %vm561, %v2157, 0
        %v2190 = vsel %vm561, %v2159, 0
        %v2192 = vsel %vm561, %v2161, 0
        %v2194 = vsel %vm561, %v2163, 0
        %v2196 = vsel %vm561, %v2165, 0
        %v2198 = vsel %vm561, %v2167, 0
        %v2200 = vsel %vm561, %v2169, 0
        %v2202 = vsel %vm561, %v2171, 0
        %2204 = vmatprep.subr.mxu0 0.0
        %2205 = vmatpush1.msra.mxu0 0.0
        %2206 = vmatprep.subr.mxu0 0.0
        %2207 = vmatpush1.msra.mxu0 0.0
        %2208 = vmatprep.subr.mxu0 0.0
        %2209 = vmatpush1.msra.mxu0 0.0
        %2210 = vmatprep.subr.mxu0 0.0
        %2211 = vmatpush1.msra.mxu0 0.0
        %2212 = vmatprep.subr.mxu0 0.0
        %2213 = vmatpush1.msra.mxu0 0.0
        %2214 = vmatprep.subr.mxu0 0.0
        %2215 = vmatpush1.msra.mxu0 0.0
        %2216 = vmatprep.subr.mxu0 0.0
        %2217 = vmatpush1.msra.mxu0 0.0
        %2218 = vmatprep.subr.mxu0 0.0
        %2219 = vmatpush1.msra.mxu0 0.0
        %2220 = vmatprep.subr.mxu0 0.0
        %2221 = vmatpush1.msra.mxu0 0.0
        %2222 = vmatprep.subr.mxu0 0.0
        %2223 = vmatpush1.msra.mxu0 0.0
        %2224 = vmatprep.subr.mxu0 0.0
        %2225 = vmatpush1.msra.mxu0 0.0
        %2226 = vmatprep.subr.mxu0 0.0
        %2227 = vmatpush1.msra.mxu0 0.0
        %2228 = vmatprep.subr.mxu0 0.0
        %2229 = vmatpush1.msra.mxu0 %v2119
        %2230 = vmatprep.subr.mxu0 0.0
        %2231 = vmatpush1.msra.mxu0 %v2118
        %2232 = vmatprep.subr.mxu0 0.0
        %2233 = vmatpush1.msra.mxu0 %v2117
        %2234 = vmatprep.subr.mxu0 0.0
        %2235 = vmatpush1.msra.mxu0 %v2116
        %2236 = vmatprep.subr.mxu0 0.0
        %2237 = vmatpush2.msra.mxu0 0.0
        %2238 = vmatprep.subr.mxu0 0.0
        %2239 = vmatpush2.msra.mxu0 0.0
        %2240 = vmatprep.subr.mxu0 0.0
        %2241 = vmatpush2.msra.mxu0 0.0
        %2242 = vmatprep.subr.mxu0 0.0
        %2243 = vmatpush2.msra.mxu0 0.0
        %2244 = vmatprep.subr.mxu0 0.0
        %2245 = vmatpush2.msra.mxu0 0.0
        %2246 = vmatprep.subr.mxu0 0.0
        %2247 = vmatpush2.msra.mxu0 0.0
        %2248 = vmatprep.subr.mxu0 0.0
        %2249 = vmatpush2.msra.mxu0 0.0
        %2250 = vmatprep.subr.mxu0 0.0
        %2251 = vmatpush2.msra.mxu0 0.0
        %2252 = vmatprep.subr.mxu0 0.0
        %2253 = vmatpush2.msra.mxu0 0.0
        %2254 = vmatprep.subr.mxu0 0.0
        %2255 = vmatpush2.msra.mxu0 0.0
        %2256 = vmatprep.subr.mxu0 0.0
        %2257 = vmatpush2.msra.mxu0 0.0
        %2258 = vmatprep.subr.mxu0 0.0
        %2259 = vmatpush2.msra.mxu0 0.0
        %2260 = vmatprep.subr.mxu0 0.0
        %2261 = vmatpush2.msra.mxu0 0.0
        %2262 = vmatprep.subr.mxu0 0.0
        %2263 = vmatpush2.msra.mxu0 0.0
        %2264 = vmatprep.subr.mxu0 0.0
        %2265 = vmatpush2.msra.mxu0 0.0
        %2266 = vmatprep.subr.mxu0 0.0
        %2267 = vmatpush2.msra.mxu0 0.0
        %2268 = vmatprep.mubr.f32.mxu0 0.0
        %2269 = vmatmul.mubr.f32.gmra.mxu0 %v2172
        %v2270 = vpop.f32.mrf.mxu0
        %v2271 = vadd.f32 %v2123, %v2270
        %v2272 = vpop.f32.mrf.mxu0
        %2273 = vmatprep.mubr.f32.mxu0 0.0
        %2274 = vmatmul.mubr.f32.gmra.mxu0 %v2174
        %v2275 = vpop.f32.mrf.mxu0
        %v2276 = vadd.f32 %v2123, %v2275
        %v2277 = vpop.f32.mrf.mxu0
        %2278 = vmatprep.mubr.f32.mxu0 0.0
        %2279 = vmatmul.mubr.f32.gmra.mxu0 %v2176
        %v2280 = vpop.f32.mrf.mxu0
        %v2281 = vadd.f32 %v2123, %v2280
        %v2282 = vpop.f32.mrf.mxu0
        %2283 = vmatprep.mubr.f32.mxu0 0.0
        %2284 = vmatmul.mubr.f32.gmra.mxu0 %v2178
        %v2285 = vpop.f32.mrf.mxu0
        %v2286 = vadd.f32 %v2123, %v2285
        %v2287 = vpop.f32.mrf.mxu0
        %2288 = vmatprep.mubr.f32.mxu0 0.0
        %2289 = vmatmul.mubr.f32.gmra.mxu0 %v2180
        %v2290 = vpop.f32.mrf.mxu0
        %v2291 = vadd.f32 %v2123, %v2290
        %v2292 = vpop.f32.mrf.mxu0
        %2293 = vmatprep.mubr.f32.mxu0 0.0
        %2294 = vmatmul.mubr.f32.gmra.mxu0 %v2182
        %v2295 = vpop.f32.mrf.mxu0
        %v2296 = vadd.f32 %v2123, %v2295
        %v2297 = vpop.f32.mrf.mxu0
        %2298 = vmatprep.mubr.f32.mxu0 0.0
        %2299 = vmatmul.mubr.f32.gmra.mxu0 %v2184
        %v2300 = vpop.f32.mrf.mxu0
        %v2301 = vadd.f32 %v2123, %v2300
        %v2302 = vpop.f32.mrf.mxu0
        %2303 = vmatprep.mubr.f32.mxu0 0.0
        %2304 = vmatmul.mubr.f32.gmra.mxu0 %v2186
        %v2305 = vpop.f32.mrf.mxu0
        %v2306 = vadd.f32 %v2123, %v2305
        %v2307 = vpop.f32.mrf.mxu0
        %2308 = vmatprep.mubr.f32.mxu0 0.0
        %2309 = vmatmul.mubr.f32.gmra.mxu0 %v2188
        %v2310 = vpop.f32.mrf.mxu0
        %v2311 = vadd.f32 %v2123, %v2310
        %v2312 = vpop.f32.mrf.mxu0
        %2313 = vmatprep.mubr.f32.mxu0 0.0
        %2314 = vmatmul.mubr.f32.gmra.mxu0 %v2190
        %v2315 = vpop.f32.mrf.mxu0
        %v2316 = vadd.f32 %v2123, %v2315
        %v2317 = vpop.f32.mrf.mxu0
        %2318 = vmatprep.mubr.f32.mxu0 0.0
        %2319 = vmatmul.mubr.f32.gmra.mxu0 %v2192
        %v2320 = vpop.f32.mrf.mxu0
        %v2321 = vadd.f32 %v2123, %v2320
        %v2322 = vpop.f32.mrf.mxu0
        %2323 = vmatprep.mubr.f32.mxu0 0.0
        %2324 = vmatmul.mubr.f32.gmra.mxu0 %v2194
        %v2325 = vpop.f32.mrf.mxu0
        %v2326 = vadd.f32 %v2123, %v2325
        %v2327 = vpop.f32.mrf.mxu0
        %2328 = vmatprep.mubr.f32.mxu0 0.0
        %2329 = vmatmul.mubr.f32.gmra.mxu0 %v2196
        %v2330 = vpop.f32.mrf.mxu0
        %v2331 = vadd.f32 %v2123, %v2330
        %v2332 = vpop.f32.mrf.mxu0
        %2333 = vmatprep.mubr.f32.mxu0 0.0
        %2334 = vmatmul.mubr.f32.gmra.mxu0 %v2198
        %v2335 = vpop.f32.mrf.mxu0
        %v2336 = vadd.f32 %v2123, %v2335
        %v2337 = vpop.f32.mrf.mxu0
        %2338 = vmatprep.mubr.f32.mxu0 0.0
        %2339 = vmatmul.mubr.f32.gmra.mxu0 %v2200
        %v2340 = vpop.f32.mrf.mxu0
        %v2341 = vadd.f32 %v2123, %v2340
        %v2342 = vpop.f32.mrf.mxu0
        %2343 = vmatprep.mubr.f32.mxu0 0.0
        %2344 = vmatmul.mubr.f32.gmra.mxu0 %v2202
        %v2345 = vpop.f32.mrf.mxu0
        %v2346 = vadd.f32 %v2123, %v2345
        %v2347 = vpop.f32.mrf.mxu0
        %2348 = vdwg.mxu0
        %2349 = vadd.xlane.f32.xlu0 %v2271
        %v2350 = vpop.xlane.xlu0 %2349
        %2351 = vadd.xlane.f32.xlu0 %v2276
        %v2352 = vpop.xlane.xlu0 %2351
        %2353 = vadd.xlane.f32.xlu0 %v2281
        %v2354 = vpop.xlane.xlu0 %2353
        %2355 = vadd.xlane.f32.xlu0 %v2286
        %v2356 = vpop.xlane.xlu0 %2355
        %2357 = vadd.xlane.f32.xlu0 %v2291
        %v2358 = vpop.xlane.xlu0 %2357
        %2359 = vadd.xlane.f32.xlu0 %v2296
        %v2360 = vpop.xlane.xlu0 %2359
        %2361 = vadd.xlane.f32.xlu0 %v2301
        %v2362 = vpop.xlane.xlu0 %2361
        %2363 = vadd.xlane.f32.xlu0 %v2306
        %v2364 = vpop.xlane.xlu0 %2363
        %2365 = vadd.xlane.f32.xlu0 %v2311
        %v2366 = vpop.xlane.xlu0 %2365
        %2367 = vadd.xlane.f32.xlu0 %v2316
        %v2368 = vpop.xlane.xlu0 %2367
        %2369 = vadd.xlane.f32.xlu0 %v2321
        %v2370 = vpop.xlane.xlu0 %2369
        %2371 = vadd.xlane.f32.xlu0 %v2326
        %v2372 = vpop.xlane.xlu0 %2371
        %2373 = vadd.xlane.f32.xlu0 %v2331
        %v2374 = vpop.xlane.xlu0 %2373
        %2375 = vadd.xlane.f32.xlu0 %v2336
        %v2376 = vpop.xlane.xlu0 %2375
        %2377 = vadd.xlane.f32.xlu0 %v2341
        %v2378 = vpop.xlane.xlu0 %2377
        %2379 = vadd.xlane.f32.xlu0 %v2346
        %v2380 = vpop.xlane.xlu0 %2379
        %v2381 = vmul.f32 %v2350, %v1114
        %v2382 = vmul.f32 %v2352, %v1114
        %v2383 = vmul.f32 %v2354, %v1114
        %v2384 = vmul.f32 %v2356, %v1114
        %v2385 = vmul.f32 %v2358, %v1114
        %v2386 = vmul.f32 %v2360, %v1114
        %v2387 = vmul.f32 %v2362, %v1114
        %v2388 = vmul.f32 %v2364, %v1114
        %v2389 = vmul.f32 %v2366, %v1114
        %v2390 = vmul.f32 %v2368, %v1114
        %v2391 = vmul.f32 %v2370, %v1114
        %v2392 = vmul.f32 %v2372, %v1114
        %v2393 = vmul.f32 %v2374, %v1114
        %v2394 = vmul.f32 %v2376, %v1114
        %v2395 = vmul.f32 %v2378, %v1114
        %v2396 = vmul.f32 %v2380, %v1114
        %v2397 = vsub.f32 %v2271, %v2381
        %v2398 = vsub.f32 %v2276, %v2382
        %v2399 = vsub.f32 %v2281, %v2383
        %v2400 = vsub.f32 %v2286, %v2384
        %v2401 = vsub.f32 %v2291, %v2385
        %v2402 = vsub.f32 %v2296, %v2386
        %v2403 = vsub.f32 %v2301, %v2387
        %v2404 = vsub.f32 %v2306, %v2388
        %v2405 = vsub.f32 %v2311, %v2389
        %v2406 = vsub.f32 %v2316, %v2390
        %v2407 = vsub.f32 %v2321, %v2391
        %v2408 = vsub.f32 %v2326, %v2392
        %v2409 = vsub.f32 %v2331, %v2393
        %v2410 = vsub.f32 %v2336, %v2394
        %v2411 = vsub.f32 %v2341, %v2395
        %v2412 = vsub.f32 %v2346, %v2396
        %v2413 = vmul.f32 %v2397, %v2397
        %v2414 = vmul.f32 %v2398, %v2398
        %v2415 = vmul.f32 %v2399, %v2399
        %v2416 = vmul.f32 %v2400, %v2400
        %v2417 = vmul.f32 %v2401, %v2401
        %v2418 = vmul.f32 %v2402, %v2402
        %v2419 = vmul.f32 %v2403, %v2403
        %v2420 = vmul.f32 %v2404, %v2404
        %v2421 = vmul.f32 %v2405, %v2405
        %v2422 = vmul.f32 %v2406, %v2406
        %v2423 = vmul.f32 %v2407, %v2407
        %v2424 = vmul.f32 %v2408, %v2408
        %v2425 = vmul.f32 %v2409, %v2409
        %v2426 = vmul.f32 %v2410, %v2410
        %v2427 = vmul.f32 %v2411, %v2411
        %v2428 = vmul.f32 %v2412, %v2412
        %2429 = vadd.xlane.f32.xlu0 %v2413
        %v2430 = vpop.xlane.xlu0 %2429
        %2431 = vadd.xlane.f32.xlu0 %v2414
        %v2432 = vpop.xlane.xlu0 %2431
        %2433 = vadd.xlane.f32.xlu0 %v2415
        %v2434 = vpop.xlane.xlu0 %2433
        %2435 = vadd.xlane.f32.xlu0 %v2416
        %v2436 = vpop.xlane.xlu0 %2435
        %2437 = vadd.xlane.f32.xlu0 %v2417
        %v2438 = vpop.xlane.xlu0 %2437
        %2439 = vadd.xlane.f32.xlu0 %v2418
        %v2440 = vpop.xlane.xlu0 %2439
        %2441 = vadd.xlane.f32.xlu0 %v2419
        %v2442 = vpop.xlane.xlu0 %2441
        %2443 = vadd.xlane.f32.xlu0 %v2420
        %v2444 = vpop.xlane.xlu0 %2443
        %2445 = vadd.xlane.f32.xlu0 %v2421
        %v2446 = vpop.xlane.xlu0 %2445
        %2447 = vadd.xlane.f32.xlu0 %v2422
        %v2448 = vpop.xlane.xlu0 %2447
        %2449 = vadd.xlane.f32.xlu0 %v2423
        %v2450 = vpop.xlane.xlu0 %2449
        %2451 = vadd.xlane.f32.xlu0 %v2424
        %v2452 = vpop.xlane.xlu0 %2451
        %2453 = vadd.xlane.f32.xlu0 %v2425
        %v2454 = vpop.xlane.xlu0 %2453
        %2455 = vadd.xlane.f32.xlu0 %v2426
        %v2456 = vpop.xlane.xlu0 %2455
        %2457 = vadd.xlane.f32.xlu0 %v2427
        %v2458 = vpop.xlane.xlu0 %2457
        %2459 = vadd.xlane.f32.xlu0 %v2428
        %v2460 = vpop.xlane.xlu0 %2459
        %v2461 = vmul.f32 %v2430, 0.007874016
        %v2462 = vmul.f32 %v2432, 0.007874016
        %v2463 = vmul.f32 %v2434, 0.007874016
        %v2464 = vmul.f32 %v2436, 0.007874016
        %v2465 = vmul.f32 %v2438, 0.007874016
        %v2466 = vmul.f32 %v2440, 0.007874016
        %v2467 = vmul.f32 %v2442, 0.007874016
        %v2468 = vmul.f32 %v2444, 0.007874016
        %v2469 = vmul.f32 %v2446, 0.007874016
        %v2470 = vmul.f32 %v2448, 0.007874016
        %v2471 = vmul.f32 %v2450, 0.007874016
        %v2472 = vmul.f32 %v2452, 0.007874016
        %v2473 = vmul.f32 %v2454, 0.007874016
        %v2474 = vmul.f32 %v2456, 0.007874016
        %v2475 = vmul.f32 %v2458, 0.007874016
        %v2476 = vmul.f32 %v2460, 0.007874016
        %v2477 = vadd.f32 %v2461, 1e-30
        %v2478 = vadd.f32 %v2462, 1e-30
        %v2479 = vadd.f32 %v2463, 1e-30
        %v2480 = vadd.f32 %v2464, 1e-30
        %v2481 = vadd.f32 %v2465, 1e-30
        %v2482 = vadd.f32 %v2466, 1e-30
        %v2483 = vadd.f32 %v2467, 1e-30
        %v2484 = vadd.f32 %v2468, 1e-30
        %v2485 = vadd.f32 %v2469, 1e-30
        %v2486 = vadd.f32 %v2470, 1e-30
        %v2487 = vadd.f32 %v2471, 1e-30
        %v2488 = vadd.f32 %v2472, 1e-30
        %v2489 = vadd.f32 %v2473, 1e-30
        %v2490 = vadd.f32 %v2474, 1e-30
        %v2491 = vadd.f32 %v2475, 1e-30
        %v2492 = vadd.f32 %v2476, 1e-30
        %v2493 = vrsqrt.pop %v2477
        %v2494 = vrsqrt.pop %v2478
        %v2495 = vrsqrt.pop %v2479
        %v2496 = vrsqrt.pop %v2480
        %v2497 = vrsqrt.pop %v2481
        %v2498 = vrsqrt.pop %v2482
        %v2499 = vrsqrt.pop %v2483
        %v2500 = vrsqrt.pop %v2484
        %v2501 = vrsqrt.pop %v2485
        %v2502 = vrsqrt.pop %v2486
        %v2503 = vrsqrt.pop %v2487
        %v2504 = vrsqrt.pop %v2488
        %v2505 = vrsqrt.pop %v2489
        %v2506 = vrsqrt.pop %v2490
        %v2507 = vrsqrt.pop %v2491
        %v2508 = vrsqrt.pop %v2492
        %v2509 = vmul.f32 %v2493, 1e-05
        %v2510 = vmul.f32 %v2494, 1e-05
        %v2511 = vmul.f32 %v2495, 1e-05
        %v2512 = vmul.f32 %v2496, 1e-05
        %v2513 = vmul.f32 %v2497, 1e-05
        %v2514 = vmul.f32 %v2498, 1e-05
        %v2515 = vmul.f32 %v2499, 1e-05
        %v2516 = vmul.f32 %v2500, 1e-05
        %v2517 = vmul.f32 %v2501, 1e-05
        %v2518 = vmul.f32 %v2502, 1e-05
        %v2519 = vmul.f32 %v2503, 1e-05
        %v2520 = vmul.f32 %v2504, 1e-05
        %v2521 = vmul.f32 %v2505, 1e-05
        %v2522 = vmul.f32 %v2506, 1e-05
        %v2523 = vmul.f32 %v2507, 1e-05
        %v2524 = vmul.f32 %v2508, 1e-05
        %v2525 = vsub.f32 1.0, %v2509
        %v2526 = vsub.f32 1.0, %v2510
        %v2527 = vsub.f32 1.0, %v2511
        %v2528 = vsub.f32 1.0, %v2512
        %v2529 = vsub.f32 1.0, %v2513
        %v2530 = vsub.f32 1.0, %v2514
        %v2531 = vsub.f32 1.0, %v2515
        %v2532 = vsub.f32 1.0, %v2516
        %v2533 = vsub.f32 1.0, %v2517
        %v2534 = vsub.f32 1.0, %v2518
        %v2535 = vsub.f32 1.0, %v2519
        %v2536 = vsub.f32 1.0, %v2520
        %v2537 = vsub.f32 1.0, %v2521
        %v2538 = vsub.f32 1.0, %v2522
        %v2539 = vsub.f32 1.0, %v2523
        %v2540 = vsub.f32 1.0, %v2524
        %v2541 = vmul.f32 %v2493, %v2525
        %v2542 = vmul.f32 %v2494, %v2526
        %v2543 = vmul.f32 %v2495, %v2527
        %v2544 = vmul.f32 %v2496, %v2528
        %v2545 = vmul.f32 %v2497, %v2529
        %v2546 = vmul.f32 %v2498, %v2530
        %v2547 = vmul.f32 %v2499, %v2531
        %v2548 = vmul.f32 %v2500, %v2532
        %v2549 = vmul.f32 %v2501, %v2533
        %v2550 = vmul.f32 %v2502, %v2534
        %v2551 = vmul.f32 %v2503, %v2535
        %v2552 = vmul.f32 %v2504, %v2536
        %v2553 = vmul.f32 %v2505, %v2537
        %v2554 = vmul.f32 %v2506, %v2538
        %v2555 = vmul.f32 %v2507, %v2539
        %v2556 = vmul.f32 %v2508, %v2540
        %v2557 = vmul.f32 %v2397, %v2541
        %v2558 = vmul.f32 %v2398, %v2542
        %v2559 = vmul.f32 %v2399, %v2543
        %v2560 = vmul.f32 %v2400, %v2544
        %v2561 = vmul.f32 %v2401, %v2545
        %v2562 = vmul.f32 %v2402, %v2546
        %v2563 = vmul.f32 %v2403, %v2547
        %v2564 = vmul.f32 %v2404, %v2548
        %v2565 = vmul.f32 %v2405, %v2549
        %v2566 = vmul.f32 %v2406, %v2550
        %v2567 = vmul.f32 %v2407, %v2551
        %v2568 = vmul.f32 %v2408, %v2552
        %v2569 = vmul.f32 %v2409, %v2553
        %v2570 = vmul.f32 %v2410, %v2554
        %v2571 = vmul.f32 %v2411, %v2555
        %v2572 = vmul.f32 %v2412, %v2556
        %v2573 = vlaneseq
        %v2574 = vshrl.u32 %v2573, 7
        %v2575 = vsub.s32 0, %v2574
        %v2576 = vrot.slane %v2109, %v2575
        %v2577 = vmul.f32 %v2557, %v2576
        %v2578 = vmul.f32 %v2558, %v2576
        %v2579 = vmul.f32 %v2559, %v2576
        %v2580 = vmul.f32 %v2560, %v2576
        %v2581 = vmul.f32 %v2561, %v2576
        %v2582 = vmul.f32 %v2562, %v2576
        %v2583 = vmul.f32 %v2563, %v2576
        %v2584 = vmul.f32 %v2564, %v2576
        %v2585 = vmul.f32 %v2565, %v2576
        %v2586 = vmul.f32 %v2566, %v2576
        %v2587 = vmul.f32 %v2567, %v2576
        %v2588 = vmul.f32 %v2568, %v2576
        %v2589 = vmul.f32 %v2569, %v2576
        %v2590 = vmul.f32 %v2570, %v2576
        %v2591 = vmul.f32 %v2571, %v2576
        %v2592 = vmul.f32 %v2572, %v2576
        %v2593 = vlaneseq
        %v2594 = vshrl.u32 %v2593, 7
        %v2595 = vsub.s32 0, %v2594
        %v2596 = vrot.slane %v2110, %v2595
        %v2597 = vadd.f32 %v2577, %v2596
        %v2598 = vadd.f32 %v2578, %v2596
        %v2599 = vadd.f32 %v2579, %v2596
        %v2600 = vadd.f32 %v2580, %v2596
        %v2601 = vadd.f32 %v2581, %v2596
        %v2602 = vadd.f32 %v2582, %v2596
        %v2603 = vadd.f32 %v2583, %v2596
        %v2604 = vadd.f32 %v2584, %v2596
        %v2605 = vadd.f32 %v2585, %v2596
        %v2606 = vadd.f32 %v2586, %v2596
        %v2607 = vadd.f32 %v2587, %v2596
        %v2608 = vadd.f32 %v2588, %v2596
        %v2609 = vadd.f32 %v2589, %v2596
        %v2610 = vadd.f32 %v2590, %v2596
        %v2611 = vadd.f32 %v2591, %v2596
        %v2612 = vadd.f32 %v2592, %v2596
        %v2613 = vtanh.pop %v2597
        %v2614 = vtanh.pop %v2598
        %v2615 = vtanh.pop %v2599
        %v2616 = vtanh.pop %v2600
        %v2617 = vtanh.pop %v2601
        %v2618 = vtanh.pop %v2602
        %v2619 = vtanh.pop %v2603
        %v2620 = vtanh.pop %v2604
        %v2621 = vtanh.pop %v2605
        %v2622 = vtanh.pop %v2606
        %v2623 = vtanh.pop %v2607
        %v2624 = vtanh.pop %v2608
        %v2625 = vtanh.pop %v2609
        %v2626 = vtanh.pop %v2610
        %v2627 = vtanh.pop %v2611
        %v2628 = vtanh.pop %v2612
        %v2629 = vmul.f32 %v2613, 0.5
        %v2630 = vmul.f32 %v2614, 0.5
        %v2631 = vmul.f32 %v2615, 0.5
        %v2632 = vmul.f32 %v2616, 0.5
        %v2633 = vmul.f32 %v2617, 0.5
        %v2634 = vmul.f32 %v2618, 0.5
        %v2635 = vmul.f32 %v2619, 0.5
        %v2636 = vmul.f32 %v2620, 0.5
        %v2637 = vmul.f32 %v2621, 0.5
        %v2638 = vmul.f32 %v2622, 0.5
        %v2639 = vmul.f32 %v2623, 0.5
        %v2640 = vmul.f32 %v2624, 0.5
        %v2641 = vmul.f32 %v2625, 0.5
        %v2642 = vmul.f32 %v2626, 0.5
        %v2643 = vmul.f32 %v2627, 0.5
        %v2644 = vmul.f32 %v2628, 0.5
        %v2645 = vadd.f32 %v2629, 0.5
        %v2646 = vadd.f32 %v2630, 0.5
        %v2647 = vadd.f32 %v2631, 0.5
        %v2648 = vadd.f32 %v2632, 0.5
        %v2649 = vadd.f32 %v2633, 0.5
        %v2650 = vadd.f32 %v2634, 0.5
        %v2651 = vadd.f32 %v2635, 0.5
        %v2652 = vadd.f32 %v2636, 0.5
        %v2653 = vadd.f32 %v2637, 0.5
        %v2654 = vadd.f32 %v2638, 0.5
        %v2655 = vadd.f32 %v2639, 0.5
        %v2656 = vadd.f32 %v2640, 0.5
        %v2657 = vadd.f32 %v2641, 0.5
        %v2658 = vadd.f32 %v2642, 0.5
        %v2659 = vadd.f32 %v2643, 0.5
        %v2660 = vadd.f32 %v2644, 0.5
        %v2661 = vlaneseq
        %v2662 = vshrl.u32 %v2661, 7
        %v2663 = vsub.s32 0, %v2662
        %v2664 = vrot.slane %v2114, %v2663
        %2666 = vrot.lane.b32.xlu0 %v2664, 32
        %v2667 = vpop.permute.xlu0 %2666
        %v2669 = vmul.f32 %v2645, %v2667
        %v2670 = vmul.f32 %v2646, %v2667
        %v2671 = vmul.f32 %v2647, %v2667
        %v2672 = vmul.f32 %v2648, %v2667
        %v2673 = vmul.f32 %v2649, %v2667
        %v2674 = vmul.f32 %v2650, %v2667
        %v2675 = vmul.f32 %v2651, %v2667
        %v2676 = vmul.f32 %v2652, %v2667
        %v2677 = vmul.f32 %v2653, %v2667
        %v2678 = vmul.f32 %v2654, %v2667
        %v2679 = vmul.f32 %v2655, %v2667
        %v2680 = vmul.f32 %v2656, %v2667
        %v2681 = vmul.f32 %v2657, %v2667
        %v2682 = vmul.f32 %v2658, %v2667
        %v2683 = vmul.f32 %v2659, %v2667
        %v2684 = vmul.f32 %v2660, %v2667
        %2701 = vrot.lane.b32.xlu0 %v2613, 32
        %v2702 = vpop.permute.xlu0 %2701
        %2703 = vrot.lane.b32.xlu0 %v2614, 32
        %v2704 = vpop.permute.xlu0 %2703
        %2705 = vrot.lane.b32.xlu0 %v2615, 32
        %v2706 = vpop.permute.xlu0 %2705
        %2707 = vrot.lane.b32.xlu0 %v2616, 32
        %v2708 = vpop.permute.xlu0 %2707
        %2709 = vrot.lane.b32.xlu0 %v2617, 32
        %v2710 = vpop.permute.xlu0 %2709
        %2711 = vrot.lane.b32.xlu0 %v2618, 32
        %v2712 = vpop.permute.xlu0 %2711
        %2713 = vrot.lane.b32.xlu0 %v2619, 32
        %v2714 = vpop.permute.xlu0 %2713
        %2715 = vrot.lane.b32.xlu0 %v2620, 32
        %v2716 = vpop.permute.xlu0 %2715
        %2717 = vrot.lane.b32.xlu0 %v2621, 32
        %v2718 = vpop.permute.xlu0 %2717
        %2719 = vrot.lane.b32.xlu0 %v2622, 32
        %v2720 = vpop.permute.xlu0 %2719
        %2721 = vrot.lane.b32.xlu0 %v2623, 32
        %v2722 = vpop.permute.xlu0 %2721
        %2723 = vrot.lane.b32.xlu0 %v2624, 32
        %v2724 = vpop.permute.xlu0 %2723
        %2725 = vrot.lane.b32.xlu0 %v2625, 32
        %v2726 = vpop.permute.xlu0 %2725
        %2727 = vrot.lane.b32.xlu0 %v2626, 32
        %v2728 = vpop.permute.xlu0 %2727
        %2729 = vrot.lane.b32.xlu0 %v2627, 32
        %v2730 = vpop.permute.xlu0 %2729
        %2731 = vrot.lane.b32.xlu0 %v2628, 32
        %v2732 = vpop.permute.xlu0 %2731
        %v2749 = vmul.f32 %v2645, %v2702
        %v2750 = vmul.f32 %v2646, %v2704
        %v2751 = vmul.f32 %v2647, %v2706
        %v2752 = vmul.f32 %v2648, %v2708
        %v2753 = vmul.f32 %v2649, %v2710
        %v2754 = vmul.f32 %v2650, %v2712
        %v2755 = vmul.f32 %v2651, %v2714
        %v2756 = vmul.f32 %v2652, %v2716
        %v2757 = vmul.f32 %v2653, %v2718
        %v2758 = vmul.f32 %v2654, %v2720
        %v2759 = vmul.f32 %v2655, %v2722
        %v2760 = vmul.f32 %v2656, %v2724
        %v2761 = vmul.f32 %v2657, %v2726
        %v2762 = vmul.f32 %v2658, %v2728
        %v2763 = vmul.f32 %v2659, %v2730
        %v2764 = vmul.f32 %v2660, %v2732
        %2781 = vrot.lane.b32.xlu0 %v2749, 32
        %v2782 = vpop.permute.xlu0 %2781
        %2783 = vrot.lane.b32.xlu0 %v2750, 32
        %v2784 = vpop.permute.xlu0 %2783
        %2785 = vrot.lane.b32.xlu0 %v2751, 32
        %v2786 = vpop.permute.xlu0 %2785
        %2787 = vrot.lane.b32.xlu0 %v2752, 32
        %v2788 = vpop.permute.xlu0 %2787
        %2789 = vrot.lane.b32.xlu0 %v2753, 32
        %v2790 = vpop.permute.xlu0 %2789
        %2791 = vrot.lane.b32.xlu0 %v2754, 32
        %v2792 = vpop.permute.xlu0 %2791
        %2793 = vrot.lane.b32.xlu0 %v2755, 32
        %v2794 = vpop.permute.xlu0 %2793
        %2795 = vrot.lane.b32.xlu0 %v2756, 32
        %v2796 = vpop.permute.xlu0 %2795
        %2797 = vrot.lane.b32.xlu0 %v2757, 32
        %v2798 = vpop.permute.xlu0 %2797
        %2799 = vrot.lane.b32.xlu0 %v2758, 32
        %v2800 = vpop.permute.xlu0 %2799
        %2801 = vrot.lane.b32.xlu0 %v2759, 32
        %v2802 = vpop.permute.xlu0 %2801
        %2803 = vrot.lane.b32.xlu0 %v2760, 32
        %v2804 = vpop.permute.xlu0 %2803
        %2805 = vrot.lane.b32.xlu0 %v2761, 32
        %v2806 = vpop.permute.xlu0 %2805
        %2807 = vrot.lane.b32.xlu0 %v2762, 32
        %v2808 = vpop.permute.xlu0 %2807
        %2809 = vrot.lane.b32.xlu0 %v2763, 32
        %v2810 = vpop.permute.xlu0 %2809
        %2811 = vrot.lane.b32.xlu0 %v2764, 32
        %v2812 = vpop.permute.xlu0 %2811
        %v2829 = vadd.f32 %v2669, %v2782
        %v2830 = vadd.f32 %v2670, %v2784
        %v2831 = vadd.f32 %v2671, %v2786
        %v2832 = vadd.f32 %v2672, %v2788
        %v2833 = vadd.f32 %v2673, %v2790
        %v2834 = vadd.f32 %v2674, %v2792
        %v2835 = vadd.f32 %v2675, %v2794
        %v2836 = vadd.f32 %v2676, %v2796
        %v2837 = vadd.f32 %v2677, %v2798
        %v2838 = vadd.f32 %v2678, %v2800
        %v2839 = vadd.f32 %v2679, %v2802
        %v2840 = vadd.f32 %v2680, %v2804
        %v2841 = vadd.f32 %v2681, %v2806
        %v2842 = vadd.f32 %v2682, %v2808
        %v2843 = vadd.f32 %v2683, %v2810
        %v2844 = vadd.f32 %v2684, %v2812
        %2861 = vrot.lane.b32.xlu0 %v2829, 96
        %v2862 = vpop.permute.xlu0 %2861
        %2863 = vrot.lane.b32.xlu0 %v2830, 96
        %v2864 = vpop.permute.xlu0 %2863
        %2865 = vrot.lane.b32.xlu0 %v2831, 96
        %v2866 = vpop.permute.xlu0 %2865
        %2867 = vrot.lane.b32.xlu0 %v2832, 96
        %v2868 = vpop.permute.xlu0 %2867
        %2869 = vrot.lane.b32.xlu0 %v2833, 96
        %v2870 = vpop.permute.xlu0 %2869
        %2871 = vrot.lane.b32.xlu0 %v2834, 96
        %v2872 = vpop.permute.xlu0 %2871
        %2873 = vrot.lane.b32.xlu0 %v2835, 96
        %v2874 = vpop.permute.xlu0 %2873
        %2875 = vrot.lane.b32.xlu0 %v2836, 96
        %v2876 = vpop.permute.xlu0 %2875
        %2877 = vrot.lane.b32.xlu0 %v2837, 96
        %v2878 = vpop.permute.xlu0 %2877
        %2879 = vrot.lane.b32.xlu0 %v2838, 96
        %v2880 = vpop.permute.xlu0 %2879
        %2881 = vrot.lane.b32.xlu0 %v2839, 96
        %v2882 = vpop.permute.xlu0 %2881
        %2883 = vrot.lane.b32.xlu0 %v2840, 96
        %v2884 = vpop.permute.xlu0 %2883
        %2885 = vrot.lane.b32.xlu0 %v2841, 96
        %v2886 = vpop.permute.xlu0 %2885
        %2887 = vrot.lane.b32.xlu0 %v2842, 96
        %v2888 = vpop.permute.xlu0 %2887
        %2889 = vrot.lane.b32.xlu0 %v2843, 96
        %v2890 = vpop.permute.xlu0 %2889
        %2891 = vrot.lane.b32.xlu0 %v2844, 96
        %v2892 = vpop.permute.xlu0 %2891
        %v2909 = vsel %vm561, %v2862, 0.0
        %2910 = vadd.xlane.f32.xlu0 %v2909
        %v2911 = vpop.xlane.xlu0 %2910
        %v2912 = vsel %vm561, %v2864, 0.0
        %2913 = vadd.xlane.f32.xlu0 %v2912
        %v2914 = vpop.xlane.xlu0 %2913
        %v2915 = vsel %vm561, %v2866, 0.0
        %2916 = vadd.xlane.f32.xlu0 %v2915
        %v2917 = vpop.xlane.xlu0 %2916
        %v2918 = vsel %vm561, %v2868, 0.0
        %2919 = vadd.xlane.f32.xlu0 %v2918
        %v2920 = vpop.xlane.xlu0 %2919
        %v2921 = vsel %vm561, %v2870, 0.0
        %2922 = vadd.xlane.f32.xlu0 %v2921
        %v2923 = vpop.xlane.xlu0 %2922
        %v2924 = vsel %vm561, %v2872, 0.0
        %2925 = vadd.xlane.f32.xlu0 %v2924
        %v2926 = vpop.xlane.xlu0 %2925
        %v2927 = vsel %vm561, %v2874, 0.0
        %2928 = vadd.xlane.f32.xlu0 %v2927
        %v2929 = vpop.xlane.xlu0 %2928
        %v2930 = vsel %vm561, %v2876, 0.0
        %2931 = vadd.xlane.f32.xlu0 %v2930
        %v2932 = vpop.xlane.xlu0 %2931
        %v2933 = vsel %vm561, %v2878, 0.0
        %2934 = vadd.xlane.f32.xlu0 %v2933
        %v2935 = vpop.xlane.xlu0 %2934
        %v2936 = vsel %vm561, %v2880, 0.0
        %2937 = vadd.xlane.f32.xlu0 %v2936
        %v2938 = vpop.xlane.xlu0 %2937
        %v2939 = vsel %vm561, %v2882, 0.0
        %2940 = vadd.xlane.f32.xlu0 %v2939
        %v2941 = vpop.xlane.xlu0 %2940
        %v2942 = vsel %vm561, %v2884, 0.0
        %2943 = vadd.xlane.f32.xlu0 %v2942
        %v2944 = vpop.xlane.xlu0 %2943
        %v2945 = vsel %vm561, %v2886, 0.0
        %2946 = vadd.xlane.f32.xlu0 %v2945
        %v2947 = vpop.xlane.xlu0 %2946
        %v2948 = vsel %vm561, %v2888, 0.0
        %2949 = vadd.xlane.f32.xlu0 %v2948
        %v2950 = vpop.xlane.xlu0 %2949
        %v2951 = vsel %vm561, %v2890, 0.0
        %2952 = vadd.xlane.f32.xlu0 %v2951
        %v2953 = vpop.xlane.xlu0 %2952
        %v2954 = vsel %vm561, %v2892, 0.0
        %2955 = vadd.xlane.f32.xlu0 %v2954
        %v2956 = vpop.xlane.xlu0 %2955
        %v2957 = vmul.f32 %v2911, %v610
        %v2958 = vmul.f32 %v2914, %v610
        %v2959 = vmul.f32 %v2917, %v610
        %v2960 = vmul.f32 %v2920, %v610
        %v2961 = vmul.f32 %v2923, %v610
        %v2962 = vmul.f32 %v2926, %v610
        %v2963 = vmul.f32 %v2929, %v610
        %v2964 = vmul.f32 %v2932, %v610
        %v2965 = vmul.f32 %v2935, %v610
        %v2966 = vmul.f32 %v2938, %v610
        %v2967 = vmul.f32 %v2941, %v610
        %v2968 = vmul.f32 %v2944, %v610
        %v2969 = vmul.f32 %v2947, %v610
        %v2970 = vmul.f32 %v2950, %v610
        %v2971 = vmul.f32 %v2953, %v610
        %v2972 = vmul.f32 %v2956, %v610
        %v2973 = vsub.f32 %v2829, %v2957
        %v2974 = vsub.f32 %v2830, %v2958
        %v2975 = vsub.f32 %v2831, %v2959
        %v2976 = vsub.f32 %v2832, %v2960
        %v2977 = vsub.f32 %v2833, %v2961
        %v2978 = vsub.f32 %v2834, %v2962
        %v2979 = vsub.f32 %v2835, %v2963
        %v2980 = vsub.f32 %v2836, %v2964
        %v2981 = vsub.f32 %v2837, %v2965
        %v2982 = vsub.f32 %v2838, %v2966
        %v2983 = vsub.f32 %v2839, %v2967
        %v2984 = vsub.f32 %v2840, %v2968
        %v2985 = vsub.f32 %v2841, %v2969
        %v2986 = vsub.f32 %v2842, %v2970
        %v2987 = vsub.f32 %v2843, %v2971
        %v2988 = vsub.f32 %v2844, %v2972
        %v2989 = vmul.f32 %v2973, %v2973
        %v2990 = vmul.f32 %v2974, %v2974
        %v2991 = vmul.f32 %v2975, %v2975
        %v2992 = vmul.f32 %v2976, %v2976
        %v2993 = vmul.f32 %v2977, %v2977
        %v2994 = vmul.f32 %v2978, %v2978
        %v2995 = vmul.f32 %v2979, %v2979
        %v2996 = vmul.f32 %v2980, %v2980
        %v2997 = vmul.f32 %v2981, %v2981
        %v2998 = vmul.f32 %v2982, %v2982
        %v2999 = vmul.f32 %v2983, %v2983
        %v3000 = vmul.f32 %v2984, %v2984
        %v3001 = vmul.f32 %v2985, %v2985
        %v3002 = vmul.f32 %v2986, %v2986
        %v3003 = vmul.f32 %v2987, %v2987
        %v3004 = vmul.f32 %v2988, %v2988
        %3021 = vrot.lane.b32.xlu0 %v2989, 96
        %v3022 = vpop.permute.xlu0 %3021
        %3023 = vrot.lane.b32.xlu0 %v2990, 96
        %v3024 = vpop.permute.xlu0 %3023
        %3025 = vrot.lane.b32.xlu0 %v2991, 96
        %v3026 = vpop.permute.xlu0 %3025
        %3027 = vrot.lane.b32.xlu0 %v2992, 96
        %v3028 = vpop.permute.xlu0 %3027
        %3029 = vrot.lane.b32.xlu0 %v2993, 96
        %v3030 = vpop.permute.xlu0 %3029
        %3031 = vrot.lane.b32.xlu0 %v2994, 96
        %v3032 = vpop.permute.xlu0 %3031
        %3033 = vrot.lane.b32.xlu0 %v2995, 96
        %v3034 = vpop.permute.xlu0 %3033
        %3035 = vrot.lane.b32.xlu0 %v2996, 96
        %v3036 = vpop.permute.xlu0 %3035
        %3037 = vrot.lane.b32.xlu0 %v2997, 96
        %v3038 = vpop.permute.xlu0 %3037
        %3039 = vrot.lane.b32.xlu0 %v2998, 96
        %v3040 = vpop.permute.xlu0 %3039
        %3041 = vrot.lane.b32.xlu0 %v2999, 96
        %v3042 = vpop.permute.xlu0 %3041
        %3043 = vrot.lane.b32.xlu0 %v3000, 96
        %v3044 = vpop.permute.xlu0 %3043
        %3045 = vrot.lane.b32.xlu0 %v3001, 96
        %v3046 = vpop.permute.xlu0 %3045
        %3047 = vrot.lane.b32.xlu0 %v3002, 96
        %v3048 = vpop.permute.xlu0 %3047
        %3049 = vrot.lane.b32.xlu0 %v3003, 96
        %v3050 = vpop.permute.xlu0 %3049
        %3051 = vrot.lane.b32.xlu0 %v3004, 96
        %v3052 = vpop.permute.xlu0 %3051
        %v3069 = vsel %vm561, %v3022, 0.0
        %3070 = vadd.xlane.f32.xlu0 %v3069
        %v3071 = vpop.xlane.xlu0 %3070
        %v3072 = vsel %vm561, %v3024, 0.0
        %3073 = vadd.xlane.f32.xlu0 %v3072
        %v3074 = vpop.xlane.xlu0 %3073
        %v3075 = vsel %vm561, %v3026, 0.0
        %3076 = vadd.xlane.f32.xlu0 %v3075
        %v3077 = vpop.xlane.xlu0 %3076
        %v3078 = vsel %vm561, %v3028, 0.0
        %3079 = vadd.xlane.f32.xlu0 %v3078
        %v3080 = vpop.xlane.xlu0 %3079
        %v3081 = vsel %vm561, %v3030, 0.0
        %3082 = vadd.xlane.f32.xlu0 %v3081
        %v3083 = vpop.xlane.xlu0 %3082
        %v3084 = vsel %vm561, %v3032, 0.0
        %3085 = vadd.xlane.f32.xlu0 %v3084
        %v3086 = vpop.xlane.xlu0 %3085
        %v3087 = vsel %vm561, %v3034, 0.0
        %3088 = vadd.xlane.f32.xlu0 %v3087
        %v3089 = vpop.xlane.xlu0 %3088
        %v3090 = vsel %vm561, %v3036, 0.0
        %3091 = vadd.xlane.f32.xlu0 %v3090
        %v3092 = vpop.xlane.xlu0 %3091
        %v3093 = vsel %vm561, %v3038, 0.0
        %3094 = vadd.xlane.f32.xlu0 %v3093
        %v3095 = vpop.xlane.xlu0 %3094
        %v3096 = vsel %vm561, %v3040, 0.0
        %3097 = vadd.xlane.f32.xlu0 %v3096
        %v3098 = vpop.xlane.xlu0 %3097
        %v3099 = vsel %vm561, %v3042, 0.0
        %3100 = vadd.xlane.f32.xlu0 %v3099
        %v3101 = vpop.xlane.xlu0 %3100
        %v3102 = vsel %vm561, %v3044, 0.0
        %3103 = vadd.xlane.f32.xlu0 %v3102
        %v3104 = vpop.xlane.xlu0 %3103
        %v3105 = vsel %vm561, %v3046, 0.0
        %3106 = vadd.xlane.f32.xlu0 %v3105
        %v3107 = vpop.xlane.xlu0 %3106
        %v3108 = vsel %vm561, %v3048, 0.0
        %3109 = vadd.xlane.f32.xlu0 %v3108
        %v3110 = vpop.xlane.xlu0 %3109
        %v3111 = vsel %vm561, %v3050, 0.0
        %3112 = vadd.xlane.f32.xlu0 %v3111
        %v3113 = vpop.xlane.xlu0 %3112
        %v3114 = vsel %vm561, %v3052, 0.0
        %3115 = vadd.xlane.f32.xlu0 %v3114
        %v3116 = vpop.xlane.xlu0 %3115
        %v3117 = vmul.f32 %v3071, 0.032258064
        %v3118 = vmul.f32 %v3074, 0.032258064
        %v3119 = vmul.f32 %v3077, 0.032258064
        %v3120 = vmul.f32 %v3080, 0.032258064
        %v3121 = vmul.f32 %v3083, 0.032258064
        %v3122 = vmul.f32 %v3086, 0.032258064
        %v3123 = vmul.f32 %v3089, 0.032258064
        %v3124 = vmul.f32 %v3092, 0.032258064
        %v3125 = vmul.f32 %v3095, 0.032258064
        %v3126 = vmul.f32 %v3098, 0.032258064
        %v3127 = vmul.f32 %v3101, 0.032258064
        %v3128 = vmul.f32 %v3104, 0.032258064
        %v3129 = vmul.f32 %v3107, 0.032258064
        %v3130 = vmul.f32 %v3110, 0.032258064
        %v3131 = vmul.f32 %v3113, 0.032258064
        %v3132 = vmul.f32 %v3116, 0.032258064
        %v3133 = vadd.f32 %v3117, 1e-30
        %v3134 = vadd.f32 %v3118, 1e-30
        %v3135 = vadd.f32 %v3119, 1e-30
        %v3136 = vadd.f32 %v3120, 1e-30
        %v3137 = vadd.f32 %v3121, 1e-30
        %v3138 = vadd.f32 %v3122, 1e-30
        %v3139 = vadd.f32 %v3123, 1e-30
        %v3140 = vadd.f32 %v3124, 1e-30
        %v3141 = vadd.f32 %v3125, 1e-30
        %v3142 = vadd.f32 %v3126, 1e-30
        %v3143 = vadd.f32 %v3127, 1e-30
        %v3144 = vadd.f32 %v3128, 1e-30
        %v3145 = vadd.f32 %v3129, 1e-30
        %v3146 = vadd.f32 %v3130, 1e-30
        %v3147 = vadd.f32 %v3131, 1e-30
        %v3148 = vadd.f32 %v3132, 1e-30
        %v3149 = vrsqrt.pop %v3133
        %v3150 = vrsqrt.pop %v3134
        %v3151 = vrsqrt.pop %v3135
        %v3152 = vrsqrt.pop %v3136
        %v3153 = vrsqrt.pop %v3137
        %v3154 = vrsqrt.pop %v3138
        %v3155 = vrsqrt.pop %v3139
        %v3156 = vrsqrt.pop %v3140
        %v3157 = vrsqrt.pop %v3141
        %v3158 = vrsqrt.pop %v3142
        %v3159 = vrsqrt.pop %v3143
        %v3160 = vrsqrt.pop %v3144
        %v3161 = vrsqrt.pop %v3145
        %v3162 = vrsqrt.pop %v3146
        %v3163 = vrsqrt.pop %v3147
        %v3164 = vrsqrt.pop %v3148
        %v3165 = vmul.f32 %v3149, 1e-05
        %v3166 = vmul.f32 %v3150, 1e-05
        %v3167 = vmul.f32 %v3151, 1e-05
        %v3168 = vmul.f32 %v3152, 1e-05
        %v3169 = vmul.f32 %v3153, 1e-05
        %v3170 = vmul.f32 %v3154, 1e-05
        %v3171 = vmul.f32 %v3155, 1e-05
        %v3172 = vmul.f32 %v3156, 1e-05
        %v3173 = vmul.f32 %v3157, 1e-05
        %v3174 = vmul.f32 %v3158, 1e-05
        %v3175 = vmul.f32 %v3159, 1e-05
        %v3176 = vmul.f32 %v3160, 1e-05
        %v3177 = vmul.f32 %v3161, 1e-05
        %v3178 = vmul.f32 %v3162, 1e-05
        %v3179 = vmul.f32 %v3163, 1e-05
        %v3180 = vmul.f32 %v3164, 1e-05
        %v3181 = vsub.f32 1.0, %v3165
        %v3182 = vsub.f32 1.0, %v3166
        %v3183 = vsub.f32 1.0, %v3167
        %v3184 = vsub.f32 1.0, %v3168
        %v3185 = vsub.f32 1.0, %v3169
        %v3186 = vsub.f32 1.0, %v3170
        %v3187 = vsub.f32 1.0, %v3171
        %v3188 = vsub.f32 1.0, %v3172
        %v3189 = vsub.f32 1.0, %v3173
        %v3190 = vsub.f32 1.0, %v3174
        %v3191 = vsub.f32 1.0, %v3175
        %v3192 = vsub.f32 1.0, %v3176
        %v3193 = vsub.f32 1.0, %v3177
        %v3194 = vsub.f32 1.0, %v3178
        %v3195 = vsub.f32 1.0, %v3179
        %v3196 = vsub.f32 1.0, %v3180
        %v3197 = vmul.f32 %v3149, %v3181
        %v3198 = vmul.f32 %v3150, %v3182
        %v3199 = vmul.f32 %v3151, %v3183
        %v3200 = vmul.f32 %v3152, %v3184
        %v3201 = vmul.f32 %v3153, %v3185
        %v3202 = vmul.f32 %v3154, %v3186
        %v3203 = vmul.f32 %v3155, %v3187
        %v3204 = vmul.f32 %v3156, %v3188
        %v3205 = vmul.f32 %v3157, %v3189
        %v3206 = vmul.f32 %v3158, %v3190
        %v3207 = vmul.f32 %v3159, %v3191
        %v3208 = vmul.f32 %v3160, %v3192
        %v3209 = vmul.f32 %v3161, %v3193
        %v3210 = vmul.f32 %v3162, %v3194
        %v3211 = vmul.f32 %v3163, %v3195
        %v3212 = vmul.f32 %v3164, %v3196
        %v3213 = vmul.f32 %v2973, %v3197
        %v3214 = vmul.f32 %v2974, %v3198
        %v3215 = vmul.f32 %v2975, %v3199
        %v3216 = vmul.f32 %v2976, %v3200
        %v3217 = vmul.f32 %v2977, %v3201
        %v3218 = vmul.f32 %v2978, %v3202
        %v3219 = vmul.f32 %v2979, %v3203
        %v3220 = vmul.f32 %v2980, %v3204
        %v3221 = vmul.f32 %v2981, %v3205
        %v3222 = vmul.f32 %v2982, %v3206
        %v3223 = vmul.f32 %v2983, %v3207
        %v3224 = vmul.f32 %v2984, %v3208
        %v3225 = vmul.f32 %v2985, %v3209
        %v3226 = vmul.f32 %v2986, %v3210
        %v3227 = vmul.f32 %v2987, %v3211
        %v3228 = vmul.f32 %v2988, %v3212
        %v3229 = vlaneseq
        %v3230 = vshrl.u32 %v3229, 7
        %v3231 = vsub.s32 0, %v3230
        %v3232 = vrot.slane %v2112, %v3231
        %3234 = vrot.lane.b32.xlu0 %v3232, 32
        %v3235 = vpop.permute.xlu0 %3234
        %v3237 = vmul.f32 %v3213, %v3235
        %v3238 = vmul.f32 %v3214, %v3235
        %v3239 = vmul.f32 %v3215, %v3235
        %v3240 = vmul.f32 %v3216, %v3235
        %v3241 = vmul.f32 %v3217, %v3235
        %v3242 = vmul.f32 %v3218, %v3235
        %v3243 = vmul.f32 %v3219, %v3235
        %v3244 = vmul.f32 %v3220, %v3235
        %v3245 = vmul.f32 %v3221, %v3235
        %v3246 = vmul.f32 %v3222, %v3235
        %v3247 = vmul.f32 %v3223, %v3235
        %v3248 = vmul.f32 %v3224, %v3235
        %v3249 = vmul.f32 %v3225, %v3235
        %v3250 = vmul.f32 %v3226, %v3235
        %v3251 = vmul.f32 %v3227, %v3235
        %v3252 = vmul.f32 %v3228, %v3235
        %v3253 = vlaneseq
        %v3254 = vshrl.u32 %v3253, 7
        %v3255 = vsub.s32 0, %v3254
        %v3256 = vrot.slane %v2113, %v3255
        %3258 = vrot.lane.b32.xlu0 %v3256, 32
        %v3259 = vpop.permute.xlu0 %3258
        %v3261 = vadd.f32 %v3237, %v3259
        %v3262 = vadd.f32 %v3238, %v3259
        %v3263 = vadd.f32 %v3239, %v3259
        %v3264 = vadd.f32 %v3240, %v3259
        %v3265 = vadd.f32 %v3241, %v3259
        %v3266 = vadd.f32 %v3242, %v3259
        %v3267 = vadd.f32 %v3243, %v3259
        %v3268 = vadd.f32 %v3244, %v3259
        %v3269 = vadd.f32 %v3245, %v3259
        %v3270 = vadd.f32 %v3246, %v3259
        %v3271 = vadd.f32 %v3247, %v3259
        %v3272 = vadd.f32 %v3248, %v3259
        %v3273 = vadd.f32 %v3249, %v3259
        %v3274 = vadd.f32 %v3250, %v3259
        %v3275 = vadd.f32 %v3251, %v3259
        %v3276 = vadd.f32 %v3252, %v3259
        %v3277 = vtanh.pop %v3261
        %v3278 = vtanh.pop %v3262
        %v3279 = vtanh.pop %v3263
        %v3280 = vtanh.pop %v3264
        %v3281 = vtanh.pop %v3265
        %v3282 = vtanh.pop %v3266
        %v3283 = vtanh.pop %v3267
        %v3284 = vtanh.pop %v3268
        %v3285 = vtanh.pop %v3269
        %v3286 = vtanh.pop %v3270
        %v3287 = vtanh.pop %v3271
        %v3288 = vtanh.pop %v3272
        %v3289 = vtanh.pop %v3273
        %v3290 = vtanh.pop %v3274
        %v3291 = vtanh.pop %v3275
        %v3292 = vtanh.pop %v3276
        %3309 = vrot.lane.b32.xlu0 %v3277, 32
        %v3310 = vpop.permute.xlu0 %3309
        %3311 = vrot.lane.b32.xlu0 %v3278, 32
        %v3312 = vpop.permute.xlu0 %3311
        %3313 = vrot.lane.b32.xlu0 %v3279, 32
        %v3314 = vpop.permute.xlu0 %3313
        %3315 = vrot.lane.b32.xlu0 %v3280, 32
        %v3316 = vpop.permute.xlu0 %3315
        %3317 = vrot.lane.b32.xlu0 %v3281, 32
        %v3318 = vpop.permute.xlu0 %3317
        %3319 = vrot.lane.b32.xlu0 %v3282, 32
        %v3320 = vpop.permute.xlu0 %3319
        %3321 = vrot.lane.b32.xlu0 %v3283, 32
        %v3322 = vpop.permute.xlu0 %3321
        %3323 = vrot.lane.b32.xlu0 %v3284, 32
        %v3324 = vpop.permute.xlu0 %3323
        %3325 = vrot.lane.b32.xlu0 %v3285, 32
        %v3326 = vpop.permute.xlu0 %3325
        %3327 = vrot.lane.b32.xlu0 %v3286, 32
        %v3328 = vpop.permute.xlu0 %3327
        %3329 = vrot.lane.b32.xlu0 %v3287, 32
        %v3330 = vpop.permute.xlu0 %3329
        %3331 = vrot.lane.b32.xlu0 %v3288, 32
        %v3332 = vpop.permute.xlu0 %3331
        %3333 = vrot.lane.b32.xlu0 %v3289, 32
        %v3334 = vpop.permute.xlu0 %3333
        %3335 = vrot.lane.b32.xlu0 %v3290, 32
        %v3336 = vpop.permute.xlu0 %3335
        %3337 = vrot.lane.b32.xlu0 %v3291, 32
        %v3338 = vpop.permute.xlu0 %3337
        %3339 = vrot.lane.b32.xlu0 %v3292, 32
        %v3340 = vpop.permute.xlu0 %3339
        %v3357 = vmul.f32 %v2645, %v3310
        %v3358 = vmul.f32 %v2646, %v3312
        %v3359 = vmul.f32 %v2647, %v3314
        %v3360 = vmul.f32 %v2648, %v3316
        %v3361 = vmul.f32 %v2649, %v3318
        %v3362 = vmul.f32 %v2650, %v3320
        %v3363 = vmul.f32 %v2651, %v3322
        %v3364 = vmul.f32 %v2652, %v3324
        %v3365 = vmul.f32 %v2653, %v3326
        %v3366 = vmul.f32 %v2654, %v3328
        %v3367 = vmul.f32 %v2655, %v3330
        %v3368 = vmul.f32 %v2656, %v3332
        %v3369 = vmul.f32 %v2657, %v3334
        %v3370 = vmul.f32 %v2658, %v3336
        %v3371 = vmul.f32 %v2659, %v3338
        %v3372 = vmul.f32 %v2660, %v3340
        %v3374 = vrot.slane %v240, 6
        %3391 = vrot.lane.b32.xlu0 %v3357, 64
        %v3392 = vpop.permute.xlu0 %3391
        %3393 = vrot.lane.b32.xlu0 %v3358, 64
        %v3394 = vpop.permute.xlu0 %3393
        %3395 = vrot.lane.b32.xlu0 %v3359, 64
        %v3396 = vpop.permute.xlu0 %3395
        %3397 = vrot.lane.b32.xlu0 %v3360, 64
        %v3398 = vpop.permute.xlu0 %3397
        %3399 = vrot.lane.b32.xlu0 %v3361, 64
        %v3400 = vpop.permute.xlu0 %3399
        %3401 = vrot.lane.b32.xlu0 %v3362, 64
        %v3402 = vpop.permute.xlu0 %3401
        %3403 = vrot.lane.b32.xlu0 %v3363, 64
        %v3404 = vpop.permute.xlu0 %3403
        %3405 = vrot.lane.b32.xlu0 %v3364, 64
        %v3406 = vpop.permute.xlu0 %3405
        %3407 = vrot.lane.b32.xlu0 %v3365, 64
        %v3408 = vpop.permute.xlu0 %3407
        %3409 = vrot.lane.b32.xlu0 %v3366, 64
        %v3410 = vpop.permute.xlu0 %3409
        %3411 = vrot.lane.b32.xlu0 %v3367, 64
        %v3412 = vpop.permute.xlu0 %3411
        %3413 = vrot.lane.b32.xlu0 %v3368, 64
        %v3414 = vpop.permute.xlu0 %3413
        %3415 = vrot.lane.b32.xlu0 %v3369, 64
        %v3416 = vpop.permute.xlu0 %3415
        %3417 = vrot.lane.b32.xlu0 %v3370, 64
        %v3418 = vpop.permute.xlu0 %3417
        %3419 = vrot.lane.b32.xlu0 %v3371, 64
        %v3420 = vpop.permute.xlu0 %3419
        %3421 = vrot.lane.b32.xlu0 %v3372, 64
        %v3422 = vpop.permute.xlu0 %3421
        %v3423 = vsel %vm561, %v3374, 0
        %v3425 = vsel %vm561, %v3392, 0
        %v3427 = vsel %vm561, %v3394, 0
        %v3429 = vsel %vm561, %v3396, 0
        %v3431 = vsel %vm561, %v3398, 0
        %v3433 = vsel %vm561, %v3400, 0
        %v3435 = vsel %vm561, %v3402, 0
        %v3437 = vsel %vm561, %v3404, 0
        %v3439 = vsel %vm561, %v3406, 0
        %v3441 = vsel %vm561, %v3408, 0
        %v3443 = vsel %vm561, %v3410, 0
        %v3445 = vsel %vm561, %v3412, 0
        %v3447 = vsel %vm561, %v3414, 0
        %v3449 = vsel %vm561, %v3416, 0
        %v3451 = vsel %vm561, %v3418, 0
        %v3453 = vsel %vm561, %v3420, 0
        %v3455 = vsel %vm561, %v3422, 0
        %3457 = vmatprep.subr.mxu0 0.0
        %3458 = vmatpush1.xpose.msra.mxu0 %v3455
        %3459 = vmatprep.subr.mxu0 0.0
        %3460 = vmatpush1.xpose.msra.mxu0 %v3453
        %3461 = vmatprep.subr.mxu0 0.0
        %3462 = vmatpush1.xpose.msra.mxu0 %v3451
        %3463 = vmatprep.subr.mxu0 0.0
        %3464 = vmatpush1.xpose.msra.mxu0 %v3449
        %3465 = vmatprep.subr.mxu0 0.0
        %3466 = vmatpush1.xpose.msra.mxu0 %v3447
        %3467 = vmatprep.subr.mxu0 0.0
        %3468 = vmatpush1.xpose.msra.mxu0 %v3445
        %3469 = vmatprep.subr.mxu0 0.0
        %3470 = vmatpush1.xpose.msra.mxu0 %v3443
        %3471 = vmatprep.subr.mxu0 0.0
        %3472 = vmatpush1.xpose.msra.mxu0 %v3441
        %3473 = vmatprep.subr.mxu0 0.0
        %3474 = vmatpush1.xpose.msra.mxu0 %v3439
        %3475 = vmatprep.subr.mxu0 0.0
        %3476 = vmatpush1.xpose.msra.mxu0 %v3437
        %3477 = vmatprep.subr.mxu0 0.0
        %3478 = vmatpush1.xpose.msra.mxu0 %v3435
        %3479 = vmatprep.subr.mxu0 0.0
        %3480 = vmatpush1.xpose.msra.mxu0 %v3433
        %3481 = vmatprep.subr.mxu0 0.0
        %3482 = vmatpush1.xpose.msra.mxu0 %v3431
        %3483 = vmatprep.subr.mxu0 0.0
        %3484 = vmatpush1.xpose.msra.mxu0 %v3429
        %3485 = vmatprep.subr.mxu0 0.0
        %3486 = vmatpush1.xpose.msra.mxu0 %v3427
        %3487 = vmatprep.subr.mxu0 0.0
        %3488 = vmatpush1.xpose.msra.mxu0 %v3425
        %3489 = vmatprep.subr.mxu0 0.0
        %3490 = vmatpush2.xpose.msra.mxu0 0.0
        %3491 = vmatprep.subr.mxu0 0.0
        %3492 = vmatpush2.xpose.msra.mxu0 0.0
        %3493 = vmatprep.subr.mxu0 0.0
        %3494 = vmatpush2.xpose.msra.mxu0 0.0
        %3495 = vmatprep.subr.mxu0 0.0
        %3496 = vmatpush2.xpose.msra.mxu0 0.0
        %3497 = vmatprep.subr.mxu0 0.0
        %3498 = vmatpush2.xpose.msra.mxu0 0.0
        %3499 = vmatprep.subr.mxu0 0.0
        %3500 = vmatpush2.xpose.msra.mxu0 0.0
        %3501 = vmatprep.subr.mxu0 0.0
        %3502 = vmatpush2.xpose.msra.mxu0 0.0
        %3503 = vmatprep.subr.mxu0 0.0
        %3504 = vmatpush2.xpose.msra.mxu0 0.0
        %3505 = vmatprep.subr.mxu0 0.0
        %3506 = vmatpush2.xpose.msra.mxu0 0.0
        %3507 = vmatprep.subr.mxu0 0.0
        %3508 = vmatpush2.xpose.msra.mxu0 0.0
        %3509 = vmatprep.subr.mxu0 0.0
        %3510 = vmatpush2.xpose.msra.mxu0 0.0
        %3511 = vmatprep.subr.mxu0 0.0
        %3512 = vmatpush2.xpose.msra.mxu0 0.0
        %3513 = vmatprep.subr.mxu0 0.0
        %3514 = vmatpush2.xpose.msra.mxu0 0.0
        %3515 = vmatprep.subr.mxu0 0.0
        %3516 = vmatpush2.xpose.msra.mxu0 0.0
        %3517 = vmatprep.subr.mxu0 0.0
        %3518 = vmatpush2.xpose.msra.mxu0 0.0
        %3519 = vmatprep.subr.mxu0 0.0
        %3520 = vmatpush2.xpose.msra.mxu0 0.0
        %3521 = vmatprep.mubr.f32.mxu0 0.0
        %3522 = vmatmul.mubr.f32.gmra.mxu0 %v3423
        %v3523 = vpop.f32.mrf.mxu0
        %v3524 = vadd.f32 0.0, %v3523
        %v3525 = vpop.f32.mrf.mxu0
        %3526 = vdwg.mxu0
        %3527 = vst [vmem:[%s217] sm:$0x1] %v3524
        %s3528 = sand.u32 %s137, 1
        %s3529 = scalar_lea.sflag [#allocation3], %s3528
        %s3530 = sand.u32 %s137, 1
        %s3531 = scalar_lea.vmem [#allocation2], %s3530
        // Predicated region
        $region41: #{tpu_custom_call.1} parent=39 // pred_check
          %p3532 = pneg %p147
        $region42: #{tpu_custom_call.1} parent=39 // pred_check_branch
          %3534 = sbr.rel (%p3532) target = $region44
        $region43: #{tpu_custom_call.1} parent=39 // pred_region
          %s3536 = ssub.s32 16, 16
          %3537 = vsyncadd %s3529, %s3536
          %s3538 = smul.addr %s19, 16
          %s3539 = scalar_lea.hbm %s5, %s3538
          %s3541 = sshll.u32 %s3531, 4
          %s3542 = int_to_ptr.vmem [resolvable:$true] %s3541
          %3544 = dma.vmem_to_hbm [thread:$0]  %s3542, 16, %s3539, %s3529
        $region44: #{tpu_custom_call.1} parent=39 // pred_fallthru
          _
      $region40: #{tpu_custom_call.1} parent=5 // pred_fallthru
        _
      %p3545 = scmp.le.s32.totalorder 2, %s14
      // Predicated region
      $region45: #{tpu_custom_call.1} parent=5 // pred_check
        %p3546 = pneg %p3545
      $region46: #{tpu_custom_call.1} parent=5 // pred_check_branch
        %3548 = sbr.rel (%p3546) target = $region48
      $region47: #{tpu_custom_call.1} parent=5 // pred_region
        %s3549 = ssub.s32 %s14, 2
        // Predicated region
        $region49: #{tpu_custom_call.1} parent=47 // pred_check
          %p3550 = pneg %p153
        $region50: #{tpu_custom_call.1} parent=47 // pred_check_branch
          %3552 = sbr.rel (%p3550) target = $region52
        $region51: #{tpu_custom_call.1} parent=47 // pred_region
          %s3553 = sand.u32 %s138, 1
          %s3554 = scalar_lea.sflag [#allocation3], %s3553
          %s3555 = sand.u32 %s138, 1
          %s3556 = scalar_lea.vmem [#allocation2], %s3555
          %3557 = dma.done %s3554, 16
        $region52: #{tpu_custom_call.1} parent=47 // pred_fallthru
          _
      $region48: #{tpu_custom_call.1} parent=5 // pred_fallthru
        _
    $region6: #{tpu_custom_call.1} parent=1 // loop_footer
      %s18 = sadd.s32 1, %s14
    $region7: #{tpu_custom_call.1} parent=1 // loop_footer_branch
      %13 = sbr.rel target = $region3
    $region8: #{tpu_custom_call.1} parent=1 // loop_exit
      _
    %3558 = vsyncpa [#allocation3], 1
    %s3559 = scalar_lea.sflag [#allocation3], 1
    %3560 = vsyncpa %s3559, 1

</llo_original>
